<compile_context>
chip_gen: v7x
topology: tpu7x:2x2x1
jax: 0.10.0
libtpu: 0.0.40
codegen_flags: <defaults>
</compile_context>

<pallas_src>
import functools
import numpy as np
import jax
import jax.numpy as jnp
from jax.experimental import pallas as pl
from jax.experimental.pallas import tpu as pltpu


# --------------------------- parameter construction (glue) ---------------------------

def _round_up(x, m):
    return ((x + m - 1) // m) * m


def _hann_window(win_length):
    # torch.hann_window(win_length, periodic=True)
    n = np.arange(win_length, dtype=np.float64)
    return 0.5 - 0.5 * np.cos(2.0 * np.pi * n / win_length)


def _dft_bases(n_fft, window):
    # one-sided real DFT bases with the analysis window folded in.
    n_freq = n_fft // 2 + 1
    n = np.arange(n_fft, dtype=np.float64)[:, None]
    k = np.arange(n_freq, dtype=np.float64)[None, :]
    ang = 2.0 * np.pi * n * k / n_fft
    cos_mat = (window[:, None] * np.cos(ang)).astype(np.float32)  # (n_fft, n_freq)
    sin_mat = (window[:, None] * np.sin(ang)).astype(np.float32)  # (n_fft, n_freq)
    return cos_mat, sin_mat


def _melscale_fbanks(n_freqs, f_min, f_max, n_mels, sample_rate):
    # torchaudio.functional.melscale_fbanks(mel_scale='htk', norm='slaney')
    all_freqs = np.linspace(0.0, sample_rate / 2.0, n_freqs)

    def hz_to_mel(f):
        return 2595.0 * np.log10(1.0 + f / 700.0)

    def mel_to_hz(m):
        return 700.0 * (10.0 ** (m / 2595.0) - 1.0)

    m_pts = np.linspace(hz_to_mel(f_min), hz_to_mel(f_max), n_mels + 2)
    f_pts = mel_to_hz(m_pts)
    f_diff = f_pts[1:] - f_pts[:-1]                       # (n_mels + 1,)
    slopes = f_pts[None, :] - all_freqs[:, None]          # (n_freqs, n_mels + 2)
    down = -slopes[:, :-2] / f_diff[:-1]
    up = slopes[:, 2:] / f_diff[1:]
    fb = np.maximum(0.0, np.minimum(down, up))            # (n_freqs, n_mels)
    enorm = 2.0 / (f_pts[2:n_mels + 2] - f_pts[:n_mels])  # slaney area norm
    fb = fb * enorm[None, :]
    return fb.astype(np.float32)


# --------------------------------- Pallas kernel -------------------------------------

def _mel_kernel(chunks_ref, tail_ref, basis_ref, fb_ref, inv_norms_ref, out_ref,
                *, ratio, n_freq_used):
    tile = chunks_ref.shape[0]
    a = chunks_ref[...]                                               # (tile, hop) bf16
    # chunks covering frames [0, tile) of this grid step plus the few extra chunks the last
    # frames of the tile reach into (first chunks of the next tile).
    cat = jnp.concatenate([a, tail_ref[...]], axis=0)                 # (tile + tail, hop)
    # frame f = [chunk f | chunk f+1 | ... | chunk f+ratio-1]  -> rebuild frames in VMEM
    pieces = [a] + [cat[j:j + tile, :] for j in range(1, ratio)]
    frames = jnp.concatenate(pieces, axis=1)                          # (tile, n_fft) bf16

    # fused windowed real DFT: one MXU pass over the concatenated [cos | sin] basis
    z = jnp.dot(frames, basis_ref[...], preferred_element_type=jnp.float32)   # (tile, 2F)
    re = z[:, :n_freq_used]
    im = z[:, n_freq_used:]
    power = (re * re + im * im).astype(jnp.bfloat16)                  # power spectrogram
    mel = jnp.dot(power, fb_ref[...], preferred_element_type=jnp.float32)
    mel = jnp.log(jnp.maximum(mel, 1e-5))                             # log(clamp(., 1e-5))
    out_ref[...] = mel * inv_norms_ref[...]                           # per-mel normalization


# ----------------------------------- wrapper ------------------------------------------

class MelSpectrogramPallas:

    def __init__(self, filter_length=1024, hop_length=256, win_length=1024,
                 n_mel_channels=80, mel_fmin=0.0, mel_fmax=8000.0,
                 sampling_rate=22050, normalize=False, mel_norms=None):
        self.n_fft = filter_length
        self.hop = hop_length
        self.n_mels = n_mel_channels
        n_freq = filter_length // 2 + 1

        assert filter_length % hop_length == 0, (
            "chunk-decomposed framing requires hop_length to divide filter_length")
        # TODO(synk): support hop_length not dividing filter_length (strided-slice framing fallback).
        self.ratio = filter_length // hop_length
        self.tail_rows = max(16, _round_up(max(self.ratio - 1, 1), 16))

        # analysis window, centered-padded to n_fft (torch.stft behavior)
        window = np.zeros(filter_length, dtype=np.float64)
        w = _hann_window(win_length)
        start = (filter_length - win_length) // 2
        window[start:start + win_length] = w
        if normalize:   # torchaudio Spectrogram(normalized=True): divide STFT by sqrt(sum(w^2))
            window = window / np.sqrt(np.sum(window ** 2))

        cos_mat, sin_mat = _dft_bases(filter_length, window)
        fb = _melscale_fbanks(n_freq, mel_fmin, mel_fmax, n_mel_channels, sampling_rate)

        if mel_norms is None:
            # deterministic synthetic stand-in for mel_stats.pth
            mel_norms = np.linspace(0.5, 2.0, n_mel_channels, dtype=np.float32)
        mel_norms = np.asarray(mel_norms, dtype=np.float32)

        # truncate the DFT to the highest frequency bin the mel bank actually uses
        # (fmax=8 kHz @ 22.05 kHz -> 384 of 513 bins); zero fb rows above it contribute nothing.
        nz = np.nonzero(fb.sum(axis=1) > 0)[0]
        n_used = int(nz[-1]) + 1 if nz.size else n_freq
        self.n_freq_used = _round_up(n_used, 128)
        self.n_mel_pad = _round_up(n_mel_channels, 128)

        F = self.n_freq_used
        keep = min(F, n_freq)
        basis = np.zeros((filter_length, 2 * F), np.float32)     # [cos | sin] fused
        basis[:, :keep] = cos_mat[:, :keep]
        basis[:, F:F + keep] = sin_mat[:, :keep]
        fb_pad = np.zeros((F, self.n_mel_pad), np.float32)
        fb_pad[:keep, :n_mel_channels] = fb[:keep]
        inv_norms = np.ones((1, self.n_mel_pad), np.float32)
        inv_norms[0, :n_mel_channels] = 1.0 / mel_norms

        self.basis = jnp.asarray(basis, dtype=jnp.bfloat16)      # (n_fft, 2F), MXU-native
        self.fb = jnp.asarray(fb_pad, dtype=jnp.bfloat16)        # (F, n_mel_pad)
        self.inv_norms = jnp.asarray(inv_norms)                  # (1, n_mel_pad)

        # row-tile cap: 2048 fits easily in v5e/v6e's 128 MiB VMEM; stay at 1024 on
        # v7x (64 MiB physical) or when the hardware query is unavailable.
        try:
            vmem_bytes = int(getattr(pltpu.get_tpu_info(), "vmem_capacity_bytes", 0))
        except Exception:
            vmem_bytes = 0
        self.max_tile_rows = 2048 if vmem_bytes >= 96 * 1024 * 1024 else 1024

        self._forward = jax.jit(self._forward_impl)

    def _forward_impl(self, wav):
        if wav.ndim == 3:
            wav = jnp.squeeze(wav, axis=1)
        assert wav.ndim == 2
        B, T = wav.shape
        hop = self.hop

        # center=True, reflect padding (torch.stft default in MelSpectrogram)
        pad = self.n_fft // 2
        padded = jnp.pad(wav.astype(jnp.float32), ((0, 0), (pad, pad)), mode="reflect")
        n_frames = 1 + T // hop

        # adaptive frame tiling: biggest tile under the cap with low pad-to-tile waste,
        # multiple of 16 (bf16 sublanes); keep total grid steps even for v7x megacore.
        cap = self.max_tile_rows
        num_tiles = max(1, -(-n_frames // cap))
        if (B * num_tiles) % 2 == 1 and n_frames > 16:
            num_tiles += 1
        tile = _round_up(-(-n_frames // num_tiles), 16)
        frames_pad = tile * num_tiles
        tail_rows = self.tail_rows

        # hop-sized non-overlapping chunks (1x sample traffic, no gather, no 4x frame matrix):
        # chunk c of batch b = padded_b[c*hop : (c+1)*hop]; frame f = chunks f .. f+ratio-1.
        total_chunks = frames_pad + tail_rows
        needed = total_chunks * hop
        extra = needed - padded.shape[1]
        if extra > 0:
            padded = jnp.pad(padded, ((0, 0), (0, extra)))
        elif extra < 0:
            padded = padded[:, :needed]
        chunks = padded.reshape(B, total_chunks, hop).astype(jnp.bfloat16)

        F = self.n_freq_used
        kernel = functools.partial(_mel_kernel, ratio=self.ratio, n_freq_used=F)

        out = pl.pallas_call(
            kernel,
            out_shape=jax.ShapeDtypeStruct((B, frames_pad, self.n_mel_pad), jnp.float32),
            grid=(B, num_tiles),
            in_specs=[
                # chunks for the frames of this tile
                pl.BlockSpec((None, tile, hop), lambda b, i: (b, i, 0)),
                # first few chunks of the next tile (needed by the last ratio-1 frames)
                pl.BlockSpec((None, tail_rows, hop),
                             lambda b, i: (b, (i + 1) * (tile // tail_rows), 0)),
                # grid-invariant weights: single-buffered, VMEM-resident
                pl.BlockSpec((self.n_fft, 2 * F), lambda b, i: (0, 0),
                             pipeline_mode=pl.Buffered(1)),
                pl.BlockSpec((F, self.n_mel_pad), lambda b, i: (0, 0),
                             pipeline_mode=pl.Buffered(1)),
                pl.BlockSpec((1, self.n_mel_pad), lambda b, i: (0, 0),
                             pipeline_mode=pl.Buffered(1)),
            ],
            out_specs=pl.BlockSpec((None, tile, self.n_mel_pad), lambda b, i: (b, i, 0)),
            compiler_params=pltpu.CompilerParams(
                dimension_semantics=("parallel", "parallel"),    # megacore sharding
                vmem_limit_bytes=48 * 1024 * 1024),              # <= v7x's 64 MiB physical VMEM
        )(chunks, chunks, self.basis, self.fb, self.inv_norms)

        mel = out[:, :n_frames, :self.n_mels]
        return jnp.transpose(mel, (0, 2, 1))                     # (B, n_mels, n_frames)

    def __call__(self, wav):
        return self._forward(wav)


# ------------------------------------ demo --------------------------------------------

if __name__ == "__main__":
    key = jax.random.PRNGKey(0)
    B, T = 2, 4096                                               # small waveform, module defaults
    x = jax.random.normal(key, (B, 1, T), dtype=jnp.float32)     # (B, 1, T) exercises the squeeze

    model = MelSpectrogramPallas()
    mel = jax.block_until_ready(model(x))

    expected_frames = 1 + T // 256
    assert mel.shape == (B, 80, expected_frames), mel.shape
    assert bool(jnp.all(jnp.isfinite(mel)))

    # pure-JAX f32 reference (same basis / fb) to sanity-check the chunk-decomposed framing
    wav = jnp.squeeze(x, axis=1).astype(jnp.float32)
    pad = model.n_fft // 2
    padded = jnp.pad(wav, ((0, 0), (pad, pad)), mode="reflect")
    idx = (np.arange(expected_frames)[:, None] * model.hop
           + np.arange(model.n_fft)[None, :])
    frames = padded[:, idx]                                      # tiny demo: gather is fine here
    basis32 = np.asarray(model.basis, dtype=np.float32)
    fb32 = np.asarray(model.fb, dtype=np.float32)
    inv32 = np.asarray(model.inv_norms, dtype=np.float32)[0]
    z = jnp.einsum("bfn,nk->bfk", frames, basis32)
    Fu = model.n_freq_used
    power = z[..., :Fu] ** 2 + z[..., Fu:] ** 2
    ref = jnp.log(jnp.maximum(jnp.einsum("bfk,km->bfm", power, fb32), 1e-5)) * inv32
    ref = jnp.transpose(ref[..., :model.n_mels], (0, 2, 1))
    max_err = float(jnp.max(jnp.abs(mel - ref)))
    assert max_err < 0.25, f"max abs log-mel error vs f32 reference: {max_err}"

    print("KERNEL_OK")
</pallas_src>

<mosaic_0001>
module attributes {stable_mosaic.version = 11 : i64} {
  func.func @_mel_kernel(%arg0: i32, %arg1: i32, %arg2: memref<1x32x256xbf16, #tpu.memory_space<vmem>>, %arg3: memref<1x16x256xbf16, #tpu.memory_space<vmem>>, %arg4: memref<1024x768xbf16, #tpu.memory_space<vmem>>, %arg5: memref<384x128xbf16, #tpu.memory_space<vmem>>, %arg6: memref<1x128xf32, #tpu.memory_space<vmem>>, %arg7: memref<1x32x128xf32, #tpu.memory_space<vmem>>) attributes {dimension_semantics = [#tpu.dimension_semantics<parallel>, #tpu.dimension_semantics<parallel>], iteration_bounds = array<i64: 2, 1>, scalar_prefetch = 0 : i64, scratch_operands = 0 : i64, tpu.core_type = #tpu.core_type<tc>, window_params = [{transform_indices = @transform_0, window_bounds = array<i64: 1, 32, 256>}, {transform_indices = @transform_1, window_bounds = array<i64: 1, 16, 256>}, {pipeline_mode = #tpu.pipeline_mode<synchronous>, transform_indices = @transform_2, window_bounds = array<i64: 1024, 768>}, {pipeline_mode = #tpu.pipeline_mode<synchronous>, transform_indices = @transform_3, window_bounds = array<i64: 384, 128>}, {pipeline_mode = #tpu.pipeline_mode<synchronous>, transform_indices = @transform_4, window_bounds = array<i64: 1, 128>}, {transform_indices = @transform_5, window_bounds = array<i64: 1, 32, 128>}]} {
    %c0 = arith.constant 0 : index
    %c0_0 = arith.constant 0 : index
    %c0_1 = arith.constant 0 : index
    %0 = vector.load %arg2[%c0, %c0_0, %c0_1] : memref<1x32x256xbf16, #tpu.memory_space<vmem>>, vector<1x32x256xbf16>
    %1 = vector.shape_cast %0 : vector<1x32x256xbf16> to vector<32x256xbf16>
    %c0_2 = arith.constant 0 : index
    %c0_3 = arith.constant 0 : index
    %c0_4 = arith.constant 0 : index
    %2 = vector.load %arg3[%c0_2, %c0_3, %c0_4] : memref<1x16x256xbf16, #tpu.memory_space<vmem>>, vector<1x16x256xbf16>
    %3 = vector.shape_cast %2 : vector<1x16x256xbf16> to vector<16x256xbf16>
    %4 = tpu.concatenate %1, %3 in 0 : vector<32x256xbf16>, vector<16x256xbf16> -> vector<48x256xbf16>
    %5 = vector.extract_strided_slice %4 {offsets = [1, 0], sizes = [32, 256], strides = [1, 1]} : vector<48x256xbf16> to vector<32x256xbf16>
    %6 = vector.extract_strided_slice %4 {offsets = [2, 0], sizes = [32, 256], strides = [1, 1]} : vector<48x256xbf16> to vector<32x256xbf16>
    %7 = vector.extract_strided_slice %4 {offsets = [3, 0], sizes = [32, 256], strides = [1, 1]} : vector<48x256xbf16> to vector<32x256xbf16>
    %8 = tpu.concatenate %1, %5, %6, %7 in 1 : vector<32x256xbf16>, vector<32x256xbf16>, vector<32x256xbf16>, vector<32x256xbf16> -> vector<32x1024xbf16>
    %c0_5 = arith.constant 0 : index
    %c0_6 = arith.constant 0 : index
    %9 = vector.load %arg4[%c0_5, %c0_6] : memref<1024x768xbf16, #tpu.memory_space<vmem>>, vector<1024x768xbf16>
    %cst = arith.constant dense<0.000000e+00> : vector<32x768xf32>
    %10 = tpu.matmul %8, %9, %cst {dimension_numbers = #tpu.dot_dimension_numbers<[1], [0], [0], [1], [0, 0, 1, 1], [], []>} : vector<32x1024xbf16>, vector<1024x768xbf16>, vector<32x768xf32> -> vector<32x768xf32>
    %11 = vector.extract_strided_slice %10 {offsets = [0, 0], sizes = [32, 384], strides = [1, 1]} : vector<32x768xf32> to vector<32x384xf32>
    %12 = vector.extract_strided_slice %10 {offsets = [0, 384], sizes = [32, 384], strides = [1, 1]} : vector<32x768xf32> to vector<32x384xf32>
    %13 = arith.mulf %11, %11 : vector<32x384xf32>
    %14 = arith.mulf %12, %12 : vector<32x384xf32>
    %15 = arith.addf %13, %14 : vector<32x384xf32>
    %16 = arith.truncf %15 : vector<32x384xf32> to vector<32x384xbf16>
    %c0_7 = arith.constant 0 : index
    %c0_8 = arith.constant 0 : index
    %17 = vector.load %arg5[%c0_7, %c0_8] : memref<384x128xbf16, #tpu.memory_space<vmem>>, vector<384x128xbf16>
    %cst_9 = arith.constant dense<0.000000e+00> : vector<32x128xf32>
    %18 = tpu.matmul %16, %17, %cst_9 {dimension_numbers = #tpu.dot_dimension_numbers<[1], [0], [0], [1], [0, 0, 1, 1], [], []>} : vector<32x384xbf16>, vector<384x128xbf16>, vector<32x128xf32> -> vector<32x128xf32>
    %cst_10 = arith.constant 9.99999974E-6 : f32
    %19 = vector.broadcast %cst_10 : f32 to vector<32x128xf32>
    %20 = arith.maximumf %18, %19 : vector<32x128xf32>
    %21 = math.log %20 : vector<32x128xf32>
    %c0_11 = arith.constant 0 : index
    %c0_12 = arith.constant 0 : index
    %22 = vector.load %arg6[%c0_11, %c0_12] : memref<1x128xf32, #tpu.memory_space<vmem>>, vector<1x128xf32>
    %23 = vector.broadcast %22 : vector<1x128xf32> to vector<32x128xf32>
    %24 = arith.mulf %21, %23 : vector<32x128xf32>
    %c0_13 = arith.constant 0 : index
    %c0_14 = arith.constant 0 : index
    %c0_15 = arith.constant 0 : index
    %25 = vector.load %arg7[%c0_13, %c0_14, %c0_15] : memref<1x32x128xf32, #tpu.memory_space<vmem>>, vector<1x32x128xf32>
    %26 = vector.shape_cast %25 : vector<1x32x128xf32> to vector<32x128xf32>
    %27 = vector.shape_cast %24 : vector<32x128xf32> to vector<1x32x128xf32>
    tpu.vector_store %arg7[%c0_13, %c0_14, %c0_15], %27 {strides = array<i32>} : memref<1x32x128xf32, #tpu.memory_space<vmem>>, vector<1x32x128xf32>,
    return
  }
  func.func @transform_0(%arg0: i32, %arg1: i32) -> (i32, i32, i32) {
    %c0_i32 = arith.constant 0 : i32
    %c0_i32_0 = arith.constant 0 : i32
    return %arg0, %arg1, %c0_i32 : i32, i32, i32
  }
  func.func @transform_1(%arg0: i32, %arg1: i32) -> (i32, i32, i32) {
    %c1_i32 = arith.constant 1 : i32
    %0 = arith.addi %arg1, %c1_i32 : i32
    %c2_i32 = arith.constant 2 : i32
    %1 = arith.muli %0, %c2_i32 : i32
    %c0_i32 = arith.constant 0 : i32
    %c0_i32_0 = arith.constant 0 : i32
    return %arg0, %1, %c0_i32 : i32, i32, i32
  }
  func.func @transform_2(%arg0: i32, %arg1: i32) -> (i32, i32) {
    %c0_i32 = arith.constant 0 : i32
    %c0_i32_0 = arith.constant 0 : i32
    %c0_i32_1 = arith.constant 0 : i32
    return %c0_i32, %c0_i32_0 : i32, i32
  }
  func.func @transform_3(%arg0: i32, %arg1: i32) -> (i32, i32) {
    %c0_i32 = arith.constant 0 : i32
    %c0_i32_0 = arith.constant 0 : i32
    %c0_i32_1 = arith.constant 0 : i32
    return %c0_i32, %c0_i32_0 : i32, i32
  }
  func.func @transform_4(%arg0: i32, %arg1: i32) -> (i32, i32) {
    %c0_i32 = arith.constant 0 : i32
    %c0_i32_0 = arith.constant 0 : i32
    %c0_i32_1 = arith.constant 0 : i32
    return %c0_i32, %c0_i32_0 : i32, i32
  }
  func.func @transform_5(%arg0: i32, %arg1: i32) -> (i32, i32, i32) {
    %c0_i32 = arith.constant 0 : i32
    %c0_i32_0 = arith.constant 0 : i32
    return %arg0, %arg1, %c0_i32 : i32, i32, i32
  }
}

</mosaic_0001>

<llo_original>
// kernel: _forward_impl.1
$region0: #{_forward_impl.1}
  #allocation0 [shape = 'u32[]', space=smem, size = 0x4, offset = 0x4, fixed_abs, tag = 'smem constant byte address 0x4 - core index']
  #allocation1 [shape = 'u32[144,128]{1,0:T(1,128)}', space=vmem, size = 0x12000, scoped, tag = 'internal scratch']
  %s0 = inlined_call_operand.vmem [shape: bf16[2,48,256], index: 0, kind: input, shape index: {}, may-alias: {0,1}]
  %s1 = inlined_call_operand.vmem [shape: bf16[2,48,256], index: 1, kind: input, shape index: {}, may-alias: {0,1}]
  %s2 = inlined_call_operand.vmem [shape: bf16[1024,768], index: 2, kind: input, shape index: {}]
  %s3 = inlined_call_operand.vmem [shape: bf16[384,128], index: 3, kind: input, shape index: {}]
  %s4 = inlined_call_operand.vmem [shape: f32[1,128], index: 4, kind: input, shape index: {}]
  %s5 = inlined_call_operand.vmem [shape: f32[2,32,128], index: 5, kind: output, shape index: {}]
  %s6 = sld [smem:[#allocation0]]
  $region53: #{_forward_impl.1} parent=0
    _
  %s8 = ssub.s32 1, %s6
  %s9 = scalar_select 0, %s8, %s6
  loop: start=0, step=1, limit=4
  $region2: #{_forward_impl.1} parent=0 // loop_pre_header
    _
  $region3: #{_forward_impl.1} parent=0 // loop_header
    %s11 = sphi 0, %s15
    %p12 = scmp.ge.s32.totalorder %s11, 4
    %s18 = sphi 0, %s30
    %s19 = sphi 0, %s26
    %s20 = sphi 0, %s18
    %s21 = sphi 0, %s19
    %s22 = sphi 0, %s20
    %s23 = sphi 0, %s21
    %s35 = sphi 0, %s37
    %s38 = sphi 0, %s35
    %s39 = sphi 0, %s38
    %s55 = sphi 0, %s39
    %s67 = sphi 0, %s69
    %s70 = sphi 0, %s67
    %s71 = sphi 0, %s70
    %s87 = sphi 0, %s71
    %s91 = sphi 0, %s91
    %s93 = sphi 0, %s91
    %s94 = sphi 0, %s93
    %s108 = sphi 0, %s94
    %s112 = sphi 0, %s112
    %s114 = sphi 0, %s112
    %s115 = sphi 0, %s114
    %s129 = sphi 0, %s115
    %s133 = sphi 0, %s133
    %s135 = sphi 0, %s133
    %s136 = sphi 0, %s135
    %s150 = sphi 0, %s136
    %s158 = sphi 0, %s160
    %s161 = sphi 0, %s158
    %s162 = sphi 0, %s161
    %s178 = sphi 0, %s162
  $region4: #{_forward_impl.1} parent=0 // loop_header_branch
    %14 = sbr.rel (%p12) target = $region8
  $region5: #{_forward_impl.1} parent=0 // loop_body
    %s16 = ssub.s32 %s11, 1
    %s17 = ssub.s32 %s11, 2
    %s24 = sadd.s32 1, %s19
    %p25 = scmp.ge.s32.totalorder %s24, 1
    %s26 = scalar_select %p25, 0, %s24
    %s27 = sadd.s32 1, %s18
    %s28 = scalar_select %p25, %s27, %s18
    %p29 = scmp.ge.s32.totalorder %s28, 2
    %s30 = scalar_select %p29, 0, %s28
    %s31 = ssub.s32 %s18, %s30
    %s32 = ssub.s32 %s19, %s26
    %s33 = sor.u32 %s31, %s32
    %p34 = scmp.eq.s32.totalorder %s33, 0
    %s36 = sadd.s32 %s35, 1
    %s37 = scalar_select %p34, %s35, %s36
    %p40 = pneg %p34
    %p41 = scmp.eq.s32.totalorder %s11, 1
    %p42 = por %p40, %p41
    %p43 = scmp.ne.s32.totalorder %s35, %s38
    %p44 = scmp.eq.s32.totalorder %s11, 0
    %p45 = por %p43, %p44
    %p46 = scmp.ne.s32.totalorder %s35, %s38
    %p47 = scmp.eq.s32.totalorder %s16, 1
    %p48 = por %p46, %p47
    %p49 = scmp.ne.s32.totalorder %s38, %s39
    %p50 = scmp.eq.s32.totalorder %s16, 0
    %p51 = por %p49, %p50
    %p52 = scmp.ne.s32.totalorder %s38, %s39
    %p53 = scmp.eq.s32.totalorder %s17, 1
    %p54 = por %p52, %p53
    %p56 = scmp.ne.s32.totalorder %s39, %s55
    %p57 = scmp.eq.s32.totalorder %s17, 0
    %p58 = por %p56, %p57
    %s59 = sadd.s32 %s19, 1
    %s60 = smul.u32 %s59, 2
    %s61 = sadd.s32 %s26, 1
    %s62 = smul.u32 %s61, 2
    %s63 = ssub.s32 %s18, %s30
    %s64 = ssub.s32 %s60, %s62
    %s65 = sor.u32 %s63, %s64
    %p66 = scmp.eq.s32.totalorder %s65, 0
    %s68 = sadd.s32 %s67, 1
    %s69 = scalar_select %p66, %s67, %s68
    %p72 = pneg %p66
    %p73 = scmp.eq.s32.totalorder %s11, 1
    %p74 = por %p72, %p73
    %p75 = scmp.ne.s32.totalorder %s67, %s70
    %p76 = scmp.eq.s32.totalorder %s11, 0
    %p77 = por %p75, %p76
    %p78 = scmp.ne.s32.totalorder %s67, %s70
    %p79 = scmp.eq.s32.totalorder %s16, 1
    %p80 = por %p78, %p79
    %p81 = scmp.ne.s32.totalorder %s70, %s71
    %p82 = scmp.eq.s32.totalorder %s16, 0
    %p83 = por %p81, %p82
    %p84 = scmp.ne.s32.totalorder %s70, %s71
    %p85 = scmp.eq.s32.totalorder %s17, 1
    %p86 = por %p84, %p85
    %p88 = scmp.ne.s32.totalorder %s71, %s87
    %p89 = scmp.eq.s32.totalorder %s17, 0
    %p90 = por %p88, %p89
    %s92 = sadd.s32 %s91, 1
    %p95 = scmp.eq.s32.totalorder %s11, 1
    %p96 = scmp.ne.s32.totalorder %s91, %s93
    %p97 = scmp.eq.s32.totalorder %s11, 0
    %p98 = por %p96, %p97
    %p99 = scmp.ne.s32.totalorder %s91, %s93
    %p100 = scmp.eq.s32.totalorder %s16, 1
    %p101 = por %p99, %p100
    %p102 = scmp.ne.s32.totalorder %s93, %s94
    %p103 = scmp.eq.s32.totalorder %s16, 0
    %p104 = por %p102, %p103
    %p105 = scmp.ne.s32.totalorder %s93, %s94
    %p106 = scmp.eq.s32.totalorder %s17, 1
    %p107 = por %p105, %p106
    %p109 = scmp.ne.s32.totalorder %s94, %s108
    %p110 = scmp.eq.s32.totalorder %s17, 0
    %p111 = por %p109, %p110
    %s113 = sadd.s32 %s112, 1
    %p116 = scmp.eq.s32.totalorder %s11, 1
    %p117 = scmp.ne.s32.totalorder %s112, %s114
    %p118 = scmp.eq.s32.totalorder %s11, 0
    %p119 = por %p117, %p118
    %p120 = scmp.ne.s32.totalorder %s112, %s114
    %p121 = scmp.eq.s32.totalorder %s16, 1
    %p122 = por %p120, %p121
    %p123 = scmp.ne.s32.totalorder %s114, %s115
    %p124 = scmp.eq.s32.totalorder %s16, 0
    %p125 = por %p123, %p124
    %p126 = scmp.ne.s32.totalorder %s114, %s115
    %p127 = scmp.eq.s32.totalorder %s17, 1
    %p128 = por %p126, %p127
    %p130 = scmp.ne.s32.totalorder %s115, %s129
    %p131 = scmp.eq.s32.totalorder %s17, 0
    %p132 = por %p130, %p131
    %s134 = sadd.s32 %s133, 1
    %p137 = scmp.eq.s32.totalorder %s11, 1
    %p138 = scmp.ne.s32.totalorder %s133, %s135
    %p139 = scmp.eq.s32.totalorder %s11, 0
    %p140 = por %p138, %p139
    %p141 = scmp.ne.s32.totalorder %s133, %s135
    %p142 = scmp.eq.s32.totalorder %s16, 1
    %p143 = por %p141, %p142
    %p144 = scmp.ne.s32.totalorder %s135, %s136
    %p145 = scmp.eq.s32.totalorder %s16, 0
    %p146 = por %p144, %p145
    %p147 = scmp.ne.s32.totalorder %s135, %s136
    %p148 = scmp.eq.s32.totalorder %s17, 1
    %p149 = por %p147, %p148
    %p151 = scmp.ne.s32.totalorder %s136, %s150
    %p152 = scmp.eq.s32.totalorder %s17, 0
    %p153 = por %p151, %p152
    %s154 = ssub.s32 %s18, %s30
    %s155 = ssub.s32 %s19, %s26
    %s156 = sor.u32 %s154, %s155
    %p157 = scmp.eq.s32.totalorder %s156, 0
    %s159 = sadd.s32 %s158, 1
    %s160 = scalar_select %p157, %s158, %s159
    %p163 = pneg %p157
    %p164 = scmp.eq.s32.totalorder %s11, 1
    %p165 = por %p163, %p164
    %p166 = scmp.ne.s32.totalorder %s158, %s161
    %p167 = scmp.eq.s32.totalorder %s11, 0
    %p168 = por %p166, %p167
    %p169 = scmp.ne.s32.totalorder %s158, %s161
    %p170 = scmp.eq.s32.totalorder %s16, 1
    %p171 = por %p169, %p170
    %p172 = scmp.ne.s32.totalorder %s161, %s162
    %p173 = scmp.eq.s32.totalorder %s16, 0
    %p174 = por %p172, %p173
    %p175 = scmp.ne.s32.totalorder %s161, %s162
    %p176 = scmp.eq.s32.totalorder %s17, 1
    %p177 = por %p175, %p176
    %p179 = scmp.ne.s32.totalorder %s162, %s178
    %p180 = scmp.eq.s32.totalorder %s17, 0
    %p181 = por %p179, %p180
    %p182 = scmp.le.s32.totalorder 1, %s11
    %p183 = scmp.lt.s32.totalorder %s11, 3
    %p184 = pnand %p182, %p183
    %p185 = pneg %p184
    // Predicated region
    $region9: #{_forward_impl.1} parent=5 // pred_check
      _
    $region10: #{_forward_impl.1} parent=5 // pred_check_branch
      %187 = sbr.rel (%p184) target = $region12
    $region11: #{_forward_impl.1} parent=5 // pred_region
      %s188 = ssub.s32 %s11, 1
      // Predicated region
      $region13: #{_forward_impl.1} parent=11 // pred_check
        %p189 = pneg %p104
      $region14: #{_forward_impl.1} parent=11 // pred_check_branch
        %191 = sbr.rel (%p189) target = $region16
      $region15: #{_forward_impl.1} parent=11 // pred_region
        _
      $region16: #{_forward_impl.1} parent=11 // pred_fallthru
        _
      // Predicated region
      $region17: #{_forward_impl.1} parent=11 // pred_check
        %p192 = pneg %p125
      $region18: #{_forward_impl.1} parent=11 // pred_check_branch
        %194 = sbr.rel (%p192) target = $region20
      $region19: #{_forward_impl.1} parent=11 // pred_region
        _
      $region20: #{_forward_impl.1} parent=11 // pred_fallthru
        _
      // Predicated region
      $region21: #{_forward_impl.1} parent=11 // pred_check
        %p195 = pneg %p146
      $region22: #{_forward_impl.1} parent=11 // pred_check_branch
        %197 = sbr.rel (%p195) target = $region24
      $region23: #{_forward_impl.1} parent=11 // pred_region
        _
      $region24: #{_forward_impl.1} parent=11 // pred_fallthru
        _
    $region12: #{_forward_impl.1} parent=5 // pred_fallthru
      _
    %p198 = scmp.lt.s32.totalorder %s11, 2
    // Predicated region
    $region25: #{_forward_impl.1} parent=5 // pred_check
      %p199 = pneg %p198
    $region26: #{_forward_impl.1} parent=5 // pred_check_branch
      %201 = sbr.rel (%p199) target = $region28
    $region27: #{_forward_impl.1} parent=5 // pred_region
      // Predicated region
      $region29: #{_forward_impl.1} parent=27 // pred_check
        %p202 = pneg %p45
      $region30: #{_forward_impl.1} parent=27 // pred_check_branch
        %204 = sbr.rel (%p202) target = $region32
      $region31: #{_forward_impl.1} parent=27 // pred_region
        %s205 = smul.u32 4, %s19
        %s206 = ssub.s32 6, %s205
        %p207 = scmp.lt.s32.totalorder %s206, 4
        %s208 = scalar_select %p207, %s206, 4
        %s209 = smul.u32 64, %s208
        %s210 = smul.u32 %s209, 2
        %p211 = scmp.lt.s32.totalorder %s18, 1
        %s212 = scalar_select %p211, %s18, 1
        %p213 = scmp.lt.s32.totalorder %s205, 5
        %s214 = scalar_select %p213, %s205, 5
        %s215 = smul.addr %s214, 2
        %s216 = smul.addr %s212, 12
        %s217 = sadd.s32 %s215, %s216
        %s218 = smul.addr %s217, 4
        %s219 = scalar_lea.vmem %s0, %s218
        %s220 = smul.u32 4, %s19
        %s221 = ssub.s32 6, %s220
        %p222 = scmp.lt.s32.totalorder %s221, 4
        %s223 = scalar_select %p222, %s221, 4
        %s224 = smul.u32 64, %s223
        %s225 = smul.u32 %s224, 2
      $region32: #{_forward_impl.1} parent=27 // pred_fallthru
        _
      // Predicated region
      $region33: #{_forward_impl.1} parent=27 // pred_check
        %p226 = pneg %p77
      $region34: #{_forward_impl.1} parent=27 // pred_check_branch
        %228 = sbr.rel (%p226) target = $region36
      $region35: #{_forward_impl.1} parent=27 // pred_region
        %s229 = sadd.s32 %s19, 1
        %s230 = smul.u32 %s229, 2
        %s231 = smul.u32 2, %s230
        %p232 = scmp.lt.s32.totalorder %s18, 1
        %s233 = scalar_select %p232, %s18, 1
        %p234 = scmp.lt.s32.totalorder %s231, 5
        %s235 = scalar_select %p234, %s231, 5
        %s236 = smul.addr %s235, 2
        %s237 = smul.addr %s233, 12
        %s238 = sadd.s32 %s236, %s237
        %s239 = smul.addr %s238, 4
        %s240 = scalar_lea.vmem %s1, %s239
        %s241 = sadd.s32 %s19, 1
        %s242 = smul.u32 %s241, 2
        %s243 = smul.u32 2, %s242
      $region36: #{_forward_impl.1} parent=27 // pred_fallthru
        _
    $region28: #{_forward_impl.1} parent=5 // pred_fallthru
      _
    %p244 = scmp.le.s32.totalorder 1, %s11
    %p245 = scmp.lt.s32.totalorder %s11, 3
    %p246 = pnand %p244, %p245
    %p247 = pneg %p246
    // Predicated region
    $region37: #{_forward_impl.1} parent=5 // pred_check
      _
    $region38: #{_forward_impl.1} parent=5 // pred_check_branch
      %249 = sbr.rel (%p246) target = $region40
    $region39: #{_forward_impl.1} parent=5 // pred_region
      %s250 = ssub.s32 %s11, 1
      %s251 = smul.u32 4, %s21
      %s252 = ssub.s32 6, %s251
      %p253 = scmp.lt.s32.totalorder %s252, 4
      %s254 = scalar_select %p253, %s252, 4
      %s255 = smul.u32 64, %s254
      %s256 = smul.u32 %s255, 2
      %p257 = scmp.lt.s32.totalorder %s20, 1
      %s258 = scalar_select %p257, %s20, 1
      %p259 = scmp.lt.s32.totalorder %s251, 5
      %s260 = scalar_select %p259, %s251, 5
      %s261 = smul.addr %s260, 2
      %s262 = smul.addr %s258, 12
      %s263 = sadd.s32 %s261, %s262
      %s264 = smul.addr %s263, 4
      %s265 = scalar_lea.vmem %s0, %s264
      %p266 = pneg %p51
      %p267 = pneg %p48
      %s268 = sadd.s32 %s21, 1
      %s269 = smul.u32 %s268, 2
      %s270 = smul.u32 2, %s269
      %p271 = scmp.lt.s32.totalorder %s20, 1
      %s272 = scalar_select %p271, %s20, 1
      %p273 = scmp.lt.s32.totalorder %s270, 5
      %s274 = scalar_select %p273, %s270, 5
      %s275 = smul.addr %s274, 2
      %s276 = smul.addr %s272, 12
      %s277 = sadd.s32 %s275, %s276
      %s278 = smul.addr %s277, 4
      %s279 = scalar_lea.vmem %s1, %s278
      %p280 = pneg %p83
      %p281 = pneg %p80
      %p282 = pneg %p104
      %p283 = pneg %p101
      %p284 = pneg %p125
      %p285 = pneg %p122
      %p286 = pneg %p146
      %p287 = pneg %p143
      %p288 = pneg %p174
      %p289 = pneg %p171
      %s290 = smul.u32 4, %s21
      %p291 = scmp.lt.s32.totalorder %s20, 1
      %s292 = scalar_select %p291, %s20, 1
      %p293 = scmp.lt.s32.totalorder %s290, 3
      %s294 = scalar_select %p293, %s290, 3
      %s295 = smul.addr %s292, 4
      %s296 = sadd.s32 %s294, %s295
      %s297 = smul.addr %s296, 8
      %s298 = scalar_lea.vmem %s5, %s297
      %s299 = smul.u32 4, %s21
      %s300 = ssub.s32 6, %s299
      %p301 = scmp.lt.s32.totalorder %s300, 4
      %s302 = scalar_select %p301, %s300, 4
      %s303 = smul.u32 64, %s302
      %s304 = smul.u32 %s303, 2
      %p305 = scmp.lt.s32.totalorder %s20, 1
      %s306 = scalar_select %p305, %s20, 1
      %p307 = scmp.lt.s32.totalorder %s299, 5
      %s308 = scalar_select %p307, %s299, 5
      %s309 = smul.addr %s308, 2
      %s310 = smul.addr %s306, 12
      %s311 = sadd.s32 %s309, %s310
      %s312 = smul.addr %s311, 4
      %s313 = scalar_lea.vmem %s0, %s312
      %s314 = smul.u32 4, %s21
      %s315 = ssub.s32 6, %s314
      %p316 = scmp.lt.s32.totalorder %s315, 4
      %s317 = scalar_select %p316, %s315, 4
      %s318 = smul.u32 64, %s317
      %s319 = smul.u32 %s318, 2
      %s320 = sadd.s32 %s21, 1
      %s321 = smul.u32 %s320, 2
      %s322 = smul.u32 2, %s321
      %p323 = scmp.lt.s32.totalorder %s20, 1
      %s324 = scalar_select %p323, %s20, 1
      %p325 = scmp.lt.s32.totalorder %s322, 5
      %s326 = scalar_select %p325, %s322, 5
      %s327 = smul.addr %s326, 2
      %s328 = smul.addr %s324, 12
      %s329 = sadd.s32 %s327, %s328
      %s330 = smul.addr %s329, 4
      %s331 = scalar_lea.vmem %s1, %s330
      %s332 = sadd.s32 %s21, 1
      %s333 = smul.u32 %s332, 2
      %s334 = smul.u32 2, %s333
      %s335 = smul.u32 4, %s21
      %p336 = scmp.lt.s32.totalorder %s20, 1
      %s337 = scalar_select %p336, %s20, 1
      %p338 = scmp.lt.s32.totalorder %s335, 3
      %s339 = scalar_select %p338, %s335, 3
      %s340 = smul.addr %s337, 4
      %s341 = sadd.s32 %s339, %s340
      %s342 = smul.addr %s341, 8
      %s343 = scalar_lea.vmem %s5, %s342
      %s344 = smul.u32 4, %s21
      %v346 = vld [vmem:[%s313] sm:$0xff]
      %v347 = vld [vmem:[%s313 + $0x8] sm:$0xff]
      %v348 = vld [vmem:[%s313 + $0x10] sm:$0xff]
      %v349 = vld [vmem:[%s313 + $0x18] sm:$0xff]
      %v350 = vld [vmem:[%s331] sm:$0xff]
      %v351 = vld [vmem:[%s331 + $0x8] sm:$0xff]
      %v356 = vunpack.c.l.b16 %v346
      %v357 = vunpack.c.h.b16 %v346
      %v358 = vunpack.c.l.b16 %v347
      %v359 = vunpack.c.h.b16 %v347
      %v360 = vunpack.c.l.b16 %v348
      %v361 = vunpack.c.h.b16 %v348
      %v362 = vunpack.c.l.b16 %v349
      %v363 = vunpack.c.h.b16 %v349
      %v364 = vpack.c.b16 %v358, %v356
      %v365 = vpack.c.b16 %v359, %v357
      %v366 = vpack.c.b16 %v362, %v360
      %v367 = vpack.c.b16 %v363, %v361
      %v370 = vunpack.c.l.b16 %v350
      %v371 = vunpack.c.h.b16 %v350
      %v372 = vunpack.c.l.b16 %v351
      %v373 = vunpack.c.h.b16 %v351
      %v374 = vpack.c.b16 %v372, %v370
      %v375 = vpack.c.b16 %v373, %v371
      %vm380 = vsmask.f32 7424
      %v382 = vshrl.u32 %v364, 16
      %v384 = vshll.u32 %v364, 16
      %v386 = vrot.slane %v384, 1
      %v387 = vor.u32 %v382, %v386
      %v389 = vshll.u32 %v366, 16
      %v391 = vrot.slane %v389, 1
      %v392 = vsel %vm380, %v387, %v391
      %v394 = vshrl.u32 %v365, 16
      %v396 = vshll.u32 %v365, 16
      %v398 = vrot.slane %v396, 1
      %v399 = vor.u32 %v394, %v398
      %v401 = vshll.u32 %v367, 16
      %v403 = vrot.slane %v401, 1
      %v404 = vsel %vm380, %v399, %v403
      %v405 = vshrl.u32 %v366, 16
      %v407 = vor.u32 %v405, %v391
      %v409 = vshll.u32 %v374, 16
      %v411 = vrot.slane %v409, 1
      %v412 = vsel %vm380, %v407, %v411
      %v413 = vshrl.u32 %v367, 16
      %v415 = vor.u32 %v413, %v403
      %v417 = vshll.u32 %v375, 16
      %v419 = vrot.slane %v417, 1
      %v420 = vsel %vm380, %v415, %v419
      %vm425 = vcmask 1046528
      %v426 = vrot.slane %v364, 1
      %v427 = vrot.slane %v366, 1
      %v428 = vsel %vm425, %v426, %v427
      %v429 = vrot.slane %v365, 1
      %v430 = vrot.slane %v367, 1
      %v431 = vsel %vm425, %v429, %v430
      %v432 = vrot.slane %v374, 1
      %v433 = vsel %vm425, %v427, %v432
      %v434 = vrot.slane %v375, 1
      %v435 = vsel %vm425, %v430, %v434
      %vm440 = vsmask.f32 6400
      %v441 = vrot.slane %v382, 1
      %v442 = vrot.slane %v384, 2
      %v443 = vor.u32 %v441, %v442
      %v444 = vrot.slane %v405, 1
      %v445 = vrot.slane %v389, 2
      %v446 = vor.u32 %v444, %v445
      %v447 = vsel %vm440, %v443, %v446
      %v448 = vrot.slane %v394, 1
      %v449 = vrot.slane %v396, 2
      %v450 = vor.u32 %v448, %v449
      %v451 = vrot.slane %v413, 1
      %v452 = vrot.slane %v401, 2
      %v453 = vor.u32 %v451, %v452
      %v454 = vsel %vm440, %v450, %v453
      %v455 = vshrl.u32 %v374, 16
      %v457 = vrot.slane %v455, 1
      %v458 = vrot.slane %v409, 2
      %v459 = vor.u32 %v457, %v458
      %v460 = vsel %vm440, %v446, %v459
      %v461 = vshrl.u32 %v375, 16
      %v463 = vrot.slane %v461, 1
      %v464 = vrot.slane %v417, 2
      %v465 = vor.u32 %v463, %v464
      %v466 = vsel %vm440, %v453, %v465
      %v471 = vld [vmem:[%s2] sm:$0xff]
      %v472 = vld [vmem:[%s2 + $0x8] sm:$0xff]
      %v473 = vld [vmem:[%s2 + $0x10] sm:$0xff]
      %v474 = vld [vmem:[%s2 + $0x18] sm:$0xff]
      %v475 = vld [vmem:[%s2 + $0x20] sm:$0xff]
      %v476 = vld [vmem:[%s2 + $0x28] sm:$0xff]
      %v477 = vld [vmem:[%s2 + $0x30] sm:$0xff]
      %v478 = vld [vmem:[%s2 + $0x38] sm:$0xff]
      %v479 = vld [vmem:[%s2 + $0x40] sm:$0xff]
      %v480 = vld [vmem:[%s2 + $0x48] sm:$0xff]
      %v481 = vld [vmem:[%s2 + $0x50] sm:$0xff]
      %v482 = vld [vmem:[%s2 + $0x58] sm:$0xff]
      %v483 = vld [vmem:[%s2 + $0x60] sm:$0xff]
      %v484 = vld [vmem:[%s2 + $0x68] sm:$0xff]
      %v485 = vld [vmem:[%s2 + $0x70] sm:$0xff]
      %v486 = vld [vmem:[%s2 + $0x78] sm:$0xff]
      %v487 = vld [vmem:[%s2 + $0x80] sm:$0xff]
      %v488 = vld [vmem:[%s2 + $0x88] sm:$0xff]
      %v489 = vld [vmem:[%s2 + $0x90] sm:$0xff]
      %v490 = vld [vmem:[%s2 + $0x98] sm:$0xff]
      %v491 = vld [vmem:[%s2 + $0xa0] sm:$0xff]
      %v492 = vld [vmem:[%s2 + $0xa8] sm:$0xff]
      %v493 = vld [vmem:[%s2 + $0xb0] sm:$0xff]
      %v494 = vld [vmem:[%s2 + $0xb8] sm:$0xff]
      %v495 = vld [vmem:[%s2 + $0xc0] sm:$0xff]
      %v496 = vld [vmem:[%s2 + $0xc8] sm:$0xff]
      %v497 = vld [vmem:[%s2 + $0xd0] sm:$0xff]
      %v498 = vld [vmem:[%s2 + $0xd8] sm:$0xff]
      %v499 = vld [vmem:[%s2 + $0xe0] sm:$0xff]
      %v500 = vld [vmem:[%s2 + $0xe8] sm:$0xff]
      %v501 = vld [vmem:[%s2 + $0xf0] sm:$0xff]
      %v502 = vld [vmem:[%s2 + $0xf8] sm:$0xff]
      %v503 = vld [vmem:[%s2 + $0x100] sm:$0xff]
      %v504 = vld [vmem:[%s2 + $0x108] sm:$0xff]
      %v505 = vld [vmem:[%s2 + $0x110] sm:$0xff]
      %v506 = vld [vmem:[%s2 + $0x118] sm:$0xff]
      %v507 = vld [vmem:[%s2 + $0x120] sm:$0xff]
      %v508 = vld [vmem:[%s2 + $0x128] sm:$0xff]
      %v509 = vld [vmem:[%s2 + $0x130] sm:$0xff]
      %v510 = vld [vmem:[%s2 + $0x138] sm:$0xff]
      %v511 = vld [vmem:[%s2 + $0x140] sm:$0xff]
      %v512 = vld [vmem:[%s2 + $0x148] sm:$0xff]
      %v513 = vld [vmem:[%s2 + $0x150] sm:$0xff]
      %v514 = vld [vmem:[%s2 + $0x158] sm:$0xff]
      %v515 = vld [vmem:[%s2 + $0x160] sm:$0xff]
      %v516 = vld [vmem:[%s2 + $0x168] sm:$0xff]
      %v517 = vld [vmem:[%s2 + $0x170] sm:$0xff]
      %v518 = vld [vmem:[%s2 + $0x178] sm:$0xff]
      %v519 = vld [vmem:[%s2 + $0x180] sm:$0xff]
      %v520 = vld [vmem:[%s2 + $0x188] sm:$0xff]
      %v521 = vld [vmem:[%s2 + $0x190] sm:$0xff]
      %v522 = vld [vmem:[%s2 + $0x198] sm:$0xff]
      %v523 = vld [vmem:[%s2 + $0x1a0] sm:$0xff]
      %v524 = vld [vmem:[%s2 + $0x1a8] sm:$0xff]
      %v525 = vld [vmem:[%s2 + $0x1b0] sm:$0xff]
      %v526 = vld [vmem:[%s2 + $0x1b8] sm:$0xff]
      %v527 = vld [vmem:[%s2 + $0x1c0] sm:$0xff]
      %v528 = vld [vmem:[%s2 + $0x1c8] sm:$0xff]
      %v529 = vld [vmem:[%s2 + $0x1d0] sm:$0xff]
      %v530 = vld [vmem:[%s2 + $0x1d8] sm:$0xff]
      %v531 = vld [vmem:[%s2 + $0x1e0] sm:$0xff]
      %v532 = vld [vmem:[%s2 + $0x1e8] sm:$0xff]
      %v533 = vld [vmem:[%s2 + $0x1f0] sm:$0xff]
      %v534 = vld [vmem:[%s2 + $0x1f8] sm:$0xff]
      %v535 = vld [vmem:[%s2 + $0x200] sm:$0xff]
      %v536 = vld [vmem:[%s2 + $0x208] sm:$0xff]
      %v537 = vld [vmem:[%s2 + $0x210] sm:$0xff]
      %v538 = vld [vmem:[%s2 + $0x218] sm:$0xff]
      %v539 = vld [vmem:[%s2 + $0x220] sm:$0xff]
      %v540 = vld [vmem:[%s2 + $0x228] sm:$0xff]
      %v541 = vld [vmem:[%s2 + $0x230] sm:$0xff]
      %v542 = vld [vmem:[%s2 + $0x238] sm:$0xff]
      %v543 = vld [vmem:[%s2 + $0x240] sm:$0xff]
      %v544 = vld [vmem:[%s2 + $0x248] sm:$0xff]
      %v545 = vld [vmem:[%s2 + $0x250] sm:$0xff]
      %v546 = vld [vmem:[%s2 + $0x258] sm:$0xff]
      %v547 = vld [vmem:[%s2 + $0x260] sm:$0xff]
      %v548 = vld [vmem:[%s2 + $0x268] sm:$0xff]
      %v549 = vld [vmem:[%s2 + $0x270] sm:$0xff]
      %v550 = vld [vmem:[%s2 + $0x278] sm:$0xff]
      %v551 = vld [vmem:[%s2 + $0x280] sm:$0xff]
      %v552 = vld [vmem:[%s2 + $0x288] sm:$0xff]
      %v553 = vld [vmem:[%s2 + $0x290] sm:$0xff]
      %v554 = vld [vmem:[%s2 + $0x298] sm:$0xff]
      %v555 = vld [vmem:[%s2 + $0x2a0] sm:$0xff]
      %v556 = vld [vmem:[%s2 + $0x2a8] sm:$0xff]
      %v557 = vld [vmem:[%s2 + $0x2b0] sm:$0xff]
      %v558 = vld [vmem:[%s2 + $0x2b8] sm:$0xff]
      %v559 = vld [vmem:[%s2 + $0x2c0] sm:$0xff]
      %v560 = vld [vmem:[%s2 + $0x2c8] sm:$0xff]
      %v561 = vld [vmem:[%s2 + $0x2d0] sm:$0xff]
      %v562 = vld [vmem:[%s2 + $0x2d8] sm:$0xff]
      %v563 = vld [vmem:[%s2 + $0x2e0] sm:$0xff]
      %v564 = vld [vmem:[%s2 + $0x2e8] sm:$0xff]
      %v565 = vld [vmem:[%s2 + $0x2f0] sm:$0xff]
      %v566 = vld [vmem:[%s2 + $0x2f8] sm:$0xff]
      %v567 = vld [vmem:[%s2 + $0x300] sm:$0xff]
      %v568 = vld [vmem:[%s2 + $0x308] sm:$0xff]
      %v569 = vld [vmem:[%s2 + $0x310] sm:$0xff]
      %v570 = vld [vmem:[%s2 + $0x318] sm:$0xff]
      %v571 = vld [vmem:[%s2 + $0x320] sm:$0xff]
      %v572 = vld [vmem:[%s2 + $0x328] sm:$0xff]
      %v573 = vld [vmem:[%s2 + $0x330] sm:$0xff]
      %v574 = vld [vmem:[%s2 + $0x338] sm:$0xff]
      %v575 = vld [vmem:[%s2 + $0x340] sm:$0xff]
      %v576 = vld [vmem:[%s2 + $0x348] sm:$0xff]
      %v577 = vld [vmem:[%s2 + $0x350] sm:$0xff]
      %v578 = vld [vmem:[%s2 + $0x358] sm:$0xff]
      %v579 = vld [vmem:[%s2 + $0x360] sm:$0xff]
      %v580 = vld [vmem:[%s2 + $0x368] sm:$0xff]
      %v581 = vld [vmem:[%s2 + $0x370] sm:$0xff]
      %v582 = vld [vmem:[%s2 + $0x378] sm:$0xff]
      %v583 = vld [vmem:[%s2 + $0x380] sm:$0xff]
      %v584 = vld [vmem:[%s2 + $0x388] sm:$0xff]
      %v585 = vld [vmem:[%s2 + $0x390] sm:$0xff]
      %v586 = vld [vmem:[%s2 + $0x398] sm:$0xff]
      %v587 = vld [vmem:[%s2 + $0x3a0] sm:$0xff]
      %v588 = vld [vmem:[%s2 + $0x3a8] sm:$0xff]
      %v589 = vld [vmem:[%s2 + $0x3b0] sm:$0xff]
      %v590 = vld [vmem:[%s2 + $0x3b8] sm:$0xff]
      %v591 = vld [vmem:[%s2 + $0x3c0] sm:$0xff]
      %v592 = vld [vmem:[%s2 + $0x3c8] sm:$0xff]
      %v593 = vld [vmem:[%s2 + $0x3d0] sm:$0xff]
      %v594 = vld [vmem:[%s2 + $0x3d8] sm:$0xff]
      %v595 = vld [vmem:[%s2 + $0x3e0] sm:$0xff]
      %v596 = vld [vmem:[%s2 + $0x3e8] sm:$0xff]
      %v597 = vld [vmem:[%s2 + $0x3f0] sm:$0xff]
      %v598 = vld [vmem:[%s2 + $0x3f8] sm:$0xff]
      %v599 = vld [vmem:[%s2 + $0x400] sm:$0xff]
      %v600 = vld [vmem:[%s2 + $0x408] sm:$0xff]
      %v601 = vld [vmem:[%s2 + $0x410] sm:$0xff]
      %v602 = vld [vmem:[%s2 + $0x418] sm:$0xff]
      %v603 = vld [vmem:[%s2 + $0x420] sm:$0xff]
      %v604 = vld [vmem:[%s2 + $0x428] sm:$0xff]
      %v605 = vld [vmem:[%s2 + $0x430] sm:$0xff]
      %v606 = vld [vmem:[%s2 + $0x438] sm:$0xff]
      %v607 = vld [vmem:[%s2 + $0x440] sm:$0xff]
      %v608 = vld [vmem:[%s2 + $0x448] sm:$0xff]
      %v609 = vld [vmem:[%s2 + $0x450] sm:$0xff]
      %v610 = vld [vmem:[%s2 + $0x458] sm:$0xff]
      %v611 = vld [vmem:[%s2 + $0x460] sm:$0xff]
      %v612 = vld [vmem:[%s2 + $0x468] sm:$0xff]
      %v613 = vld [vmem:[%s2 + $0x470] sm:$0xff]
      %v614 = vld [vmem:[%s2 + $0x478] sm:$0xff]
      %v615 = vld [vmem:[%s2 + $0x480] sm:$0xff]
      %v616 = vld [vmem:[%s2 + $0x488] sm:$0xff]
      %v617 = vld [vmem:[%s2 + $0x490] sm:$0xff]
      %v618 = vld [vmem:[%s2 + $0x498] sm:$0xff]
      %v619 = vld [vmem:[%s2 + $0x4a0] sm:$0xff]
      %v620 = vld [vmem:[%s2 + $0x4a8] sm:$0xff]
      %v621 = vld [vmem:[%s2 + $0x4b0] sm:$0xff]
      %v622 = vld [vmem:[%s2 + $0x4b8] sm:$0xff]
      %v623 = vld [vmem:[%s2 + $0x4c0] sm:$0xff]
      %v624 = vld [vmem:[%s2 + $0x4c8] sm:$0xff]
      %v625 = vld [vmem:[%s2 + $0x4d0] sm:$0xff]
      %v626 = vld [vmem:[%s2 + $0x4d8] sm:$0xff]
      %v627 = vld [vmem:[%s2 + $0x4e0] sm:$0xff]
      %v628 = vld [vmem:[%s2 + $0x4e8] sm:$0xff]
      %v629 = vld [vmem:[%s2 + $0x4f0] sm:$0xff]
      %v630 = vld [vmem:[%s2 + $0x4f8] sm:$0xff]
      %v631 = vld [vmem:[%s2 + $0x500] sm:$0xff]
      %v632 = vld [vmem:[%s2 + $0x508] sm:$0xff]
      %v633 = vld [vmem:[%s2 + $0x510] sm:$0xff]
      %v634 = vld [vmem:[%s2 + $0x518] sm:$0xff]
      %v635 = vld [vmem:[%s2 + $0x520] sm:$0xff]
      %v636 = vld [vmem:[%s2 + $0x528] sm:$0xff]
      %v637 = vld [vmem:[%s2 + $0x530] sm:$0xff]
      %v638 = vld [vmem:[%s2 + $0x538] sm:$0xff]
      %v639 = vld [vmem:[%s2 + $0x540] sm:$0xff]
      %v640 = vld [vmem:[%s2 + $0x548] sm:$0xff]
      %v641 = vld [vmem:[%s2 + $0x550] sm:$0xff]
      %v642 = vld [vmem:[%s2 + $0x558] sm:$0xff]
      %v643 = vld [vmem:[%s2 + $0x560] sm:$0xff]
      %v644 = vld [vmem:[%s2 + $0x568] sm:$0xff]
      %v645 = vld [vmem:[%s2 + $0x570] sm:$0xff]
      %v646 = vld [vmem:[%s2 + $0x578] sm:$0xff]
      %v647 = vld [vmem:[%s2 + $0x580] sm:$0xff]
      %v648 = vld [vmem:[%s2 + $0x588] sm:$0xff]
      %v649 = vld [vmem:[%s2 + $0x590] sm:$0xff]
      %v650 = vld [vmem:[%s2 + $0x598] sm:$0xff]
      %v651 = vld [vmem:[%s2 + $0x5a0] sm:$0xff]
      %v652 = vld [vmem:[%s2 + $0x5a8] sm:$0xff]
      %v653 = vld [vmem:[%s2 + $0x5b0] sm:$0xff]
      %v654 = vld [vmem:[%s2 + $0x5b8] sm:$0xff]
      %v655 = vld [vmem:[%s2 + $0x5c0] sm:$0xff]
      %v656 = vld [vmem:[%s2 + $0x5c8] sm:$0xff]
      %v657 = vld [vmem:[%s2 + $0x5d0] sm:$0xff]
      %v658 = vld [vmem:[%s2 + $0x5d8] sm:$0xff]
      %v659 = vld [vmem:[%s2 + $0x5e0] sm:$0xff]
      %v660 = vld [vmem:[%s2 + $0x5e8] sm:$0xff]
      %v661 = vld [vmem:[%s2 + $0x5f0] sm:$0xff]
      %v662 = vld [vmem:[%s2 + $0x5f8] sm:$0xff]
      %v663 = vld [vmem:[%s2 + $0x600] sm:$0xff]
      %v664 = vld [vmem:[%s2 + $0x608] sm:$0xff]
      %v665 = vld [vmem:[%s2 + $0x610] sm:$0xff]
      %v666 = vld [vmem:[%s2 + $0x618] sm:$0xff]
      %v667 = vld [vmem:[%s2 + $0x620] sm:$0xff]
      %v668 = vld [vmem:[%s2 + $0x628] sm:$0xff]
      %v669 = vld [vmem:[%s2 + $0x630] sm:$0xff]
      %v670 = vld [vmem:[%s2 + $0x638] sm:$0xff]
      %v671 = vld [vmem:[%s2 + $0x640] sm:$0xff]
      %v672 = vld [vmem:[%s2 + $0x648] sm:$0xff]
      %v673 = vld [vmem:[%s2 + $0x650] sm:$0xff]
      %v674 = vld [vmem:[%s2 + $0x658] sm:$0xff]
      %v675 = vld [vmem:[%s2 + $0x660] sm:$0xff]
      %v676 = vld [vmem:[%s2 + $0x668] sm:$0xff]
      %v677 = vld [vmem:[%s2 + $0x670] sm:$0xff]
      %v678 = vld [vmem:[%s2 + $0x678] sm:$0xff]
      %v679 = vld [vmem:[%s2 + $0x680] sm:$0xff]
      %v680 = vld [vmem:[%s2 + $0x688] sm:$0xff]
      %v681 = vld [vmem:[%s2 + $0x690] sm:$0xff]
      %v682 = vld [vmem:[%s2 + $0x698] sm:$0xff]
      %v683 = vld [vmem:[%s2 + $0x6a0] sm:$0xff]
      %v684 = vld [vmem:[%s2 + $0x6a8] sm:$0xff]
      %v685 = vld [vmem:[%s2 + $0x6b0] sm:$0xff]
      %v686 = vld [vmem:[%s2 + $0x6b8] sm:$0xff]
      %v687 = vld [vmem:[%s2 + $0x6c0] sm:$0xff]
      %v688 = vld [vmem:[%s2 + $0x6c8] sm:$0xff]
      %v689 = vld [vmem:[%s2 + $0x6d0] sm:$0xff]
      %v690 = vld [vmem:[%s2 + $0x6d8] sm:$0xff]
      %v691 = vld [vmem:[%s2 + $0x6e0] sm:$0xff]
      %v692 = vld [vmem:[%s2 + $0x6e8] sm:$0xff]
      %v693 = vld [vmem:[%s2 + $0x6f0] sm:$0xff]
      %v694 = vld [vmem:[%s2 + $0x6f8] sm:$0xff]
      %v695 = vld [vmem:[%s2 + $0x700] sm:$0xff]
      %v696 = vld [vmem:[%s2 + $0x708] sm:$0xff]
      %v697 = vld [vmem:[%s2 + $0x710] sm:$0xff]
      %v698 = vld [vmem:[%s2 + $0x718] sm:$0xff]
      %v699 = vld [vmem:[%s2 + $0x720] sm:$0xff]
      %v700 = vld [vmem:[%s2 + $0x728] sm:$0xff]
      %v701 = vld [vmem:[%s2 + $0x730] sm:$0xff]
      %v702 = vld [vmem:[%s2 + $0x738] sm:$0xff]
      %v703 = vld [vmem:[%s2 + $0x740] sm:$0xff]
      %v704 = vld [vmem:[%s2 + $0x748] sm:$0xff]
      %v705 = vld [vmem:[%s2 + $0x750] sm:$0xff]
      %v706 = vld [vmem:[%s2 + $0x758] sm:$0xff]
      %v707 = vld [vmem:[%s2 + $0x760] sm:$0xff]
      %v708 = vld [vmem:[%s2 + $0x768] sm:$0xff]
      %v709 = vld [vmem:[%s2 + $0x770] sm:$0xff]
      %v710 = vld [vmem:[%s2 + $0x778] sm:$0xff]
      %v711 = vld [vmem:[%s2 + $0x780] sm:$0xff]
      %v712 = vld [vmem:[%s2 + $0x788] sm:$0xff]
      %v713 = vld [vmem:[%s2 + $0x790] sm:$0xff]
      %v714 = vld [vmem:[%s2 + $0x798] sm:$0xff]
      %v715 = vld [vmem:[%s2 + $0x7a0] sm:$0xff]
      %v716 = vld [vmem:[%s2 + $0x7a8] sm:$0xff]
      %v717 = vld [vmem:[%s2 + $0x7b0] sm:$0xff]
      %v718 = vld [vmem:[%s2 + $0x7b8] sm:$0xff]
      %v719 = vld [vmem:[%s2 + $0x7c0] sm:$0xff]
      %v720 = vld [vmem:[%s2 + $0x7c8] sm:$0xff]
      %v721 = vld [vmem:[%s2 + $0x7d0] sm:$0xff]
      %v722 = vld [vmem:[%s2 + $0x7d8] sm:$0xff]
      %v723 = vld [vmem:[%s2 + $0x7e0] sm:$0xff]
      %v724 = vld [vmem:[%s2 + $0x7e8] sm:$0xff]
      %v725 = vld [vmem:[%s2 + $0x7f0] sm:$0xff]
      %v726 = vld [vmem:[%s2 + $0x7f8] sm:$0xff]
      %v727 = vld [vmem:[%s2 + $0x800] sm:$0xff]
      %v728 = vld [vmem:[%s2 + $0x808] sm:$0xff]
      %v729 = vld [vmem:[%s2 + $0x810] sm:$0xff]
      %v730 = vld [vmem:[%s2 + $0x818] sm:$0xff]
      %v731 = vld [vmem:[%s2 + $0x820] sm:$0xff]
      %v732 = vld [vmem:[%s2 + $0x828] sm:$0xff]
      %v733 = vld [vmem:[%s2 + $0x830] sm:$0xff]
      %v734 = vld [vmem:[%s2 + $0x838] sm:$0xff]
      %v735 = vld [vmem:[%s2 + $0x840] sm:$0xff]
      %v736 = vld [vmem:[%s2 + $0x848] sm:$0xff]
      %v737 = vld [vmem:[%s2 + $0x850] sm:$0xff]
      %v738 = vld [vmem:[%s2 + $0x858] sm:$0xff]
      %v739 = vld [vmem:[%s2 + $0x860] sm:$0xff]
      %v740 = vld [vmem:[%s2 + $0x868] sm:$0xff]
      %v741 = vld [vmem:[%s2 + $0x870] sm:$0xff]
      %v742 = vld [vmem:[%s2 + $0x878] sm:$0xff]
      %v743 = vld [vmem:[%s2 + $0x880] sm:$0xff]
      %v744 = vld [vmem:[%s2 + $0x888] sm:$0xff]
      %v745 = vld [vmem:[%s2 + $0x890] sm:$0xff]
      %v746 = vld [vmem:[%s2 + $0x898] sm:$0xff]
      %v747 = vld [vmem:[%s2 + $0x8a0] sm:$0xff]
      %v748 = vld [vmem:[%s2 + $0x8a8] sm:$0xff]
      %v749 = vld [vmem:[%s2 + $0x8b0] sm:$0xff]
      %v750 = vld [vmem:[%s2 + $0x8b8] sm:$0xff]
      %v751 = vld [vmem:[%s2 + $0x8c0] sm:$0xff]
      %v752 = vld [vmem:[%s2 + $0x8c8] sm:$0xff]
      %v753 = vld [vmem:[%s2 + $0x8d0] sm:$0xff]
      %v754 = vld [vmem:[%s2 + $0x8d8] sm:$0xff]
      %v755 = vld [vmem:[%s2 + $0x8e0] sm:$0xff]
      %v756 = vld [vmem:[%s2 + $0x8e8] sm:$0xff]
      %v757 = vld [vmem:[%s2 + $0x8f0] sm:$0xff]
      %v758 = vld [vmem:[%s2 + $0x8f8] sm:$0xff]
      %v759 = vld [vmem:[%s2 + $0x900] sm:$0xff]
      %v760 = vld [vmem:[%s2 + $0x908] sm:$0xff]
      %v761 = vld [vmem:[%s2 + $0x910] sm:$0xff]
      %v762 = vld [vmem:[%s2 + $0x918] sm:$0xff]
      %v763 = vld [vmem:[%s2 + $0x920] sm:$0xff]
      %v764 = vld [vmem:[%s2 + $0x928] sm:$0xff]
      %v765 = vld [vmem:[%s2 + $0x930] sm:$0xff]
      %v766 = vld [vmem:[%s2 + $0x938] sm:$0xff]
      %v767 = vld [vmem:[%s2 + $0x940] sm:$0xff]
      %v768 = vld [vmem:[%s2 + $0x948] sm:$0xff]
      %v769 = vld [vmem:[%s2 + $0x950] sm:$0xff]
      %v770 = vld [vmem:[%s2 + $0x958] sm:$0xff]
      %v771 = vld [vmem:[%s2 + $0x960] sm:$0xff]
      %v772 = vld [vmem:[%s2 + $0x968] sm:$0xff]
      %v773 = vld [vmem:[%s2 + $0x970] sm:$0xff]
      %v774 = vld [vmem:[%s2 + $0x978] sm:$0xff]
      %v775 = vld [vmem:[%s2 + $0x980] sm:$0xff]
      %v776 = vld [vmem:[%s2 + $0x988] sm:$0xff]
      %v777 = vld [vmem:[%s2 + $0x990] sm:$0xff]
      %v778 = vld [vmem:[%s2 + $0x998] sm:$0xff]
      %v779 = vld [vmem:[%s2 + $0x9a0] sm:$0xff]
      %v780 = vld [vmem:[%s2 + $0x9a8] sm:$0xff]
      %v781 = vld [vmem:[%s2 + $0x9b0] sm:$0xff]
      %v782 = vld [vmem:[%s2 + $0x9b8] sm:$0xff]
      %v783 = vld [vmem:[%s2 + $0x9c0] sm:$0xff]
      %v784 = vld [vmem:[%s2 + $0x9c8] sm:$0xff]
      %v785 = vld [vmem:[%s2 + $0x9d0] sm:$0xff]
      %v786 = vld [vmem:[%s2 + $0x9d8] sm:$0xff]
      %v787 = vld [vmem:[%s2 + $0x9e0] sm:$0xff]
      %v788 = vld [vmem:[%s2 + $0x9e8] sm:$0xff]
      %v789 = vld [vmem:[%s2 + $0x9f0] sm:$0xff]
      %v790 = vld [vmem:[%s2 + $0x9f8] sm:$0xff]
      %v791 = vld [vmem:[%s2 + $0xa00] sm:$0xff]
      %v792 = vld [vmem:[%s2 + $0xa08] sm:$0xff]
      %v793 = vld [vmem:[%s2 + $0xa10] sm:$0xff]
      %v794 = vld [vmem:[%s2 + $0xa18] sm:$0xff]
      %v795 = vld [vmem:[%s2 + $0xa20] sm:$0xff]
      %v796 = vld [vmem:[%s2 + $0xa28] sm:$0xff]
      %v797 = vld [vmem:[%s2 + $0xa30] sm:$0xff]
      %v798 = vld [vmem:[%s2 + $0xa38] sm:$0xff]
      %v799 = vld [vmem:[%s2 + $0xa40] sm:$0xff]
      %v800 = vld [vmem:[%s2 + $0xa48] sm:$0xff]
      %v801 = vld [vmem:[%s2 + $0xa50] sm:$0xff]
      %v802 = vld [vmem:[%s2 + $0xa58] sm:$0xff]
      %v803 = vld [vmem:[%s2 + $0xa60] sm:$0xff]
      %v804 = vld [vmem:[%s2 + $0xa68] sm:$0xff]
      %v805 = vld [vmem:[%s2 + $0xa70] sm:$0xff]
      %v806 = vld [vmem:[%s2 + $0xa78] sm:$0xff]
      %v807 = vld [vmem:[%s2 + $0xa80] sm:$0xff]
      %v808 = vld [vmem:[%s2 + $0xa88] sm:$0xff]
      %v809 = vld [vmem:[%s2 + $0xa90] sm:$0xff]
      %v810 = vld [vmem:[%s2 + $0xa98] sm:$0xff]
      %v811 = vld [vmem:[%s2 + $0xaa0] sm:$0xff]
      %v812 = vld [vmem:[%s2 + $0xaa8] sm:$0xff]
      %v813 = vld [vmem:[%s2 + $0xab0] sm:$0xff]
      %v814 = vld [vmem:[%s2 + $0xab8] sm:$0xff]
      %v815 = vld [vmem:[%s2 + $0xac0] sm:$0xff]
      %v816 = vld [vmem:[%s2 + $0xac8] sm:$0xff]
      %v817 = vld [vmem:[%s2 + $0xad0] sm:$0xff]
      %v818 = vld [vmem:[%s2 + $0xad8] sm:$0xff]
      %v819 = vld [vmem:[%s2 + $0xae0] sm:$0xff]
      %v820 = vld [vmem:[%s2 + $0xae8] sm:$0xff]
      %v821 = vld [vmem:[%s2 + $0xaf0] sm:$0xff]
      %v822 = vld [vmem:[%s2 + $0xaf8] sm:$0xff]
      %v823 = vld [vmem:[%s2 + $0xb00] sm:$0xff]
      %v824 = vld [vmem:[%s2 + $0xb08] sm:$0xff]
      %v825 = vld [vmem:[%s2 + $0xb10] sm:$0xff]
      %v826 = vld [vmem:[%s2 + $0xb18] sm:$0xff]
      %v827 = vld [vmem:[%s2 + $0xb20] sm:$0xff]
      %v828 = vld [vmem:[%s2 + $0xb28] sm:$0xff]
      %v829 = vld [vmem:[%s2 + $0xb30] sm:$0xff]
      %v830 = vld [vmem:[%s2 + $0xb38] sm:$0xff]
      %v831 = vld [vmem:[%s2 + $0xb40] sm:$0xff]
      %v832 = vld [vmem:[%s2 + $0xb48] sm:$0xff]
      %v833 = vld [vmem:[%s2 + $0xb50] sm:$0xff]
      %v834 = vld [vmem:[%s2 + $0xb58] sm:$0xff]
      %v835 = vld [vmem:[%s2 + $0xb60] sm:$0xff]
      %v836 = vld [vmem:[%s2 + $0xb68] sm:$0xff]
      %v837 = vld [vmem:[%s2 + $0xb70] sm:$0xff]
      %v838 = vld [vmem:[%s2 + $0xb78] sm:$0xff]
      %v839 = vld [vmem:[%s2 + $0xb80] sm:$0xff]
      %v840 = vld [vmem:[%s2 + $0xb88] sm:$0xff]
      %v841 = vld [vmem:[%s2 + $0xb90] sm:$0xff]
      %v842 = vld [vmem:[%s2 + $0xb98] sm:$0xff]
      %v843 = vld [vmem:[%s2 + $0xba0] sm:$0xff]
      %v844 = vld [vmem:[%s2 + $0xba8] sm:$0xff]
      %v845 = vld [vmem:[%s2 + $0xbb0] sm:$0xff]
      %v846 = vld [vmem:[%s2 + $0xbb8] sm:$0xff]
      %v847 = vld [vmem:[%s2 + $0xbc0] sm:$0xff]
      %v848 = vld [vmem:[%s2 + $0xbc8] sm:$0xff]
      %v849 = vld [vmem:[%s2 + $0xbd0] sm:$0xff]
      %v850 = vld [vmem:[%s2 + $0xbd8] sm:$0xff]
      %v851 = vld [vmem:[%s2 + $0xbe0] sm:$0xff]
      %v852 = vld [vmem:[%s2 + $0xbe8] sm:$0xff]
      %v853 = vld [vmem:[%s2 + $0xbf0] sm:$0xff]
      %v854 = vld [vmem:[%s2 + $0xbf8] sm:$0xff]
      %v1239 = vunpack.c.l.b16 %v471
      %v1240 = vunpack.c.h.b16 %v471
      %v1241 = vunpack.c.l.b16 %v472
      %v1242 = vunpack.c.h.b16 %v472
      %v1243 = vunpack.c.l.b16 %v473
      %v1244 = vunpack.c.h.b16 %v473
      %v1245 = vunpack.c.l.b16 %v474
      %v1246 = vunpack.c.h.b16 %v474
      %v1247 = vunpack.c.l.b16 %v475
      %v1248 = vunpack.c.h.b16 %v475
      %v1249 = vunpack.c.l.b16 %v476
      %v1250 = vunpack.c.h.b16 %v476
      %v1251 = vunpack.c.l.b16 %v477
      %v1252 = vunpack.c.h.b16 %v477
      %v1253 = vunpack.c.l.b16 %v478
      %v1254 = vunpack.c.h.b16 %v478
      %v1255 = vunpack.c.l.b16 %v479
      %v1256 = vunpack.c.h.b16 %v479
      %v1257 = vunpack.c.l.b16 %v480
      %v1258 = vunpack.c.h.b16 %v480
      %v1259 = vunpack.c.l.b16 %v481
      %v1260 = vunpack.c.h.b16 %v481
      %v1261 = vunpack.c.l.b16 %v482
      %v1262 = vunpack.c.h.b16 %v482
      %v1263 = vunpack.c.l.b16 %v483
      %v1264 = vunpack.c.h.b16 %v483
      %v1265 = vunpack.c.l.b16 %v484
      %v1266 = vunpack.c.h.b16 %v484
      %v1267 = vunpack.c.l.b16 %v485
      %v1268 = vunpack.c.h.b16 %v485
      %v1269 = vunpack.c.l.b16 %v486
      %v1270 = vunpack.c.h.b16 %v486
      %v1271 = vunpack.c.l.b16 %v487
      %v1272 = vunpack.c.h.b16 %v487
      %v1273 = vunpack.c.l.b16 %v488
      %v1274 = vunpack.c.h.b16 %v488
      %v1275 = vunpack.c.l.b16 %v489
      %v1276 = vunpack.c.h.b16 %v489
      %v1277 = vunpack.c.l.b16 %v490
      %v1278 = vunpack.c.h.b16 %v490
      %v1279 = vunpack.c.l.b16 %v491
      %v1280 = vunpack.c.h.b16 %v491
      %v1281 = vunpack.c.l.b16 %v492
      %v1282 = vunpack.c.h.b16 %v492
      %v1283 = vunpack.c.l.b16 %v493
      %v1284 = vunpack.c.h.b16 %v493
      %v1285 = vunpack.c.l.b16 %v494
      %v1286 = vunpack.c.h.b16 %v494
      %v1287 = vunpack.c.l.b16 %v495
      %v1288 = vunpack.c.h.b16 %v495
      %v1289 = vunpack.c.l.b16 %v496
      %v1290 = vunpack.c.h.b16 %v496
      %v1291 = vunpack.c.l.b16 %v497
      %v1292 = vunpack.c.h.b16 %v497
      %v1293 = vunpack.c.l.b16 %v498
      %v1294 = vunpack.c.h.b16 %v498
      %v1295 = vunpack.c.l.b16 %v499
      %v1296 = vunpack.c.h.b16 %v499
      %v1297 = vunpack.c.l.b16 %v500
      %v1298 = vunpack.c.h.b16 %v500
      %v1299 = vunpack.c.l.b16 %v501
      %v1300 = vunpack.c.h.b16 %v501
      %v1301 = vunpack.c.l.b16 %v502
      %v1302 = vunpack.c.h.b16 %v502
      %v1303 = vunpack.c.l.b16 %v503
      %v1304 = vunpack.c.h.b16 %v503
      %v1305 = vunpack.c.l.b16 %v504
      %v1306 = vunpack.c.h.b16 %v504
      %v1307 = vunpack.c.l.b16 %v505
      %v1308 = vunpack.c.h.b16 %v505
      %v1309 = vunpack.c.l.b16 %v506
      %v1310 = vunpack.c.h.b16 %v506
      %v1311 = vunpack.c.l.b16 %v507
      %v1312 = vunpack.c.h.b16 %v507
      %v1313 = vunpack.c.l.b16 %v508
      %v1314 = vunpack.c.h.b16 %v508
      %v1315 = vunpack.c.l.b16 %v509
      %v1316 = vunpack.c.h.b16 %v509
      %v1317 = vunpack.c.l.b16 %v510
      %v1318 = vunpack.c.h.b16 %v510
      %v1319 = vunpack.c.l.b16 %v511
      %v1320 = vunpack.c.h.b16 %v511
      %v1321 = vunpack.c.l.b16 %v512
      %v1322 = vunpack.c.h.b16 %v512
      %v1323 = vunpack.c.l.b16 %v513
      %v1324 = vunpack.c.h.b16 %v513
      %v1325 = vunpack.c.l.b16 %v514
      %v1326 = vunpack.c.h.b16 %v514
      %v1327 = vunpack.c.l.b16 %v515
      %v1328 = vunpack.c.h.b16 %v515
      %v1329 = vunpack.c.l.b16 %v516
      %v1330 = vunpack.c.h.b16 %v516
      %v1331 = vunpack.c.l.b16 %v517
      %v1332 = vunpack.c.h.b16 %v517
      %v1333 = vunpack.c.l.b16 %v518
      %v1334 = vunpack.c.h.b16 %v518
      %v1335 = vunpack.c.l.b16 %v519
      %v1336 = vunpack.c.h.b16 %v519
      %v1337 = vunpack.c.l.b16 %v520
      %v1338 = vunpack.c.h.b16 %v520
      %v1339 = vunpack.c.l.b16 %v521
      %v1340 = vunpack.c.h.b16 %v521
      %v1341 = vunpack.c.l.b16 %v522
      %v1342 = vunpack.c.h.b16 %v522
      %v1343 = vunpack.c.l.b16 %v523
      %v1344 = vunpack.c.h.b16 %v523
      %v1345 = vunpack.c.l.b16 %v524
      %v1346 = vunpack.c.h.b16 %v524
      %v1347 = vunpack.c.l.b16 %v525
      %v1348 = vunpack.c.h.b16 %v525
      %v1349 = vunpack.c.l.b16 %v526
      %v1350 = vunpack.c.h.b16 %v526
      %v1351 = vunpack.c.l.b16 %v527
      %v1352 = vunpack.c.h.b16 %v527
      %v1353 = vunpack.c.l.b16 %v528
      %v1354 = vunpack.c.h.b16 %v528
      %v1355 = vunpack.c.l.b16 %v529
      %v1356 = vunpack.c.h.b16 %v529
      %v1357 = vunpack.c.l.b16 %v530
      %v1358 = vunpack.c.h.b16 %v530
      %v1359 = vunpack.c.l.b16 %v531
      %v1360 = vunpack.c.h.b16 %v531
      %v1361 = vunpack.c.l.b16 %v532
      %v1362 = vunpack.c.h.b16 %v532
      %v1363 = vunpack.c.l.b16 %v533
      %v1364 = vunpack.c.h.b16 %v533
      %v1365 = vunpack.c.l.b16 %v534
      %v1366 = vunpack.c.h.b16 %v534
      %v1367 = vunpack.c.l.b16 %v535
      %v1368 = vunpack.c.h.b16 %v535
      %v1369 = vunpack.c.l.b16 %v536
      %v1370 = vunpack.c.h.b16 %v536
      %v1371 = vunpack.c.l.b16 %v537
      %v1372 = vunpack.c.h.b16 %v537
      %v1373 = vunpack.c.l.b16 %v538
      %v1374 = vunpack.c.h.b16 %v538
      %v1375 = vunpack.c.l.b16 %v539
      %v1376 = vunpack.c.h.b16 %v539
      %v1377 = vunpack.c.l.b16 %v540
      %v1378 = vunpack.c.h.b16 %v540
      %v1379 = vunpack.c.l.b16 %v541
      %v1380 = vunpack.c.h.b16 %v541
      %v1381 = vunpack.c.l.b16 %v542
      %v1382 = vunpack.c.h.b16 %v542
      %v1383 = vunpack.c.l.b16 %v543
      %v1384 = vunpack.c.h.b16 %v543
      %v1385 = vunpack.c.l.b16 %v544
      %v1386 = vunpack.c.h.b16 %v544
      %v1387 = vunpack.c.l.b16 %v545
      %v1388 = vunpack.c.h.b16 %v545
      %v1389 = vunpack.c.l.b16 %v546
      %v1390 = vunpack.c.h.b16 %v546
      %v1391 = vunpack.c.l.b16 %v547
      %v1392 = vunpack.c.h.b16 %v547
      %v1393 = vunpack.c.l.b16 %v548
      %v1394 = vunpack.c.h.b16 %v548
      %v1395 = vunpack.c.l.b16 %v549
      %v1396 = vunpack.c.h.b16 %v549
      %v1397 = vunpack.c.l.b16 %v550
      %v1398 = vunpack.c.h.b16 %v550
      %v1399 = vunpack.c.l.b16 %v551
      %v1400 = vunpack.c.h.b16 %v551
      %v1401 = vunpack.c.l.b16 %v552
      %v1402 = vunpack.c.h.b16 %v552
      %v1403 = vunpack.c.l.b16 %v553
      %v1404 = vunpack.c.h.b16 %v553
      %v1405 = vunpack.c.l.b16 %v554
      %v1406 = vunpack.c.h.b16 %v554
      %v1407 = vunpack.c.l.b16 %v555
      %v1408 = vunpack.c.h.b16 %v555
      %v1409 = vunpack.c.l.b16 %v556
      %v1410 = vunpack.c.h.b16 %v556
      %v1411 = vunpack.c.l.b16 %v557
      %v1412 = vunpack.c.h.b16 %v557
      %v1413 = vunpack.c.l.b16 %v558
      %v1414 = vunpack.c.h.b16 %v558
      %v1415 = vunpack.c.l.b16 %v559
      %v1416 = vunpack.c.h.b16 %v559
      %v1417 = vunpack.c.l.b16 %v560
      %v1418 = vunpack.c.h.b16 %v560
      %v1419 = vunpack.c.l.b16 %v561
      %v1420 = vunpack.c.h.b16 %v561
      %v1421 = vunpack.c.l.b16 %v562
      %v1422 = vunpack.c.h.b16 %v562
      %v1423 = vunpack.c.l.b16 %v563
      %v1424 = vunpack.c.h.b16 %v563
      %v1425 = vunpack.c.l.b16 %v564
      %v1426 = vunpack.c.h.b16 %v564
      %v1427 = vunpack.c.l.b16 %v565
      %v1428 = vunpack.c.h.b16 %v565
      %v1429 = vunpack.c.l.b16 %v566
      %v1430 = vunpack.c.h.b16 %v566
      %v1431 = vunpack.c.l.b16 %v567
      %v1432 = vunpack.c.h.b16 %v567
      %v1433 = vunpack.c.l.b16 %v568
      %v1434 = vunpack.c.h.b16 %v568
      %v1435 = vunpack.c.l.b16 %v569
      %v1436 = vunpack.c.h.b16 %v569
      %v1437 = vunpack.c.l.b16 %v570
      %v1438 = vunpack.c.h.b16 %v570
      %v1439 = vunpack.c.l.b16 %v571
      %v1440 = vunpack.c.h.b16 %v571
      %v1441 = vunpack.c.l.b16 %v572
      %v1442 = vunpack.c.h.b16 %v572
      %v1443 = vunpack.c.l.b16 %v573
      %v1444 = vunpack.c.h.b16 %v573
      %v1445 = vunpack.c.l.b16 %v574
      %v1446 = vunpack.c.h.b16 %v574
      %v1447 = vunpack.c.l.b16 %v575
      %v1448 = vunpack.c.h.b16 %v575
      %v1449 = vunpack.c.l.b16 %v576
      %v1450 = vunpack.c.h.b16 %v576
      %v1451 = vunpack.c.l.b16 %v577
      %v1452 = vunpack.c.h.b16 %v577
      %v1453 = vunpack.c.l.b16 %v578
      %v1454 = vunpack.c.h.b16 %v578
      %v1455 = vunpack.c.l.b16 %v579
      %v1456 = vunpack.c.h.b16 %v579
      %v1457 = vunpack.c.l.b16 %v580
      %v1458 = vunpack.c.h.b16 %v580
      %v1459 = vunpack.c.l.b16 %v581
      %v1460 = vunpack.c.h.b16 %v581
      %v1461 = vunpack.c.l.b16 %v582
      %v1462 = vunpack.c.h.b16 %v582
      %v1463 = vunpack.c.l.b16 %v583
      %v1464 = vunpack.c.h.b16 %v583
      %v1465 = vunpack.c.l.b16 %v584
      %v1466 = vunpack.c.h.b16 %v584
      %v1467 = vunpack.c.l.b16 %v585
      %v1468 = vunpack.c.h.b16 %v585
      %v1469 = vunpack.c.l.b16 %v586
      %v1470 = vunpack.c.h.b16 %v586
      %v1471 = vunpack.c.l.b16 %v587
      %v1472 = vunpack.c.h.b16 %v587
      %v1473 = vunpack.c.l.b16 %v588
      %v1474 = vunpack.c.h.b16 %v588
      %v1475 = vunpack.c.l.b16 %v589
      %v1476 = vunpack.c.h.b16 %v589
      %v1477 = vunpack.c.l.b16 %v590
      %v1478 = vunpack.c.h.b16 %v590
      %v1479 = vunpack.c.l.b16 %v591
      %v1480 = vunpack.c.h.b16 %v591
      %v1481 = vunpack.c.l.b16 %v592
      %v1482 = vunpack.c.h.b16 %v592
      %v1483 = vunpack.c.l.b16 %v593
      %v1484 = vunpack.c.h.b16 %v593
      %v1485 = vunpack.c.l.b16 %v594
      %v1486 = vunpack.c.h.b16 %v594
      %v1487 = vunpack.c.l.b16 %v595
      %v1488 = vunpack.c.h.b16 %v595
      %v1489 = vunpack.c.l.b16 %v596
      %v1490 = vunpack.c.h.b16 %v596
      %v1491 = vunpack.c.l.b16 %v597
      %v1492 = vunpack.c.h.b16 %v597
      %v1493 = vunpack.c.l.b16 %v598
      %v1494 = vunpack.c.h.b16 %v598
      %v1495 = vunpack.c.l.b16 %v599
      %v1496 = vunpack.c.h.b16 %v599
      %v1497 = vunpack.c.l.b16 %v600
      %v1498 = vunpack.c.h.b16 %v600
      %v1499 = vunpack.c.l.b16 %v601
      %v1500 = vunpack.c.h.b16 %v601
      %v1501 = vunpack.c.l.b16 %v602
      %v1502 = vunpack.c.h.b16 %v602
      %v1503 = vunpack.c.l.b16 %v603
      %v1504 = vunpack.c.h.b16 %v603
      %v1505 = vunpack.c.l.b16 %v604
      %v1506 = vunpack.c.h.b16 %v604
      %v1507 = vunpack.c.l.b16 %v605
      %v1508 = vunpack.c.h.b16 %v605
      %v1509 = vunpack.c.l.b16 %v606
      %v1510 = vunpack.c.h.b16 %v606
      %v1511 = vunpack.c.l.b16 %v607
      %v1512 = vunpack.c.h.b16 %v607
      %v1513 = vunpack.c.l.b16 %v608
      %v1514 = vunpack.c.h.b16 %v608
      %v1515 = vunpack.c.l.b16 %v609
      %v1516 = vunpack.c.h.b16 %v609
      %v1517 = vunpack.c.l.b16 %v610
      %v1518 = vunpack.c.h.b16 %v610
      %v1519 = vunpack.c.l.b16 %v611
      %v1520 = vunpack.c.h.b16 %v611
      %v1521 = vunpack.c.l.b16 %v612
      %v1522 = vunpack.c.h.b16 %v612
      %v1523 = vunpack.c.l.b16 %v613
      %v1524 = vunpack.c.h.b16 %v613
      %v1525 = vunpack.c.l.b16 %v614
      %v1526 = vunpack.c.h.b16 %v614
      %v1527 = vunpack.c.l.b16 %v615
      %v1528 = vunpack.c.h.b16 %v615
      %v1529 = vunpack.c.l.b16 %v616
      %v1530 = vunpack.c.h.b16 %v616
      %v1531 = vunpack.c.l.b16 %v617
      %v1532 = vunpack.c.h.b16 %v617
      %v1533 = vunpack.c.l.b16 %v618
      %v1534 = vunpack.c.h.b16 %v618
      %v1535 = vunpack.c.l.b16 %v619
      %v1536 = vunpack.c.h.b16 %v619
      %v1537 = vunpack.c.l.b16 %v620
      %v1538 = vunpack.c.h.b16 %v620
      %v1539 = vunpack.c.l.b16 %v621
      %v1540 = vunpack.c.h.b16 %v621
      %v1541 = vunpack.c.l.b16 %v622
      %v1542 = vunpack.c.h.b16 %v622
      %v1543 = vunpack.c.l.b16 %v623
      %v1544 = vunpack.c.h.b16 %v623
      %v1545 = vunpack.c.l.b16 %v624
      %v1546 = vunpack.c.h.b16 %v624
      %v1547 = vunpack.c.l.b16 %v625
      %v1548 = vunpack.c.h.b16 %v625
      %v1549 = vunpack.c.l.b16 %v626
      %v1550 = vunpack.c.h.b16 %v626
      %v1551 = vunpack.c.l.b16 %v627
      %v1552 = vunpack.c.h.b16 %v627
      %v1553 = vunpack.c.l.b16 %v628
      %v1554 = vunpack.c.h.b16 %v628
      %v1555 = vunpack.c.l.b16 %v629
      %v1556 = vunpack.c.h.b16 %v629
      %v1557 = vunpack.c.l.b16 %v630
      %v1558 = vunpack.c.h.b16 %v630
      %v1559 = vunpack.c.l.b16 %v631
      %v1560 = vunpack.c.h.b16 %v631
      %v1561 = vunpack.c.l.b16 %v632
      %v1562 = vunpack.c.h.b16 %v632
      %v1563 = vunpack.c.l.b16 %v633
      %v1564 = vunpack.c.h.b16 %v633
      %v1565 = vunpack.c.l.b16 %v634
      %v1566 = vunpack.c.h.b16 %v634
      %v1567 = vunpack.c.l.b16 %v635
      %v1568 = vunpack.c.h.b16 %v635
      %v1569 = vunpack.c.l.b16 %v636
      %v1570 = vunpack.c.h.b16 %v636
      %v1571 = vunpack.c.l.b16 %v637
      %v1572 = vunpack.c.h.b16 %v637
      %v1573 = vunpack.c.l.b16 %v638
      %v1574 = vunpack.c.h.b16 %v638
      %v1575 = vunpack.c.l.b16 %v639
      %v1576 = vunpack.c.h.b16 %v639
      %v1577 = vunpack.c.l.b16 %v640
      %v1578 = vunpack.c.h.b16 %v640
      %v1579 = vunpack.c.l.b16 %v641
      %v1580 = vunpack.c.h.b16 %v641
      %v1581 = vunpack.c.l.b16 %v642
      %v1582 = vunpack.c.h.b16 %v642
      %v1583 = vunpack.c.l.b16 %v643
      %v1584 = vunpack.c.h.b16 %v643
      %v1585 = vunpack.c.l.b16 %v644
      %v1586 = vunpack.c.h.b16 %v644
      %v1587 = vunpack.c.l.b16 %v645
      %v1588 = vunpack.c.h.b16 %v645
      %v1589 = vunpack.c.l.b16 %v646
      %v1590 = vunpack.c.h.b16 %v646
      %v1591 = vunpack.c.l.b16 %v647
      %v1592 = vunpack.c.h.b16 %v647
      %v1593 = vunpack.c.l.b16 %v648
      %v1594 = vunpack.c.h.b16 %v648
      %v1595 = vunpack.c.l.b16 %v649
      %v1596 = vunpack.c.h.b16 %v649
      %v1597 = vunpack.c.l.b16 %v650
      %v1598 = vunpack.c.h.b16 %v650
      %v1599 = vunpack.c.l.b16 %v651
      %v1600 = vunpack.c.h.b16 %v651
      %v1601 = vunpack.c.l.b16 %v652
      %v1602 = vunpack.c.h.b16 %v652
      %v1603 = vunpack.c.l.b16 %v653
      %v1604 = vunpack.c.h.b16 %v653
      %v1605 = vunpack.c.l.b16 %v654
      %v1606 = vunpack.c.h.b16 %v654
      %v1607 = vunpack.c.l.b16 %v655
      %v1608 = vunpack.c.h.b16 %v655
      %v1609 = vunpack.c.l.b16 %v656
      %v1610 = vunpack.c.h.b16 %v656
      %v1611 = vunpack.c.l.b16 %v657
      %v1612 = vunpack.c.h.b16 %v657
      %v1613 = vunpack.c.l.b16 %v658
      %v1614 = vunpack.c.h.b16 %v658
      %v1615 = vunpack.c.l.b16 %v659
      %v1616 = vunpack.c.h.b16 %v659
      %v1617 = vunpack.c.l.b16 %v660
      %v1618 = vunpack.c.h.b16 %v660
      %v1619 = vunpack.c.l.b16 %v661
      %v1620 = vunpack.c.h.b16 %v661
      %v1621 = vunpack.c.l.b16 %v662
      %v1622 = vunpack.c.h.b16 %v662
      %v1623 = vunpack.c.l.b16 %v663
      %v1624 = vunpack.c.h.b16 %v663
      %v1625 = vunpack.c.l.b16 %v664
      %v1626 = vunpack.c.h.b16 %v664
      %v1627 = vunpack.c.l.b16 %v665
      %v1628 = vunpack.c.h.b16 %v665
      %v1629 = vunpack.c.l.b16 %v666
      %v1630 = vunpack.c.h.b16 %v666
      %v1631 = vunpack.c.l.b16 %v667
      %v1632 = vunpack.c.h.b16 %v667
      %v1633 = vunpack.c.l.b16 %v668
      %v1634 = vunpack.c.h.b16 %v668
      %v1635 = vunpack.c.l.b16 %v669
      %v1636 = vunpack.c.h.b16 %v669
      %v1637 = vunpack.c.l.b16 %v670
      %v1638 = vunpack.c.h.b16 %v670
      %v1639 = vunpack.c.l.b16 %v671
      %v1640 = vunpack.c.h.b16 %v671
      %v1641 = vunpack.c.l.b16 %v672
      %v1642 = vunpack.c.h.b16 %v672
      %v1643 = vunpack.c.l.b16 %v673
      %v1644 = vunpack.c.h.b16 %v673
      %v1645 = vunpack.c.l.b16 %v674
      %v1646 = vunpack.c.h.b16 %v674
      %v1647 = vunpack.c.l.b16 %v675
      %v1648 = vunpack.c.h.b16 %v675
      %v1649 = vunpack.c.l.b16 %v676
      %v1650 = vunpack.c.h.b16 %v676
      %v1651 = vunpack.c.l.b16 %v677
      %v1652 = vunpack.c.h.b16 %v677
      %v1653 = vunpack.c.l.b16 %v678
      %v1654 = vunpack.c.h.b16 %v678
      %v1655 = vunpack.c.l.b16 %v679
      %v1656 = vunpack.c.h.b16 %v679
      %v1657 = vunpack.c.l.b16 %v680
      %v1658 = vunpack.c.h.b16 %v680
      %v1659 = vunpack.c.l.b16 %v681
      %v1660 = vunpack.c.h.b16 %v681
      %v1661 = vunpack.c.l.b16 %v682
      %v1662 = vunpack.c.h.b16 %v682
      %v1663 = vunpack.c.l.b16 %v683
      %v1664 = vunpack.c.h.b16 %v683
      %v1665 = vunpack.c.l.b16 %v684
      %v1666 = vunpack.c.h.b16 %v684
      %v1667 = vunpack.c.l.b16 %v685
      %v1668 = vunpack.c.h.b16 %v685
      %v1669 = vunpack.c.l.b16 %v686
      %v1670 = vunpack.c.h.b16 %v686
      %v1671 = vunpack.c.l.b16 %v687
      %v1672 = vunpack.c.h.b16 %v687
      %v1673 = vunpack.c.l.b16 %v688
      %v1674 = vunpack.c.h.b16 %v688
      %v1675 = vunpack.c.l.b16 %v689
      %v1676 = vunpack.c.h.b16 %v689
      %v1677 = vunpack.c.l.b16 %v690
      %v1678 = vunpack.c.h.b16 %v690
      %v1679 = vunpack.c.l.b16 %v691
      %v1680 = vunpack.c.h.b16 %v691
      %v1681 = vunpack.c.l.b16 %v692
      %v1682 = vunpack.c.h.b16 %v692
      %v1683 = vunpack.c.l.b16 %v693
      %v1684 = vunpack.c.h.b16 %v693
      %v1685 = vunpack.c.l.b16 %v694
      %v1686 = vunpack.c.h.b16 %v694
      %v1687 = vunpack.c.l.b16 %v695
      %v1688 = vunpack.c.h.b16 %v695
      %v1689 = vunpack.c.l.b16 %v696
      %v1690 = vunpack.c.h.b16 %v696
      %v1691 = vunpack.c.l.b16 %v697
      %v1692 = vunpack.c.h.b16 %v697
      %v1693 = vunpack.c.l.b16 %v698
      %v1694 = vunpack.c.h.b16 %v698
      %v1695 = vunpack.c.l.b16 %v699
      %v1696 = vunpack.c.h.b16 %v699
      %v1697 = vunpack.c.l.b16 %v700
      %v1698 = vunpack.c.h.b16 %v700
      %v1699 = vunpack.c.l.b16 %v701
      %v1700 = vunpack.c.h.b16 %v701
      %v1701 = vunpack.c.l.b16 %v702
      %v1702 = vunpack.c.h.b16 %v702
      %v1703 = vunpack.c.l.b16 %v703
      %v1704 = vunpack.c.h.b16 %v703
      %v1705 = vunpack.c.l.b16 %v704
      %v1706 = vunpack.c.h.b16 %v704
      %v1707 = vunpack.c.l.b16 %v705
      %v1708 = vunpack.c.h.b16 %v705
      %v1709 = vunpack.c.l.b16 %v706
      %v1710 = vunpack.c.h.b16 %v706
      %v1711 = vunpack.c.l.b16 %v707
      %v1712 = vunpack.c.h.b16 %v707
      %v1713 = vunpack.c.l.b16 %v708
      %v1714 = vunpack.c.h.b16 %v708
      %v1715 = vunpack.c.l.b16 %v709
      %v1716 = vunpack.c.h.b16 %v709
      %v1717 = vunpack.c.l.b16 %v710
      %v1718 = vunpack.c.h.b16 %v710
      %v1719 = vunpack.c.l.b16 %v711
      %v1720 = vunpack.c.h.b16 %v711
      %v1721 = vunpack.c.l.b16 %v712
      %v1722 = vunpack.c.h.b16 %v712
      %v1723 = vunpack.c.l.b16 %v713
      %v1724 = vunpack.c.h.b16 %v713
      %v1725 = vunpack.c.l.b16 %v714
      %v1726 = vunpack.c.h.b16 %v714
      %v1727 = vunpack.c.l.b16 %v715
      %v1728 = vunpack.c.h.b16 %v715
      %v1729 = vunpack.c.l.b16 %v716
      %v1730 = vunpack.c.h.b16 %v716
      %v1731 = vunpack.c.l.b16 %v717
      %v1732 = vunpack.c.h.b16 %v717
      %v1733 = vunpack.c.l.b16 %v718
      %v1734 = vunpack.c.h.b16 %v718
      %v1735 = vunpack.c.l.b16 %v719
      %v1736 = vunpack.c.h.b16 %v719
      %v1737 = vunpack.c.l.b16 %v720
      %v1738 = vunpack.c.h.b16 %v720
      %v1739 = vunpack.c.l.b16 %v721
      %v1740 = vunpack.c.h.b16 %v721
      %v1741 = vunpack.c.l.b16 %v722
      %v1742 = vunpack.c.h.b16 %v722
      %v1743 = vunpack.c.l.b16 %v723
      %v1744 = vunpack.c.h.b16 %v723
      %v1745 = vunpack.c.l.b16 %v724
      %v1746 = vunpack.c.h.b16 %v724
      %v1747 = vunpack.c.l.b16 %v725
      %v1748 = vunpack.c.h.b16 %v725
      %v1749 = vunpack.c.l.b16 %v726
      %v1750 = vunpack.c.h.b16 %v726
      %v1751 = vunpack.c.l.b16 %v727
      %v1752 = vunpack.c.h.b16 %v727
      %v1753 = vunpack.c.l.b16 %v728
      %v1754 = vunpack.c.h.b16 %v728
      %v1755 = vunpack.c.l.b16 %v729
      %v1756 = vunpack.c.h.b16 %v729
      %v1757 = vunpack.c.l.b16 %v730
      %v1758 = vunpack.c.h.b16 %v730
      %v1759 = vunpack.c.l.b16 %v731
      %v1760 = vunpack.c.h.b16 %v731
      %v1761 = vunpack.c.l.b16 %v732
      %v1762 = vunpack.c.h.b16 %v732
      %v1763 = vunpack.c.l.b16 %v733
      %v1764 = vunpack.c.h.b16 %v733
      %v1765 = vunpack.c.l.b16 %v734
      %v1766 = vunpack.c.h.b16 %v734
      %v1767 = vunpack.c.l.b16 %v735
      %v1768 = vunpack.c.h.b16 %v735
      %v1769 = vunpack.c.l.b16 %v736
      %v1770 = vunpack.c.h.b16 %v736
      %v1771 = vunpack.c.l.b16 %v737
      %v1772 = vunpack.c.h.b16 %v737
      %v1773 = vunpack.c.l.b16 %v738
      %v1774 = vunpack.c.h.b16 %v738
      %v1775 = vunpack.c.l.b16 %v739
      %v1776 = vunpack.c.h.b16 %v739
      %v1777 = vunpack.c.l.b16 %v740
      %v1778 = vunpack.c.h.b16 %v740
      %v1779 = vunpack.c.l.b16 %v741
      %v1780 = vunpack.c.h.b16 %v741
      %v1781 = vunpack.c.l.b16 %v742
      %v1782 = vunpack.c.h.b16 %v742
      %v1783 = vunpack.c.l.b16 %v743
      %v1784 = vunpack.c.h.b16 %v743
      %v1785 = vunpack.c.l.b16 %v744
      %v1786 = vunpack.c.h.b16 %v744
      %v1787 = vunpack.c.l.b16 %v745
      %v1788 = vunpack.c.h.b16 %v745
      %v1789 = vunpack.c.l.b16 %v746
      %v1790 = vunpack.c.h.b16 %v746
      %v1791 = vunpack.c.l.b16 %v747
      %v1792 = vunpack.c.h.b16 %v747
      %v1793 = vunpack.c.l.b16 %v748
      %v1794 = vunpack.c.h.b16 %v748
      %v1795 = vunpack.c.l.b16 %v749
      %v1796 = vunpack.c.h.b16 %v749
      %v1797 = vunpack.c.l.b16 %v750
      %v1798 = vunpack.c.h.b16 %v750
      %v1799 = vunpack.c.l.b16 %v751
      %v1800 = vunpack.c.h.b16 %v751
      %v1801 = vunpack.c.l.b16 %v752
      %v1802 = vunpack.c.h.b16 %v752
      %v1803 = vunpack.c.l.b16 %v753
      %v1804 = vunpack.c.h.b16 %v753
      %v1805 = vunpack.c.l.b16 %v754
      %v1806 = vunpack.c.h.b16 %v754
      %v1807 = vunpack.c.l.b16 %v755
      %v1808 = vunpack.c.h.b16 %v755
      %v1809 = vunpack.c.l.b16 %v756
      %v1810 = vunpack.c.h.b16 %v756
      %v1811 = vunpack.c.l.b16 %v757
      %v1812 = vunpack.c.h.b16 %v757
      %v1813 = vunpack.c.l.b16 %v758
      %v1814 = vunpack.c.h.b16 %v758
      %v1815 = vunpack.c.l.b16 %v759
      %v1816 = vunpack.c.h.b16 %v759
      %v1817 = vunpack.c.l.b16 %v760
      %v1818 = vunpack.c.h.b16 %v760
      %v1819 = vunpack.c.l.b16 %v761
      %v1820 = vunpack.c.h.b16 %v761
      %v1821 = vunpack.c.l.b16 %v762
      %v1822 = vunpack.c.h.b16 %v762
      %v1823 = vunpack.c.l.b16 %v763
      %v1824 = vunpack.c.h.b16 %v763
      %v1825 = vunpack.c.l.b16 %v764
      %v1826 = vunpack.c.h.b16 %v764
      %v1827 = vunpack.c.l.b16 %v765
      %v1828 = vunpack.c.h.b16 %v765
      %v1829 = vunpack.c.l.b16 %v766
      %v1830 = vunpack.c.h.b16 %v766
      %v1831 = vunpack.c.l.b16 %v767
      %v1832 = vunpack.c.h.b16 %v767
      %v1833 = vunpack.c.l.b16 %v768
      %v1834 = vunpack.c.h.b16 %v768
      %v1835 = vunpack.c.l.b16 %v769
      %v1836 = vunpack.c.h.b16 %v769
      %v1837 = vunpack.c.l.b16 %v770
      %v1838 = vunpack.c.h.b16 %v770
      %v1839 = vunpack.c.l.b16 %v771
      %v1840 = vunpack.c.h.b16 %v771
      %v1841 = vunpack.c.l.b16 %v772
      %v1842 = vunpack.c.h.b16 %v772
      %v1843 = vunpack.c.l.b16 %v773
      %v1844 = vunpack.c.h.b16 %v773
      %v1845 = vunpack.c.l.b16 %v774
      %v1846 = vunpack.c.h.b16 %v774
      %v1847 = vunpack.c.l.b16 %v775
      %v1848 = vunpack.c.h.b16 %v775
      %v1849 = vunpack.c.l.b16 %v776
      %v1850 = vunpack.c.h.b16 %v776
      %v1851 = vunpack.c.l.b16 %v777
      %v1852 = vunpack.c.h.b16 %v777
      %v1853 = vunpack.c.l.b16 %v778
      %v1854 = vunpack.c.h.b16 %v778
      %v1855 = vunpack.c.l.b16 %v779
      %v1856 = vunpack.c.h.b16 %v779
      %v1857 = vunpack.c.l.b16 %v780
      %v1858 = vunpack.c.h.b16 %v780
      %v1859 = vunpack.c.l.b16 %v781
      %v1860 = vunpack.c.h.b16 %v781
      %v1861 = vunpack.c.l.b16 %v782
      %v1862 = vunpack.c.h.b16 %v782
      %v1863 = vunpack.c.l.b16 %v783
      %v1864 = vunpack.c.h.b16 %v783
      %v1865 = vunpack.c.l.b16 %v784
      %v1866 = vunpack.c.h.b16 %v784
      %v1867 = vunpack.c.l.b16 %v785
      %v1868 = vunpack.c.h.b16 %v785
      %v1869 = vunpack.c.l.b16 %v786
      %v1870 = vunpack.c.h.b16 %v786
      %v1871 = vunpack.c.l.b16 %v787
      %v1872 = vunpack.c.h.b16 %v787
      %v1873 = vunpack.c.l.b16 %v788
      %v1874 = vunpack.c.h.b16 %v788
      %v1875 = vunpack.c.l.b16 %v789
      %v1876 = vunpack.c.h.b16 %v789
      %v1877 = vunpack.c.l.b16 %v790
      %v1878 = vunpack.c.h.b16 %v790
      %v1879 = vunpack.c.l.b16 %v791
      %v1880 = vunpack.c.h.b16 %v791
      %v1881 = vunpack.c.l.b16 %v792
      %v1882 = vunpack.c.h.b16 %v792
      %v1883 = vunpack.c.l.b16 %v793
      %v1884 = vunpack.c.h.b16 %v793
      %v1885 = vunpack.c.l.b16 %v794
      %v1886 = vunpack.c.h.b16 %v794
      %v1887 = vunpack.c.l.b16 %v795
      %v1888 = vunpack.c.h.b16 %v795
      %v1889 = vunpack.c.l.b16 %v796
      %v1890 = vunpack.c.h.b16 %v796
      %v1891 = vunpack.c.l.b16 %v797
      %v1892 = vunpack.c.h.b16 %v797
      %v1893 = vunpack.c.l.b16 %v798
      %v1894 = vunpack.c.h.b16 %v798
      %v1895 = vunpack.c.l.b16 %v799
      %v1896 = vunpack.c.h.b16 %v799
      %v1897 = vunpack.c.l.b16 %v800
      %v1898 = vunpack.c.h.b16 %v800
      %v1899 = vunpack.c.l.b16 %v801
      %v1900 = vunpack.c.h.b16 %v801
      %v1901 = vunpack.c.l.b16 %v802
      %v1902 = vunpack.c.h.b16 %v802
      %v1903 = vunpack.c.l.b16 %v803
      %v1904 = vunpack.c.h.b16 %v803
      %v1905 = vunpack.c.l.b16 %v804
      %v1906 = vunpack.c.h.b16 %v804
      %v1907 = vunpack.c.l.b16 %v805
      %v1908 = vunpack.c.h.b16 %v805
      %v1909 = vunpack.c.l.b16 %v806
      %v1910 = vunpack.c.h.b16 %v806
      %v1911 = vunpack.c.l.b16 %v807
      %v1912 = vunpack.c.h.b16 %v807
      %v1913 = vunpack.c.l.b16 %v808
      %v1914 = vunpack.c.h.b16 %v808
      %v1915 = vunpack.c.l.b16 %v809
      %v1916 = vunpack.c.h.b16 %v809
      %v1917 = vunpack.c.l.b16 %v810
      %v1918 = vunpack.c.h.b16 %v810
      %v1919 = vunpack.c.l.b16 %v811
      %v1920 = vunpack.c.h.b16 %v811
      %v1921 = vunpack.c.l.b16 %v812
      %v1922 = vunpack.c.h.b16 %v812
      %v1923 = vunpack.c.l.b16 %v813
      %v1924 = vunpack.c.h.b16 %v813
      %v1925 = vunpack.c.l.b16 %v814
      %v1926 = vunpack.c.h.b16 %v814
      %v1927 = vunpack.c.l.b16 %v815
      %v1928 = vunpack.c.h.b16 %v815
      %v1929 = vunpack.c.l.b16 %v816
      %v1930 = vunpack.c.h.b16 %v816
      %v1931 = vunpack.c.l.b16 %v817
      %v1932 = vunpack.c.h.b16 %v817
      %v1933 = vunpack.c.l.b16 %v818
      %v1934 = vunpack.c.h.b16 %v818
      %v1935 = vunpack.c.l.b16 %v819
      %v1936 = vunpack.c.h.b16 %v819
      %v1937 = vunpack.c.l.b16 %v820
      %v1938 = vunpack.c.h.b16 %v820
      %v1939 = vunpack.c.l.b16 %v821
      %v1940 = vunpack.c.h.b16 %v821
      %v1941 = vunpack.c.l.b16 %v822
      %v1942 = vunpack.c.h.b16 %v822
      %v1943 = vunpack.c.l.b16 %v823
      %v1944 = vunpack.c.h.b16 %v823
      %v1945 = vunpack.c.l.b16 %v824
      %v1946 = vunpack.c.h.b16 %v824
      %v1947 = vunpack.c.l.b16 %v825
      %v1948 = vunpack.c.h.b16 %v825
      %v1949 = vunpack.c.l.b16 %v826
      %v1950 = vunpack.c.h.b16 %v826
      %v1951 = vunpack.c.l.b16 %v827
      %v1952 = vunpack.c.h.b16 %v827
      %v1953 = vunpack.c.l.b16 %v828
      %v1954 = vunpack.c.h.b16 %v828
      %v1955 = vunpack.c.l.b16 %v829
      %v1956 = vunpack.c.h.b16 %v829
      %v1957 = vunpack.c.l.b16 %v830
      %v1958 = vunpack.c.h.b16 %v830
      %v1959 = vunpack.c.l.b16 %v831
      %v1960 = vunpack.c.h.b16 %v831
      %v1961 = vunpack.c.l.b16 %v832
      %v1962 = vunpack.c.h.b16 %v832
      %v1963 = vunpack.c.l.b16 %v833
      %v1964 = vunpack.c.h.b16 %v833
      %v1965 = vunpack.c.l.b16 %v834
      %v1966 = vunpack.c.h.b16 %v834
      %v1967 = vunpack.c.l.b16 %v835
      %v1968 = vunpack.c.h.b16 %v835
      %v1969 = vunpack.c.l.b16 %v836
      %v1970 = vunpack.c.h.b16 %v836
      %v1971 = vunpack.c.l.b16 %v837
      %v1972 = vunpack.c.h.b16 %v837
      %v1973 = vunpack.c.l.b16 %v838
      %v1974 = vunpack.c.h.b16 %v838
      %v1975 = vunpack.c.l.b16 %v839
      %v1976 = vunpack.c.h.b16 %v839
      %v1977 = vunpack.c.l.b16 %v840
      %v1978 = vunpack.c.h.b16 %v840
      %v1979 = vunpack.c.l.b16 %v841
      %v1980 = vunpack.c.h.b16 %v841
      %v1981 = vunpack.c.l.b16 %v842
      %v1982 = vunpack.c.h.b16 %v842
      %v1983 = vunpack.c.l.b16 %v843
      %v1984 = vunpack.c.h.b16 %v843
      %v1985 = vunpack.c.l.b16 %v844
      %v1986 = vunpack.c.h.b16 %v844
      %v1987 = vunpack.c.l.b16 %v845
      %v1988 = vunpack.c.h.b16 %v845
      %v1989 = vunpack.c.l.b16 %v846
      %v1990 = vunpack.c.h.b16 %v846
      %v1991 = vunpack.c.l.b16 %v847
      %v1992 = vunpack.c.h.b16 %v847
      %v1993 = vunpack.c.l.b16 %v848
      %v1994 = vunpack.c.h.b16 %v848
      %v1995 = vunpack.c.l.b16 %v849
      %v1996 = vunpack.c.h.b16 %v849
      %v1997 = vunpack.c.l.b16 %v850
      %v1998 = vunpack.c.h.b16 %v850
      %v1999 = vunpack.c.l.b16 %v851
      %v2000 = vunpack.c.h.b16 %v851
      %v2001 = vunpack.c.l.b16 %v852
      %v2002 = vunpack.c.h.b16 %v852
      %v2003 = vunpack.c.l.b16 %v853
      %v2004 = vunpack.c.h.b16 %v853
      %v2005 = vunpack.c.l.b16 %v854
      %v2006 = vunpack.c.h.b16 %v854
      %v2007 = vpack.c.b16 %v1245, %v1239
      %v2008 = vpack.c.b16 %v1246, %v1240
      %v2009 = vpack.c.b16 %v1247, %v1241
      %v2010 = vpack.c.b16 %v1248, %v1242
      %v2011 = vpack.c.b16 %v1249, %v1243
      %v2012 = vpack.c.b16 %v1250, %v1244
      %v2013 = vpack.c.b16 %v1257, %v1251
      %v2014 = vpack.c.b16 %v1258, %v1252
      %v2015 = vpack.c.b16 %v1259, %v1253
      %v2016 = vpack.c.b16 %v1260, %v1254
      %v2017 = vpack.c.b16 %v1261, %v1255
      %v2018 = vpack.c.b16 %v1262, %v1256
      %v2019 = vpack.c.b16 %v1269, %v1263
      %v2020 = vpack.c.b16 %v1270, %v1264
      %v2021 = vpack.c.b16 %v1271, %v1265
      %v2022 = vpack.c.b16 %v1272, %v1266
      %v2023 = vpack.c.b16 %v1273, %v1267
      %v2024 = vpack.c.b16 %v1274, %v1268
      %v2025 = vpack.c.b16 %v1281, %v1275
      %v2026 = vpack.c.b16 %v1282, %v1276
      %v2027 = vpack.c.b16 %v1283, %v1277
      %v2028 = vpack.c.b16 %v1284, %v1278
      %v2029 = vpack.c.b16 %v1285, %v1279
      %v2030 = vpack.c.b16 %v1286, %v1280
      %v2031 = vpack.c.b16 %v1293, %v1287
      %v2032 = vpack.c.b16 %v1294, %v1288
      %v2033 = vpack.c.b16 %v1295, %v1289
      %v2034 = vpack.c.b16 %v1296, %v1290
      %v2035 = vpack.c.b16 %v1297, %v1291
      %v2036 = vpack.c.b16 %v1298, %v1292
      %v2037 = vpack.c.b16 %v1305, %v1299
      %v2038 = vpack.c.b16 %v1306, %v1300
      %v2039 = vpack.c.b16 %v1307, %v1301
      %v2040 = vpack.c.b16 %v1308, %v1302
      %v2041 = vpack.c.b16 %v1309, %v1303
      %v2042 = vpack.c.b16 %v1310, %v1304
      %v2043 = vpack.c.b16 %v1317, %v1311
      %v2044 = vpack.c.b16 %v1318, %v1312
      %v2045 = vpack.c.b16 %v1319, %v1313
      %v2046 = vpack.c.b16 %v1320, %v1314
      %v2047 = vpack.c.b16 %v1321, %v1315
      %v2048 = vpack.c.b16 %v1322, %v1316
      %v2049 = vpack.c.b16 %v1329, %v1323
      %v2050 = vpack.c.b16 %v1330, %v1324
      %v2051 = vpack.c.b16 %v1331, %v1325
      %v2052 = vpack.c.b16 %v1332, %v1326
      %v2053 = vpack.c.b16 %v1333, %v1327
      %v2054 = vpack.c.b16 %v1334, %v1328
      %v2055 = vpack.c.b16 %v1341, %v1335
      %v2056 = vpack.c.b16 %v1342, %v1336
      %v2057 = vpack.c.b16 %v1343, %v1337
      %v2058 = vpack.c.b16 %v1344, %v1338
      %v2059 = vpack.c.b16 %v1345, %v1339
      %v2060 = vpack.c.b16 %v1346, %v1340
      %v2061 = vpack.c.b16 %v1353, %v1347
      %v2062 = vpack.c.b16 %v1354, %v1348
      %v2063 = vpack.c.b16 %v1355, %v1349
      %v2064 = vpack.c.b16 %v1356, %v1350
      %v2065 = vpack.c.b16 %v1357, %v1351
      %v2066 = vpack.c.b16 %v1358, %v1352
      %v2067 = vpack.c.b16 %v1365, %v1359
      %v2068 = vpack.c.b16 %v1366, %v1360
      %v2069 = vpack.c.b16 %v1367, %v1361
      %v2070 = vpack.c.b16 %v1368, %v1362
      %v2071 = vpack.c.b16 %v1369, %v1363
      %v2072 = vpack.c.b16 %v1370, %v1364
      %v2073 = vpack.c.b16 %v1377, %v1371
      %v2074 = vpack.c.b16 %v1378, %v1372
      %v2075 = vpack.c.b16 %v1379, %v1373
      %v2076 = vpack.c.b16 %v1380, %v1374
      %v2077 = vpack.c.b16 %v1381, %v1375
      %v2078 = vpack.c.b16 %v1382, %v1376
      %v2079 = vpack.c.b16 %v1389, %v1383
      %v2080 = vpack.c.b16 %v1390, %v1384
      %v2081 = vpack.c.b16 %v1391, %v1385
      %v2082 = vpack.c.b16 %v1392, %v1386
      %v2083 = vpack.c.b16 %v1393, %v1387
      %v2084 = vpack.c.b16 %v1394, %v1388
      %v2085 = vpack.c.b16 %v1401, %v1395
      %v2086 = vpack.c.b16 %v1402, %v1396
      %v2087 = vpack.c.b16 %v1403, %v1397
      %v2088 = vpack.c.b16 %v1404, %v1398
      %v2089 = vpack.c.b16 %v1405, %v1399
      %v2090 = vpack.c.b16 %v1406, %v1400
      %v2091 = vpack.c.b16 %v1413, %v1407
      %v2092 = vpack.c.b16 %v1414, %v1408
      %v2093 = vpack.c.b16 %v1415, %v1409
      %v2094 = vpack.c.b16 %v1416, %v1410
      %v2095 = vpack.c.b16 %v1417, %v1411
      %v2096 = vpack.c.b16 %v1418, %v1412
      %v2097 = vpack.c.b16 %v1425, %v1419
      %v2098 = vpack.c.b16 %v1426, %v1420
      %v2099 = vpack.c.b16 %v1427, %v1421
      %v2100 = vpack.c.b16 %v1428, %v1422
      %v2101 = vpack.c.b16 %v1429, %v1423
      %v2102 = vpack.c.b16 %v1430, %v1424
      %v2103 = vpack.c.b16 %v1437, %v1431
      %v2104 = vpack.c.b16 %v1438, %v1432
      %v2105 = vpack.c.b16 %v1439, %v1433
      %v2106 = vpack.c.b16 %v1440, %v1434
      %v2107 = vpack.c.b16 %v1441, %v1435
      %v2108 = vpack.c.b16 %v1442, %v1436
      %v2109 = vpack.c.b16 %v1449, %v1443
      %v2110 = vpack.c.b16 %v1450, %v1444
      %v2111 = vpack.c.b16 %v1451, %v1445
      %v2112 = vpack.c.b16 %v1452, %v1446
      %v2113 = vpack.c.b16 %v1453, %v1447
      %v2114 = vpack.c.b16 %v1454, %v1448
      %v2115 = vpack.c.b16 %v1461, %v1455
      %v2116 = vpack.c.b16 %v1462, %v1456
      %v2117 = vpack.c.b16 %v1463, %v1457
      %v2118 = vpack.c.b16 %v1464, %v1458
      %v2119 = vpack.c.b16 %v1465, %v1459
      %v2120 = vpack.c.b16 %v1466, %v1460
      %v2121 = vpack.c.b16 %v1473, %v1467
      %v2122 = vpack.c.b16 %v1474, %v1468
      %v2123 = vpack.c.b16 %v1475, %v1469
      %v2124 = vpack.c.b16 %v1476, %v1470
      %v2125 = vpack.c.b16 %v1477, %v1471
      %v2126 = vpack.c.b16 %v1478, %v1472
      %v2127 = vpack.c.b16 %v1485, %v1479
      %v2128 = vpack.c.b16 %v1486, %v1480
      %v2129 = vpack.c.b16 %v1487, %v1481
      %v2130 = vpack.c.b16 %v1488, %v1482
      %v2131 = vpack.c.b16 %v1489, %v1483
      %v2132 = vpack.c.b16 %v1490, %v1484
      %v2133 = vpack.c.b16 %v1497, %v1491
      %v2134 = vpack.c.b16 %v1498, %v1492
      %v2135 = vpack.c.b16 %v1499, %v1493
      %v2136 = vpack.c.b16 %v1500, %v1494
      %v2137 = vpack.c.b16 %v1501, %v1495
      %v2138 = vpack.c.b16 %v1502, %v1496
      %v2139 = vpack.c.b16 %v1509, %v1503
      %v2140 = vpack.c.b16 %v1510, %v1504
      %v2141 = vpack.c.b16 %v1511, %v1505
      %v2142 = vpack.c.b16 %v1512, %v1506
      %v2143 = vpack.c.b16 %v1513, %v1507
      %v2144 = vpack.c.b16 %v1514, %v1508
      %v2145 = vpack.c.b16 %v1521, %v1515
      %v2146 = vpack.c.b16 %v1522, %v1516
      %v2147 = vpack.c.b16 %v1523, %v1517
      %v2148 = vpack.c.b16 %v1524, %v1518
      %v2149 = vpack.c.b16 %v1525, %v1519
      %v2150 = vpack.c.b16 %v1526, %v1520
      %v2151 = vpack.c.b16 %v1533, %v1527
      %v2152 = vpack.c.b16 %v1534, %v1528
      %v2153 = vpack.c.b16 %v1535, %v1529
      %v2154 = vpack.c.b16 %v1536, %v1530
      %v2155 = vpack.c.b16 %v1537, %v1531
      %v2156 = vpack.c.b16 %v1538, %v1532
      %v2157 = vpack.c.b16 %v1545, %v1539
      %v2158 = vpack.c.b16 %v1546, %v1540
      %v2159 = vpack.c.b16 %v1547, %v1541
      %v2160 = vpack.c.b16 %v1548, %v1542
      %v2161 = vpack.c.b16 %v1549, %v1543
      %v2162 = vpack.c.b16 %v1550, %v1544
      %v2163 = vpack.c.b16 %v1557, %v1551
      %v2164 = vpack.c.b16 %v1558, %v1552
      %v2165 = vpack.c.b16 %v1559, %v1553
      %v2166 = vpack.c.b16 %v1560, %v1554
      %v2167 = vpack.c.b16 %v1561, %v1555
      %v2168 = vpack.c.b16 %v1562, %v1556
      %v2169 = vpack.c.b16 %v1569, %v1563
      %v2170 = vpack.c.b16 %v1570, %v1564
      %v2171 = vpack.c.b16 %v1571, %v1565
      %v2172 = vpack.c.b16 %v1572, %v1566
      %v2173 = vpack.c.b16 %v1573, %v1567
      %v2174 = vpack.c.b16 %v1574, %v1568
      %v2175 = vpack.c.b16 %v1581, %v1575
      %v2176 = vpack.c.b16 %v1582, %v1576
      %v2177 = vpack.c.b16 %v1583, %v1577
      %v2178 = vpack.c.b16 %v1584, %v1578
      %v2179 = vpack.c.b16 %v1585, %v1579
      %v2180 = vpack.c.b16 %v1586, %v1580
      %v2181 = vpack.c.b16 %v1593, %v1587
      %v2182 = vpack.c.b16 %v1594, %v1588
      %v2183 = vpack.c.b16 %v1595, %v1589
      %v2184 = vpack.c.b16 %v1596, %v1590
      %v2185 = vpack.c.b16 %v1597, %v1591
      %v2186 = vpack.c.b16 %v1598, %v1592
      %v2187 = vpack.c.b16 %v1605, %v1599
      %v2188 = vpack.c.b16 %v1606, %v1600
      %v2189 = vpack.c.b16 %v1607, %v1601
      %v2190 = vpack.c.b16 %v1608, %v1602
      %v2191 = vpack.c.b16 %v1609, %v1603
      %v2192 = vpack.c.b16 %v1610, %v1604
      %v2193 = vpack.c.b16 %v1617, %v1611
      %v2194 = vpack.c.b16 %v1618, %v1612
      %v2195 = vpack.c.b16 %v1619, %v1613
      %v2196 = vpack.c.b16 %v1620, %v1614
      %v2197 = vpack.c.b16 %v1621, %v1615
      %v2198 = vpack.c.b16 %v1622, %v1616
      %v2199 = vpack.c.b16 %v1629, %v1623
      %v2200 = vpack.c.b16 %v1630, %v1624
      %v2201 = vpack.c.b16 %v1631, %v1625
      %v2202 = vpack.c.b16 %v1632, %v1626
      %v2203 = vpack.c.b16 %v1633, %v1627
      %v2204 = vpack.c.b16 %v1634, %v1628
      %v2205 = vpack.c.b16 %v1641, %v1635
      %v2206 = vpack.c.b16 %v1642, %v1636
      %v2207 = vpack.c.b16 %v1643, %v1637
      %v2208 = vpack.c.b16 %v1644, %v1638
      %v2209 = vpack.c.b16 %v1645, %v1639
      %v2210 = vpack.c.b16 %v1646, %v1640
      %v2211 = vpack.c.b16 %v1653, %v1647
      %v2212 = vpack.c.b16 %v1654, %v1648
      %v2213 = vpack.c.b16 %v1655, %v1649
      %v2214 = vpack.c.b16 %v1656, %v1650
      %v2215 = vpack.c.b16 %v1657, %v1651
      %v2216 = vpack.c.b16 %v1658, %v1652
      %v2217 = vpack.c.b16 %v1665, %v1659
      %v2218 = vpack.c.b16 %v1666, %v1660
      %v2219 = vpack.c.b16 %v1667, %v1661
      %v2220 = vpack.c.b16 %v1668, %v1662
      %v2221 = vpack.c.b16 %v1669, %v1663
      %v2222 = vpack.c.b16 %v1670, %v1664
      %v2223 = vpack.c.b16 %v1677, %v1671
      %v2224 = vpack.c.b16 %v1678, %v1672
      %v2225 = vpack.c.b16 %v1679, %v1673
      %v2226 = vpack.c.b16 %v1680, %v1674
      %v2227 = vpack.c.b16 %v1681, %v1675
      %v2228 = vpack.c.b16 %v1682, %v1676
      %v2229 = vpack.c.b16 %v1689, %v1683
      %v2230 = vpack.c.b16 %v1690, %v1684
      %v2231 = vpack.c.b16 %v1691, %v1685
      %v2232 = vpack.c.b16 %v1692, %v1686
      %v2233 = vpack.c.b16 %v1693, %v1687
      %v2234 = vpack.c.b16 %v1694, %v1688
      %v2235 = vpack.c.b16 %v1701, %v1695
      %v2236 = vpack.c.b16 %v1702, %v1696
      %v2237 = vpack.c.b16 %v1703, %v1697
      %v2238 = vpack.c.b16 %v1704, %v1698
      %v2239 = vpack.c.b16 %v1705, %v1699
      %v2240 = vpack.c.b16 %v1706, %v1700
      %v2241 = vpack.c.b16 %v1713, %v1707
      %v2242 = vpack.c.b16 %v1714, %v1708
      %v2243 = vpack.c.b16 %v1715, %v1709
      %v2244 = vpack.c.b16 %v1716, %v1710
      %v2245 = vpack.c.b16 %v1717, %v1711
      %v2246 = vpack.c.b16 %v1718, %v1712
      %v2247 = vpack.c.b16 %v1725, %v1719
      %v2248 = vpack.c.b16 %v1726, %v1720
      %v2249 = vpack.c.b16 %v1727, %v1721
      %v2250 = vpack.c.b16 %v1728, %v1722
      %v2251 = vpack.c.b16 %v1729, %v1723
      %v2252 = vpack.c.b16 %v1730, %v1724
      %v2253 = vpack.c.b16 %v1737, %v1731
      %v2254 = vpack.c.b16 %v1738, %v1732
      %v2255 = vpack.c.b16 %v1739, %v1733
      %v2256 = vpack.c.b16 %v1740, %v1734
      %v2257 = vpack.c.b16 %v1741, %v1735
      %v2258 = vpack.c.b16 %v1742, %v1736
      %v2259 = vpack.c.b16 %v1749, %v1743
      %v2260 = vpack.c.b16 %v1750, %v1744
      %v2261 = vpack.c.b16 %v1751, %v1745
      %v2262 = vpack.c.b16 %v1752, %v1746
      %v2263 = vpack.c.b16 %v1753, %v1747
      %v2264 = vpack.c.b16 %v1754, %v1748
      %v2265 = vpack.c.b16 %v1761, %v1755
      %v2266 = vpack.c.b16 %v1762, %v1756
      %v2267 = vpack.c.b16 %v1763, %v1757
      %v2268 = vpack.c.b16 %v1764, %v1758
      %v2269 = vpack.c.b16 %v1765, %v1759
      %v2270 = vpack.c.b16 %v1766, %v1760
      %v2271 = vpack.c.b16 %v1773, %v1767
      %v2272 = vpack.c.b16 %v1774, %v1768
      %v2273 = vpack.c.b16 %v1775, %v1769
      %v2274 = vpack.c.b16 %v1776, %v1770
      %v2275 = vpack.c.b16 %v1777, %v1771
      %v2276 = vpack.c.b16 %v1778, %v1772
      %v2277 = vpack.c.b16 %v1785, %v1779
      %v2278 = vpack.c.b16 %v1786, %v1780
      %v2279 = vpack.c.b16 %v1787, %v1781
      %v2280 = vpack.c.b16 %v1788, %v1782
      %v2281 = vpack.c.b16 %v1789, %v1783
      %v2282 = vpack.c.b16 %v1790, %v1784
      %v2283 = vpack.c.b16 %v1797, %v1791
      %v2284 = vpack.c.b16 %v1798, %v1792
      %v2285 = vpack.c.b16 %v1799, %v1793
      %v2286 = vpack.c.b16 %v1800, %v1794
      %v2287 = vpack.c.b16 %v1801, %v1795
      %v2288 = vpack.c.b16 %v1802, %v1796
      %v2289 = vpack.c.b16 %v1809, %v1803
      %v2290 = vpack.c.b16 %v1810, %v1804
      %v2291 = vpack.c.b16 %v1811, %v1805
      %v2292 = vpack.c.b16 %v1812, %v1806
      %v2293 = vpack.c.b16 %v1813, %v1807
      %v2294 = vpack.c.b16 %v1814, %v1808
      %v2295 = vpack.c.b16 %v1821, %v1815
      %v2296 = vpack.c.b16 %v1822, %v1816
      %v2297 = vpack.c.b16 %v1823, %v1817
      %v2298 = vpack.c.b16 %v1824, %v1818
      %v2299 = vpack.c.b16 %v1825, %v1819
      %v2300 = vpack.c.b16 %v1826, %v1820
      %v2301 = vpack.c.b16 %v1833, %v1827
      %v2302 = vpack.c.b16 %v1834, %v1828
      %v2303 = vpack.c.b16 %v1835, %v1829
      %v2304 = vpack.c.b16 %v1836, %v1830
      %v2305 = vpack.c.b16 %v1837, %v1831
      %v2306 = vpack.c.b16 %v1838, %v1832
      %v2307 = vpack.c.b16 %v1845, %v1839
      %v2308 = vpack.c.b16 %v1846, %v1840
      %v2309 = vpack.c.b16 %v1847, %v1841
      %v2310 = vpack.c.b16 %v1848, %v1842
      %v2311 = vpack.c.b16 %v1849, %v1843
      %v2312 = vpack.c.b16 %v1850, %v1844
      %v2313 = vpack.c.b16 %v1857, %v1851
      %v2314 = vpack.c.b16 %v1858, %v1852
      %v2315 = vpack.c.b16 %v1859, %v1853
      %v2316 = vpack.c.b16 %v1860, %v1854
      %v2317 = vpack.c.b16 %v1861, %v1855
      %v2318 = vpack.c.b16 %v1862, %v1856
      %v2319 = vpack.c.b16 %v1869, %v1863
      %v2320 = vpack.c.b16 %v1870, %v1864
      %v2321 = vpack.c.b16 %v1871, %v1865
      %v2322 = vpack.c.b16 %v1872, %v1866
      %v2323 = vpack.c.b16 %v1873, %v1867
      %v2324 = vpack.c.b16 %v1874, %v1868
      %v2325 = vpack.c.b16 %v1881, %v1875
      %v2326 = vpack.c.b16 %v1882, %v1876
      %v2327 = vpack.c.b16 %v1883, %v1877
      %v2328 = vpack.c.b16 %v1884, %v1878
      %v2329 = vpack.c.b16 %v1885, %v1879
      %v2330 = vpack.c.b16 %v1886, %v1880
      %v2331 = vpack.c.b16 %v1893, %v1887
      %v2332 = vpack.c.b16 %v1894, %v1888
      %v2333 = vpack.c.b16 %v1895, %v1889
      %v2334 = vpack.c.b16 %v1896, %v1890
      %v2335 = vpack.c.b16 %v1897, %v1891
      %v2336 = vpack.c.b16 %v1898, %v1892
      %v2337 = vpack.c.b16 %v1905, %v1899
      %v2338 = vpack.c.b16 %v1906, %v1900
      %v2339 = vpack.c.b16 %v1907, %v1901
      %v2340 = vpack.c.b16 %v1908, %v1902
      %v2341 = vpack.c.b16 %v1909, %v1903
      %v2342 = vpack.c.b16 %v1910, %v1904
      %v2343 = vpack.c.b16 %v1917, %v1911
      %v2344 = vpack.c.b16 %v1918, %v1912
      %v2345 = vpack.c.b16 %v1919, %v1913
      %v2346 = vpack.c.b16 %v1920, %v1914
      %v2347 = vpack.c.b16 %v1921, %v1915
      %v2348 = vpack.c.b16 %v1922, %v1916
      %v2349 = vpack.c.b16 %v1929, %v1923
      %v2350 = vpack.c.b16 %v1930, %v1924
      %v2351 = vpack.c.b16 %v1931, %v1925
      %v2352 = vpack.c.b16 %v1932, %v1926
      %v2353 = vpack.c.b16 %v1933, %v1927
      %v2354 = vpack.c.b16 %v1934, %v1928
      %v2355 = vpack.c.b16 %v1941, %v1935
      %v2356 = vpack.c.b16 %v1942, %v1936
      %v2357 = vpack.c.b16 %v1943, %v1937
      %v2358 = vpack.c.b16 %v1944, %v1938
      %v2359 = vpack.c.b16 %v1945, %v1939
      %v2360 = vpack.c.b16 %v1946, %v1940
      %v2361 = vpack.c.b16 %v1953, %v1947
      %v2362 = vpack.c.b16 %v1954, %v1948
      %v2363 = vpack.c.b16 %v1955, %v1949
      %v2364 = vpack.c.b16 %v1956, %v1950
      %v2365 = vpack.c.b16 %v1957, %v1951
      %v2366 = vpack.c.b16 %v1958, %v1952
      %v2367 = vpack.c.b16 %v1965, %v1959
      %v2368 = vpack.c.b16 %v1966, %v1960
      %v2369 = vpack.c.b16 %v1967, %v1961
      %v2370 = vpack.c.b16 %v1968, %v1962
      %v2371 = vpack.c.b16 %v1969, %v1963
      %v2372 = vpack.c.b16 %v1970, %v1964
      %v2373 = vpack.c.b16 %v1977, %v1971
      %v2374 = vpack.c.b16 %v1978, %v1972
      %v2375 = vpack.c.b16 %v1979, %v1973
      %v2376 = vpack.c.b16 %v1980, %v1974
      %v2377 = vpack.c.b16 %v1981, %v1975
      %v2378 = vpack.c.b16 %v1982, %v1976
      %v2379 = vpack.c.b16 %v1989, %v1983
      %v2380 = vpack.c.b16 %v1990, %v1984
      %v2381 = vpack.c.b16 %v1991, %v1985
      %v2382 = vpack.c.b16 %v1992, %v1986
      %v2383 = vpack.c.b16 %v1993, %v1987
      %v2384 = vpack.c.b16 %v1994, %v1988
      %v2385 = vpack.c.b16 %v2001, %v1995
      %v2386 = vpack.c.b16 %v2002, %v1996
      %v2387 = vpack.c.b16 %v2003, %v1997
      %v2388 = vpack.c.b16 %v2004, %v1998
      %v2389 = vpack.c.b16 %v2005, %v1999
      %v2390 = vpack.c.b16 %v2006, %v2000
      %2775 = vmatprep.subr.bf16.mxu0 %v2008
      %2776 = vmatpush1.bf16.msra.mxu0 %v2007
      %2777 = vmatprep.subr.bf16.mxu0 %v2014
      %2778 = vmatpush1.bf16.msra.mxu0 %v2013
      %2779 = vmatprep.subr.bf16.mxu0 %v2020
      %2780 = vmatpush1.bf16.msra.mxu0 %v2019
      %2781 = vmatprep.subr.bf16.mxu0 %v2026
      %2782 = vmatpush1.bf16.msra.mxu0 %v2025
      %2783 = vmatprep.subr.bf16.mxu0 %v2032
      %2784 = vmatpush1.bf16.msra.mxu0 %v2031
      %2785 = vmatprep.subr.bf16.mxu0 %v2038
      %2786 = vmatpush1.bf16.msra.mxu0 %v2037
      %2787 = vmatprep.subr.bf16.mxu0 %v2044
      %2788 = vmatpush1.bf16.msra.mxu0 %v2043
      %2789 = vmatprep.subr.bf16.mxu0 %v2050
      %2790 = vmatpush1.bf16.msra.mxu0 %v2049
      %2791 = vmatprep.subr.bf16.mxu0 %v2056
      %2792 = vmatpush1.bf16.msra.mxu0 %v2055
      %2793 = vmatprep.subr.bf16.mxu0 %v2062
      %2794 = vmatpush1.bf16.msra.mxu0 %v2061
      %2795 = vmatprep.subr.bf16.mxu0 %v2068
      %2796 = vmatpush1.bf16.msra.mxu0 %v2067
      %2797 = vmatprep.subr.bf16.mxu0 %v2074
      %2798 = vmatpush1.bf16.msra.mxu0 %v2073
      %2799 = vmatprep.subr.bf16.mxu0 %v2080
      %2800 = vmatpush1.bf16.msra.mxu0 %v2079
      %2801 = vmatprep.subr.bf16.mxu0 %v2086
      %2802 = vmatpush1.bf16.msra.mxu0 %v2085
      %2803 = vmatprep.subr.bf16.mxu0 %v2092
      %2804 = vmatpush1.bf16.msra.mxu0 %v2091
      %2805 = vmatprep.subr.bf16.mxu0 %v2098
      %2806 = vmatpush1.bf16.msra.mxu0 %v2097
      %2807 = vmatprep.mubr.bf16.mxu0 %v365
      %2808 = vmatmul.mubr.bf16.gmra.mrb[0].mxu0 %v364
      %v2809 = vpop.f32.mrb[0].mxu0
      %v2810 = vadd.f32 0.0, %v2809
      %v2811 = vpop.f32.mrb[0].mxu0
      %v2812 = vadd.f32 0.0, %v2811
      %v2813 = vpop.f32.mrb[0].mxu0
      %v2814 = vadd.f32 0.0, %v2813
      %v2815 = vpop.f32.mrb[0].mxu0
      %v2816 = vadd.f32 0.0, %v2815
      %2817 = vmatprep.mubr.bf16.mxu0 %v367
      %2818 = vmatmul.mubr.bf16.gmra.mrb[0].mxu0 %v366
      %v2819 = vpop.f32.mrb[0].mxu0
      %v2820 = vadd.f32 0.0, %v2819
      %v2821 = vpop.f32.mrb[0].mxu0
      %v2822 = vadd.f32 0.0, %v2821
      %v2823 = vpop.f32.mrb[0].mxu0
      %v2824 = vadd.f32 0.0, %v2823
      %v2825 = vpop.f32.mrb[0].mxu0
      %v2826 = vadd.f32 0.0, %v2825
      %2827 = vdwg.mxu0
      %2828 = vmatprep.subr.bf16.mxu0 %v2104
      %2829 = vmatpush1.bf16.msra.mxu0 %v2103
      %2830 = vmatprep.subr.bf16.mxu0 %v2110
      %2831 = vmatpush1.bf16.msra.mxu0 %v2109
      %2832 = vmatprep.subr.bf16.mxu0 %v2116
      %2833 = vmatpush1.bf16.msra.mxu0 %v2115
      %2834 = vmatprep.subr.bf16.mxu0 %v2122
      %2835 = vmatpush1.bf16.msra.mxu0 %v2121
      %2836 = vmatprep.subr.bf16.mxu0 %v2128
      %2837 = vmatpush1.bf16.msra.mxu0 %v2127
      %2838 = vmatprep.subr.bf16.mxu0 %v2134
      %2839 = vmatpush1.bf16.msra.mxu0 %v2133
      %2840 = vmatprep.subr.bf16.mxu0 %v2140
      %2841 = vmatpush1.bf16.msra.mxu0 %v2139
      %2842 = vmatprep.subr.bf16.mxu0 %v2146
      %2843 = vmatpush1.bf16.msra.mxu0 %v2145
      %2844 = vmatprep.subr.bf16.mxu0 %v2152
      %2845 = vmatpush1.bf16.msra.mxu0 %v2151
      %2846 = vmatprep.subr.bf16.mxu0 %v2158
      %2847 = vmatpush1.bf16.msra.mxu0 %v2157
      %2848 = vmatprep.subr.bf16.mxu0 %v2164
      %2849 = vmatpush1.bf16.msra.mxu0 %v2163
      %2850 = vmatprep.subr.bf16.mxu0 %v2170
      %2851 = vmatpush1.bf16.msra.mxu0 %v2169
      %2852 = vmatprep.subr.bf16.mxu0 %v2176
      %2853 = vmatpush1.bf16.msra.mxu0 %v2175
      %2854 = vmatprep.subr.bf16.mxu0 %v2182
      %2855 = vmatpush1.bf16.msra.mxu0 %v2181
      %2856 = vmatprep.subr.bf16.mxu0 %v2188
      %2857 = vmatpush1.bf16.msra.mxu0 %v2187
      %2858 = vmatprep.subr.bf16.mxu0 %v2194
      %2859 = vmatpush1.bf16.msra.mxu0 %v2193
      %2860 = vmatprep.mubr.bf16.mxu0 %v404
      %2861 = vmatmul.mubr.bf16.gmra.mrb[0].mxu0 %v392
      %v2862 = vpop.f32.mrb[0].mxu0
      %v2863 = vadd.f32 %v2810, %v2862
      %v2864 = vpop.f32.mrb[0].mxu0
      %v2865 = vadd.f32 %v2812, %v2864
      %v2866 = vpop.f32.mrb[0].mxu0
      %v2867 = vadd.f32 %v2814, %v2866
      %v2868 = vpop.f32.mrb[0].mxu0
      %v2869 = vadd.f32 %v2816, %v2868
      %2870 = vmatprep.mubr.bf16.mxu0 %v420
      %2871 = vmatmul.mubr.bf16.gmra.mrb[0].mxu0 %v412
      %v2872 = vpop.f32.mrb[0].mxu0
      %v2873 = vadd.f32 %v2820, %v2872
      %v2874 = vpop.f32.mrb[0].mxu0
      %v2875 = vadd.f32 %v2822, %v2874
      %v2876 = vpop.f32.mrb[0].mxu0
      %v2877 = vadd.f32 %v2824, %v2876
      %v2878 = vpop.f32.mrb[0].mxu0
      %v2879 = vadd.f32 %v2826, %v2878
      %2880 = vdwg.mxu0
      %2881 = vmatprep.subr.bf16.mxu0 %v2200
      %2882 = vmatpush1.bf16.msra.mxu0 %v2199
      %2883 = vmatprep.subr.bf16.mxu0 %v2206
      %2884 = vmatpush1.bf16.msra.mxu0 %v2205
      %2885 = vmatprep.subr.bf16.mxu0 %v2212
      %2886 = vmatpush1.bf16.msra.mxu0 %v2211
      %2887 = vmatprep.subr.bf16.mxu0 %v2218
      %2888 = vmatpush1.bf16.msra.mxu0 %v2217
      %2889 = vmatprep.subr.bf16.mxu0 %v2224
      %2890 = vmatpush1.bf16.msra.mxu0 %v2223
      %2891 = vmatprep.subr.bf16.mxu0 %v2230
      %2892 = vmatpush1.bf16.msra.mxu0 %v2229
      %2893 = vmatprep.subr.bf16.mxu0 %v2236
      %2894 = vmatpush1.bf16.msra.mxu0 %v2235
      %2895 = vmatprep.subr.bf16.mxu0 %v2242
      %2896 = vmatpush1.bf16.msra.mxu0 %v2241
      %2897 = vmatprep.subr.bf16.mxu0 %v2248
      %2898 = vmatpush1.bf16.msra.mxu0 %v2247
      %2899 = vmatprep.subr.bf16.mxu0 %v2254
      %2900 = vmatpush1.bf16.msra.mxu0 %v2253
      %2901 = vmatprep.subr.bf16.mxu0 %v2260
      %2902 = vmatpush1.bf16.msra.mxu0 %v2259
      %2903 = vmatprep.subr.bf16.mxu0 %v2266
      %2904 = vmatpush1.bf16.msra.mxu0 %v2265
      %2905 = vmatprep.subr.bf16.mxu0 %v2272
      %2906 = vmatpush1.bf16.msra.mxu0 %v2271
      %2907 = vmatprep.subr.bf16.mxu0 %v2278
      %2908 = vmatpush1.bf16.msra.mxu0 %v2277
      %2909 = vmatprep.subr.bf16.mxu0 %v2284
      %2910 = vmatpush1.bf16.msra.mxu0 %v2283
      %2911 = vmatprep.subr.bf16.mxu0 %v2290
      %2912 = vmatpush1.bf16.msra.mxu0 %v2289
      %2913 = vmatprep.mubr.bf16.mxu0 %v431
      %2914 = vmatmul.mubr.bf16.gmra.mrb[0].mxu0 %v428
      %v2915 = vpop.f32.mrb[0].mxu0
      %v2916 = vadd.f32 %v2863, %v2915
      %v2917 = vpop.f32.mrb[0].mxu0
      %v2918 = vadd.f32 %v2865, %v2917
      %v2919 = vpop.f32.mrb[0].mxu0
      %v2920 = vadd.f32 %v2867, %v2919
      %v2921 = vpop.f32.mrb[0].mxu0
      %v2922 = vadd.f32 %v2869, %v2921
      %2923 = vmatprep.mubr.bf16.mxu0 %v435
      %2924 = vmatmul.mubr.bf16.gmra.mrb[0].mxu0 %v433
      %v2925 = vpop.f32.mrb[0].mxu0
      %v2926 = vadd.f32 %v2873, %v2925
      %v2927 = vpop.f32.mrb[0].mxu0
      %v2928 = vadd.f32 %v2875, %v2927
      %v2929 = vpop.f32.mrb[0].mxu0
      %v2930 = vadd.f32 %v2877, %v2929
      %v2931 = vpop.f32.mrb[0].mxu0
      %v2932 = vadd.f32 %v2879, %v2931
      %2933 = vdwg.mxu0
      %2934 = vmatprep.subr.bf16.mxu0 %v2296
      %2935 = vmatpush1.bf16.msra.mxu0 %v2295
      %2936 = vmatprep.subr.bf16.mxu0 %v2302
      %2937 = vmatpush1.bf16.msra.mxu0 %v2301
      %2938 = vmatprep.subr.bf16.mxu0 %v2308
      %2939 = vmatpush1.bf16.msra.mxu0 %v2307
      %2940 = vmatprep.subr.bf16.mxu0 %v2314
      %2941 = vmatpush1.bf16.msra.mxu0 %v2313
      %2942 = vmatprep.subr.bf16.mxu0 %v2320
      %2943 = vmatpush1.bf16.msra.mxu0 %v2319
      %2944 = vmatprep.subr.bf16.mxu0 %v2326
      %2945 = vmatpush1.bf16.msra.mxu0 %v2325
      %2946 = vmatprep.subr.bf16.mxu0 %v2332
      %2947 = vmatpush1.bf16.msra.mxu0 %v2331
      %2948 = vmatprep.subr.bf16.mxu0 %v2338
      %2949 = vmatpush1.bf16.msra.mxu0 %v2337
      %2950 = vmatprep.subr.bf16.mxu0 %v2344
      %2951 = vmatpush1.bf16.msra.mxu0 %v2343
      %2952 = vmatprep.subr.bf16.mxu0 %v2350
      %2953 = vmatpush1.bf16.msra.mxu0 %v2349
      %2954 = vmatprep.subr.bf16.mxu0 %v2356
      %2955 = vmatpush1.bf16.msra.mxu0 %v2355
      %2956 = vmatprep.subr.bf16.mxu0 %v2362
      %2957 = vmatpush1.bf16.msra.mxu0 %v2361
      %2958 = vmatprep.subr.bf16.mxu0 %v2368
      %2959 = vmatpush1.bf16.msra.mxu0 %v2367
      %2960 = vmatprep.subr.bf16.mxu0 %v2374
      %2961 = vmatpush1.bf16.msra.mxu0 %v2373
      %2962 = vmatprep.subr.bf16.mxu0 %v2380
      %2963 = vmatpush1.bf16.msra.mxu0 %v2379
      %2964 = vmatprep.subr.bf16.mxu0 %v2386
      %2965 = vmatpush1.bf16.msra.mxu0 %v2385
      %2966 = vmatprep.mubr.bf16.mxu0 %v454
      %2967 = vmatmul.mubr.bf16.gmra.mrb[0].mxu0 %v447
      %v2968 = vpop.f32.mrb[0].mxu0
      %v2969 = vadd.f32 %v2916, %v2968
      %v2970 = vpop.f32.mrb[0].mxu0
      %v2971 = vadd.f32 %v2918, %v2970
      %v2972 = vpop.f32.mrb[0].mxu0
      %v2973 = vadd.f32 %v2920, %v2972
      %v2974 = vpop.f32.mrb[0].mxu0
      %v2975 = vadd.f32 %v2922, %v2974
      %2976 = vmatprep.mubr.bf16.mxu0 %v466
      %2977 = vmatmul.mubr.bf16.gmra.mrb[0].mxu0 %v460
      %v2978 = vpop.f32.mrb[0].mxu0
      %v2979 = vadd.f32 %v2926, %v2978
      %v2980 = vpop.f32.mrb[0].mxu0
      %v2981 = vadd.f32 %v2928, %v2980
      %v2982 = vpop.f32.mrb[0].mxu0
      %v2983 = vadd.f32 %v2930, %v2982
      %v2984 = vpop.f32.mrb[0].mxu0
      %v2985 = vadd.f32 %v2932, %v2984
      %2986 = vdwg.mxu0
      %2987 = vmatprep.subr.bf16.mxu0 %v2010
      %2988 = vmatpush1.bf16.msra.mxu0 %v2009
      %2989 = vmatprep.subr.bf16.mxu0 %v2016
      %2990 = vmatpush1.bf16.msra.mxu0 %v2015
      %2991 = vmatprep.subr.bf16.mxu0 %v2022
      %2992 = vmatpush1.bf16.msra.mxu0 %v2021
      %2993 = vmatprep.subr.bf16.mxu0 %v2028
      %2994 = vmatpush1.bf16.msra.mxu0 %v2027
      %2995 = vmatprep.subr.bf16.mxu0 %v2034
      %2996 = vmatpush1.bf16.msra.mxu0 %v2033
      %2997 = vmatprep.subr.bf16.mxu0 %v2040
      %2998 = vmatpush1.bf16.msra.mxu0 %v2039
      %2999 = vmatprep.subr.bf16.mxu0 %v2046
      %3000 = vmatpush1.bf16.msra.mxu0 %v2045
      %3001 = vmatprep.subr.bf16.mxu0 %v2052
      %3002 = vmatpush1.bf16.msra.mxu0 %v2051
      %3003 = vmatprep.subr.bf16.mxu0 %v2058
      %3004 = vmatpush1.bf16.msra.mxu0 %v2057
      %3005 = vmatprep.subr.bf16.mxu0 %v2064
      %3006 = vmatpush1.bf16.msra.mxu0 %v2063
      %3007 = vmatprep.subr.bf16.mxu0 %v2070
      %3008 = vmatpush1.bf16.msra.mxu0 %v2069
      %3009 = vmatprep.subr.bf16.mxu0 %v2076
      %3010 = vmatpush1.bf16.msra.mxu0 %v2075
      %3011 = vmatprep.subr.bf16.mxu0 %v2082
      %3012 = vmatpush1.bf16.msra.mxu0 %v2081
      %3013 = vmatprep.subr.bf16.mxu0 %v2088
      %3014 = vmatpush1.bf16.msra.mxu0 %v2087
      %3015 = vmatprep.subr.bf16.mxu0 %v2094
      %3016 = vmatpush1.bf16.msra.mxu0 %v2093
      %3017 = vmatprep.subr.bf16.mxu0 %v2100
      %3018 = vmatpush1.bf16.msra.mxu0 %v2099
      %3019 = vmatprep.mubr.bf16.mxu0 %v365
      %3020 = vmatmul.mubr.bf16.gmra.mrb[0].mxu0 %v364
      %v3021 = vpop.f32.mrb[0].mxu0
      %v3022 = vadd.f32 0.0, %v3021
      %v3023 = vpop.f32.mrb[0].mxu0
      %v3024 = vadd.f32 0.0, %v3023
      %v3025 = vpop.f32.mrb[0].mxu0
      %v3026 = vadd.f32 0.0, %v3025
      %v3027 = vpop.f32.mrb[0].mxu0
      %v3028 = vadd.f32 0.0, %v3027
      %3029 = vmatprep.mubr.bf16.mxu0 %v367
      %3030 = vmatmul.mubr.bf16.gmra.mrb[0].mxu0 %v366
      %v3031 = vpop.f32.mrb[0].mxu0
      %v3032 = vadd.f32 0.0, %v3031
      %v3033 = vpop.f32.mrb[0].mxu0
      %v3034 = vadd.f32 0.0, %v3033
      %v3035 = vpop.f32.mrb[0].mxu0
      %v3036 = vadd.f32 0.0, %v3035
      %v3037 = vpop.f32.mrb[0].mxu0
      %v3038 = vadd.f32 0.0, %v3037
      %3039 = vdwg.mxu0
      %3040 = vmatprep.subr.bf16.mxu0 %v2106
      %3041 = vmatpush1.bf16.msra.mxu0 %v2105
      %3042 = vmatprep.subr.bf16.mxu0 %v2112
      %3043 = vmatpush1.bf16.msra.mxu0 %v2111
      %3044 = vmatprep.subr.bf16.mxu0 %v2118
      %3045 = vmatpush1.bf16.msra.mxu0 %v2117
      %3046 = vmatprep.subr.bf16.mxu0 %v2124
      %3047 = vmatpush1.bf16.msra.mxu0 %v2123
      %3048 = vmatprep.subr.bf16.mxu0 %v2130
      %3049 = vmatpush1.bf16.msra.mxu0 %v2129
      %3050 = vmatprep.subr.bf16.mxu0 %v2136
      %3051 = vmatpush1.bf16.msra.mxu0 %v2135
      %3052 = vmatprep.subr.bf16.mxu0 %v2142
      %3053 = vmatpush1.bf16.msra.mxu0 %v2141
      %3054 = vmatprep.subr.bf16.mxu0 %v2148
      %3055 = vmatpush1.bf16.msra.mxu0 %v2147
      %3056 = vmatprep.subr.bf16.mxu0 %v2154
      %3057 = vmatpush1.bf16.msra.mxu0 %v2153
      %3058 = vmatprep.subr.bf16.mxu0 %v2160
      %3059 = vmatpush1.bf16.msra.mxu0 %v2159
      %3060 = vmatprep.subr.bf16.mxu0 %v2166
      %3061 = vmatpush1.bf16.msra.mxu0 %v2165
      %3062 = vmatprep.subr.bf16.mxu0 %v2172
      %3063 = vmatpush1.bf16.msra.mxu0 %v2171
      %3064 = vmatprep.subr.bf16.mxu0 %v2178
      %3065 = vmatpush1.bf16.msra.mxu0 %v2177
      %3066 = vmatprep.subr.bf16.mxu0 %v2184
      %3067 = vmatpush1.bf16.msra.mxu0 %v2183
      %3068 = vmatprep.subr.bf16.mxu0 %v2190
      %3069 = vmatpush1.bf16.msra.mxu0 %v2189
      %3070 = vmatprep.subr.bf16.mxu0 %v2196
      %3071 = vmatpush1.bf16.msra.mxu0 %v2195
      %3072 = vmatprep.mubr.bf16.mxu0 %v404
      %3073 = vmatmul.mubr.bf16.gmra.mrb[0].mxu0 %v392
      %v3074 = vpop.f32.mrb[0].mxu0
      %v3075 = vadd.f32 %v3022, %v3074
      %v3076 = vpop.f32.mrb[0].mxu0
      %v3077 = vadd.f32 %v3024, %v3076
      %v3078 = vpop.f32.mrb[0].mxu0
      %v3079 = vadd.f32 %v3026, %v3078
      %v3080 = vpop.f32.mrb[0].mxu0
      %v3081 = vadd.f32 %v3028, %v3080
      %3082 = vmatprep.mubr.bf16.mxu0 %v420
      %3083 = vmatmul.mubr.bf16.gmra.mrb[0].mxu0 %v412
      %v3084 = vpop.f32.mrb[0].mxu0
      %v3085 = vadd.f32 %v3032, %v3084
      %v3086 = vpop.f32.mrb[0].mxu0
      %v3087 = vadd.f32 %v3034, %v3086
      %v3088 = vpop.f32.mrb[0].mxu0
      %v3089 = vadd.f32 %v3036, %v3088
      %v3090 = vpop.f32.mrb[0].mxu0
      %v3091 = vadd.f32 %v3038, %v3090
      %3092 = vdwg.mxu0
      %3093 = vmatprep.subr.bf16.mxu0 %v2202
      %3094 = vmatpush1.bf16.msra.mxu0 %v2201
      %3095 = vmatprep.subr.bf16.mxu0 %v2208
      %3096 = vmatpush1.bf16.msra.mxu0 %v2207
      %3097 = vmatprep.subr.bf16.mxu0 %v2214
      %3098 = vmatpush1.bf16.msra.mxu0 %v2213
      %3099 = vmatprep.subr.bf16.mxu0 %v2220
      %3100 = vmatpush1.bf16.msra.mxu0 %v2219
      %3101 = vmatprep.subr.bf16.mxu0 %v2226
      %3102 = vmatpush1.bf16.msra.mxu0 %v2225
      %3103 = vmatprep.subr.bf16.mxu0 %v2232
      %3104 = vmatpush1.bf16.msra.mxu0 %v2231
      %3105 = vmatprep.subr.bf16.mxu0 %v2238
      %3106 = vmatpush1.bf16.msra.mxu0 %v2237
      %3107 = vmatprep.subr.bf16.mxu0 %v2244
      %3108 = vmatpush1.bf16.msra.mxu0 %v2243
      %3109 = vmatprep.subr.bf16.mxu0 %v2250
      %3110 = vmatpush1.bf16.msra.mxu0 %v2249
      %3111 = vmatprep.subr.bf16.mxu0 %v2256
      %3112 = vmatpush1.bf16.msra.mxu0 %v2255
      %3113 = vmatprep.subr.bf16.mxu0 %v2262
      %3114 = vmatpush1.bf16.msra.mxu0 %v2261
      %3115 = vmatprep.subr.bf16.mxu0 %v2268
      %3116 = vmatpush1.bf16.msra.mxu0 %v2267
      %3117 = vmatprep.subr.bf16.mxu0 %v2274
      %3118 = vmatpush1.bf16.msra.mxu0 %v2273
      %3119 = vmatprep.subr.bf16.mxu0 %v2280
      %3120 = vmatpush1.bf16.msra.mxu0 %v2279
      %3121 = vmatprep.subr.bf16.mxu0 %v2286
      %3122 = vmatpush1.bf16.msra.mxu0 %v2285
      %3123 = vmatprep.subr.bf16.mxu0 %v2292
      %3124 = vmatpush1.bf16.msra.mxu0 %v2291
      %3125 = vmatprep.mubr.bf16.mxu0 %v431
      %3126 = vmatmul.mubr.bf16.gmra.mrb[0].mxu0 %v428
      %v3127 = vpop.f32.mrb[0].mxu0
      %v3128 = vadd.f32 %v3075, %v3127
      %v3129 = vpop.f32.mrb[0].mxu0
      %v3130 = vadd.f32 %v3077, %v3129
      %v3131 = vpop.f32.mrb[0].mxu0
      %v3132 = vadd.f32 %v3079, %v3131
      %v3133 = vpop.f32.mrb[0].mxu0
      %v3134 = vadd.f32 %v3081, %v3133
      %3135 = vmatprep.mubr.bf16.mxu0 %v435
      %3136 = vmatmul.mubr.bf16.gmra.mrb[0].mxu0 %v433
      %v3137 = vpop.f32.mrb[0].mxu0
      %v3138 = vadd.f32 %v3085, %v3137
      %v3139 = vpop.f32.mrb[0].mxu0
      %v3140 = vadd.f32 %v3087, %v3139
      %v3141 = vpop.f32.mrb[0].mxu0
      %v3142 = vadd.f32 %v3089, %v3141
      %v3143 = vpop.f32.mrb[0].mxu0
      %v3144 = vadd.f32 %v3091, %v3143
      %3145 = vdwg.mxu0
      %3146 = vmatprep.subr.bf16.mxu0 %v2298
      %3147 = vmatpush1.bf16.msra.mxu0 %v2297
      %3148 = vmatprep.subr.bf16.mxu0 %v2304
      %3149 = vmatpush1.bf16.msra.mxu0 %v2303
      %3150 = vmatprep.subr.bf16.mxu0 %v2310
      %3151 = vmatpush1.bf16.msra.mxu0 %v2309
      %3152 = vmatprep.subr.bf16.mxu0 %v2316
      %3153 = vmatpush1.bf16.msra.mxu0 %v2315
      %3154 = vmatprep.subr.bf16.mxu0 %v2322
      %3155 = vmatpush1.bf16.msra.mxu0 %v2321
      %3156 = vmatprep.subr.bf16.mxu0 %v2328
      %3157 = vmatpush1.bf16.msra.mxu0 %v2327
      %3158 = vmatprep.subr.bf16.mxu0 %v2334
      %3159 = vmatpush1.bf16.msra.mxu0 %v2333
      %3160 = vmatprep.subr.bf16.mxu0 %v2340
      %3161 = vmatpush1.bf16.msra.mxu0 %v2339
      %3162 = vmatprep.subr.bf16.mxu0 %v2346
      %3163 = vmatpush1.bf16.msra.mxu0 %v2345
      %3164 = vmatprep.subr.bf16.mxu0 %v2352
      %3165 = vmatpush1.bf16.msra.mxu0 %v2351
      %3166 = vmatprep.subr.bf16.mxu0 %v2358
      %3167 = vmatpush1.bf16.msra.mxu0 %v2357
      %3168 = vmatprep.subr.bf16.mxu0 %v2364
      %3169 = vmatpush1.bf16.msra.mxu0 %v2363
      %3170 = vmatprep.subr.bf16.mxu0 %v2370
      %3171 = vmatpush1.bf16.msra.mxu0 %v2369
      %3172 = vmatprep.subr.bf16.mxu0 %v2376
      %3173 = vmatpush1.bf16.msra.mxu0 %v2375
      %3174 = vmatprep.subr.bf16.mxu0 %v2382
      %3175 = vmatpush1.bf16.msra.mxu0 %v2381
      %3176 = vmatprep.subr.bf16.mxu0 %v2388
      %3177 = vmatpush1.bf16.msra.mxu0 %v2387
      %3178 = vmatprep.mubr.bf16.mxu0 %v454
      %3179 = vmatmul.mubr.bf16.gmra.mrb[0].mxu0 %v447
      %v3180 = vpop.f32.mrb[0].mxu0
      %v3181 = vadd.f32 %v3128, %v3180
      %v3182 = vpop.f32.mrb[0].mxu0
      %v3183 = vadd.f32 %v3130, %v3182
      %v3184 = vpop.f32.mrb[0].mxu0
      %v3185 = vadd.f32 %v3132, %v3184
      %v3186 = vpop.f32.mrb[0].mxu0
      %v3187 = vadd.f32 %v3134, %v3186
      %3188 = vmatprep.mubr.bf16.mxu0 %v466
      %3189 = vmatmul.mubr.bf16.gmra.mrb[0].mxu0 %v460
      %v3190 = vpop.f32.mrb[0].mxu0
      %v3191 = vadd.f32 %v3138, %v3190
      %v3192 = vpop.f32.mrb[0].mxu0
      %v3193 = vadd.f32 %v3140, %v3192
      %v3194 = vpop.f32.mrb[0].mxu0
      %v3195 = vadd.f32 %v3142, %v3194
      %v3196 = vpop.f32.mrb[0].mxu0
      %v3197 = vadd.f32 %v3144, %v3196
      %3198 = vdwg.mxu0
      %3199 = vmatprep.subr.bf16.mxu0 %v2012
      %3200 = vmatpush1.bf16.msra.mxu0 %v2011
      %3201 = vmatprep.subr.bf16.mxu0 %v2018
      %3202 = vmatpush1.bf16.msra.mxu0 %v2017
      %3203 = vmatprep.subr.bf16.mxu0 %v2024
      %3204 = vmatpush1.bf16.msra.mxu0 %v2023
      %3205 = vmatprep.subr.bf16.mxu0 %v2030
      %3206 = vmatpush1.bf16.msra.mxu0 %v2029
      %3207 = vmatprep.subr.bf16.mxu0 %v2036
      %3208 = vmatpush1.bf16.msra.mxu0 %v2035
      %3209 = vmatprep.subr.bf16.mxu0 %v2042
      %3210 = vmatpush1.bf16.msra.mxu0 %v2041
      %3211 = vmatprep.subr.bf16.mxu0 %v2048
      %3212 = vmatpush1.bf16.msra.mxu0 %v2047
      %3213 = vmatprep.subr.bf16.mxu0 %v2054
      %3214 = vmatpush1.bf16.msra.mxu0 %v2053
      %3215 = vmatprep.subr.bf16.mxu0 %v2060
      %3216 = vmatpush1.bf16.msra.mxu0 %v2059
      %3217 = vmatprep.subr.bf16.mxu0 %v2066
      %3218 = vmatpush1.bf16.msra.mxu0 %v2065
      %3219 = vmatprep.subr.bf16.mxu0 %v2072
      %3220 = vmatpush1.bf16.msra.mxu0 %v2071
      %3221 = vmatprep.subr.bf16.mxu0 %v2078
      %3222 = vmatpush1.bf16.msra.mxu0 %v2077
      %3223 = vmatprep.subr.bf16.mxu0 %v2084
      %3224 = vmatpush1.bf16.msra.mxu0 %v2083
      %3225 = vmatprep.subr.bf16.mxu0 %v2090
      %3226 = vmatpush1.bf16.msra.mxu0 %v2089
      %3227 = vmatprep.subr.bf16.mxu0 %v2096
      %3228 = vmatpush1.bf16.msra.mxu0 %v2095
      %3229 = vmatprep.subr.bf16.mxu0 %v2102
      %3230 = vmatpush1.bf16.msra.mxu0 %v2101
      %3231 = vmatprep.mubr.bf16.mxu0 %v365
      %3232 = vmatmul.mubr.bf16.gmra.mrb[0].mxu0 %v364
      %v3233 = vpop.f32.mrb[0].mxu0
      %v3234 = vadd.f32 0.0, %v3233
      %v3235 = vpop.f32.mrb[0].mxu0
      %v3236 = vadd.f32 0.0, %v3235
      %v3237 = vpop.f32.mrb[0].mxu0
      %v3238 = vadd.f32 0.0, %v3237
      %v3239 = vpop.f32.mrb[0].mxu0
      %v3240 = vadd.f32 0.0, %v3239
      %3241 = vmatprep.mubr.bf16.mxu0 %v367
      %3242 = vmatmul.mubr.bf16.gmra.mrb[0].mxu0 %v366
      %v3243 = vpop.f32.mrb[0].mxu0
      %v3244 = vadd.f32 0.0, %v3243
      %v3245 = vpop.f32.mrb[0].mxu0
      %v3246 = vadd.f32 0.0, %v3245
      %v3247 = vpop.f32.mrb[0].mxu0
      %v3248 = vadd.f32 0.0, %v3247
      %v3249 = vpop.f32.mrb[0].mxu0
      %v3250 = vadd.f32 0.0, %v3249
      %3251 = vdwg.mxu0
      %3252 = vmatprep.subr.bf16.mxu0 %v2108
      %3253 = vmatpush1.bf16.msra.mxu0 %v2107
      %3254 = vmatprep.subr.bf16.mxu0 %v2114
      %3255 = vmatpush1.bf16.msra.mxu0 %v2113
      %3256 = vmatprep.subr.bf16.mxu0 %v2120
      %3257 = vmatpush1.bf16.msra.mxu0 %v2119
      %3258 = vmatprep.subr.bf16.mxu0 %v2126
      %3259 = vmatpush1.bf16.msra.mxu0 %v2125
      %3260 = vmatprep.subr.bf16.mxu0 %v2132
      %3261 = vmatpush1.bf16.msra.mxu0 %v2131
      %3262 = vmatprep.subr.bf16.mxu0 %v2138
      %3263 = vmatpush1.bf16.msra.mxu0 %v2137
      %3264 = vmatprep.subr.bf16.mxu0 %v2144
      %3265 = vmatpush1.bf16.msra.mxu0 %v2143
      %3266 = vmatprep.subr.bf16.mxu0 %v2150
      %3267 = vmatpush1.bf16.msra.mxu0 %v2149
      %3268 = vmatprep.subr.bf16.mxu0 %v2156
      %3269 = vmatpush1.bf16.msra.mxu0 %v2155
      %3270 = vmatprep.subr.bf16.mxu0 %v2162
      %3271 = vmatpush1.bf16.msra.mxu0 %v2161
      %3272 = vmatprep.subr.bf16.mxu0 %v2168
      %3273 = vmatpush1.bf16.msra.mxu0 %v2167
      %3274 = vmatprep.subr.bf16.mxu0 %v2174
      %3275 = vmatpush1.bf16.msra.mxu0 %v2173
      %3276 = vmatprep.subr.bf16.mxu0 %v2180
      %3277 = vmatpush1.bf16.msra.mxu0 %v2179
      %3278 = vmatprep.subr.bf16.mxu0 %v2186
      %3279 = vmatpush1.bf16.msra.mxu0 %v2185
      %3280 = vmatprep.subr.bf16.mxu0 %v2192
      %3281 = vmatpush1.bf16.msra.mxu0 %v2191
      %3282 = vmatprep.subr.bf16.mxu0 %v2198
      %3283 = vmatpush1.bf16.msra.mxu0 %v2197
      %3284 = vmatprep.mubr.bf16.mxu0 %v404
      %3285 = vmatmul.mubr.bf16.gmra.mrb[0].mxu0 %v392
      %v3286 = vpop.f32.mrb[0].mxu0
      %v3287 = vadd.f32 %v3234, %v3286
      %v3288 = vpop.f32.mrb[0].mxu0
      %v3289 = vadd.f32 %v3236, %v3288
      %v3290 = vpop.f32.mrb[0].mxu0
      %v3291 = vadd.f32 %v3238, %v3290
      %v3292 = vpop.f32.mrb[0].mxu0
      %v3293 = vadd.f32 %v3240, %v3292
      %3294 = vmatprep.mubr.bf16.mxu0 %v420
      %3295 = vmatmul.mubr.bf16.gmra.mrb[0].mxu0 %v412
      %v3296 = vpop.f32.mrb[0].mxu0
      %v3297 = vadd.f32 %v3244, %v3296
      %v3298 = vpop.f32.mrb[0].mxu0
      %v3299 = vadd.f32 %v3246, %v3298
      %v3300 = vpop.f32.mrb[0].mxu0
      %v3301 = vadd.f32 %v3248, %v3300
      %v3302 = vpop.f32.mrb[0].mxu0
      %v3303 = vadd.f32 %v3250, %v3302
      %3304 = vdwg.mxu0
      %3305 = vmatprep.subr.bf16.mxu0 %v2204
      %3306 = vmatpush1.bf16.msra.mxu0 %v2203
      %3307 = vmatprep.subr.bf16.mxu0 %v2210
      %3308 = vmatpush1.bf16.msra.mxu0 %v2209
      %3309 = vmatprep.subr.bf16.mxu0 %v2216
      %3310 = vmatpush1.bf16.msra.mxu0 %v2215
      %3311 = vmatprep.subr.bf16.mxu0 %v2222
      %3312 = vmatpush1.bf16.msra.mxu0 %v2221
      %3313 = vmatprep.subr.bf16.mxu0 %v2228
      %3314 = vmatpush1.bf16.msra.mxu0 %v2227
      %3315 = vmatprep.subr.bf16.mxu0 %v2234
      %3316 = vmatpush1.bf16.msra.mxu0 %v2233
      %3317 = vmatprep.subr.bf16.mxu0 %v2240
      %3318 = vmatpush1.bf16.msra.mxu0 %v2239
      %3319 = vmatprep.subr.bf16.mxu0 %v2246
      %3320 = vmatpush1.bf16.msra.mxu0 %v2245
      %3321 = vmatprep.subr.bf16.mxu0 %v2252
      %3322 = vmatpush1.bf16.msra.mxu0 %v2251
      %3323 = vmatprep.subr.bf16.mxu0 %v2258
      %3324 = vmatpush1.bf16.msra.mxu0 %v2257
      %3325 = vmatprep.subr.bf16.mxu0 %v2264
      %3326 = vmatpush1.bf16.msra.mxu0 %v2263
      %3327 = vmatprep.subr.bf16.mxu0 %v2270
      %3328 = vmatpush1.bf16.msra.mxu0 %v2269
      %3329 = vmatprep.subr.bf16.mxu0 %v2276
      %3330 = vmatpush1.bf16.msra.mxu0 %v2275
      %3331 = vmatprep.subr.bf16.mxu0 %v2282
      %3332 = vmatpush1.bf16.msra.mxu0 %v2281
      %3333 = vmatprep.subr.bf16.mxu0 %v2288
      %3334 = vmatpush1.bf16.msra.mxu0 %v2287
      %3335 = vmatprep.subr.bf16.mxu0 %v2294
      %3336 = vmatpush1.bf16.msra.mxu0 %v2293
      %3337 = vmatprep.mubr.bf16.mxu0 %v431
      %3338 = vmatmul.mubr.bf16.gmra.mrb[0].mxu0 %v428
      %v3339 = vpop.f32.mrb[0].mxu0
      %v3340 = vadd.f32 %v3287, %v3339
      %v3341 = vpop.f32.mrb[0].mxu0
      %v3342 = vadd.f32 %v3289, %v3341
      %v3343 = vpop.f32.mrb[0].mxu0
      %v3344 = vadd.f32 %v3291, %v3343
      %v3345 = vpop.f32.mrb[0].mxu0
      %v3346 = vadd.f32 %v3293, %v3345
      %3347 = vmatprep.mubr.bf16.mxu0 %v435
      %3348 = vmatmul.mubr.bf16.gmra.mrb[0].mxu0 %v433
      %v3349 = vpop.f32.mrb[0].mxu0
      %v3350 = vadd.f32 %v3297, %v3349
      %v3351 = vpop.f32.mrb[0].mxu0
      %v3352 = vadd.f32 %v3299, %v3351
      %v3353 = vpop.f32.mrb[0].mxu0
      %v3354 = vadd.f32 %v3301, %v3353
      %v3355 = vpop.f32.mrb[0].mxu0
      %v3356 = vadd.f32 %v3303, %v3355
      %3357 = vdwg.mxu0
      %3358 = vmatprep.subr.bf16.mxu0 %v2300
      %3359 = vmatpush1.bf16.msra.mxu0 %v2299
      %3360 = vmatprep.subr.bf16.mxu0 %v2306
      %3361 = vmatpush1.bf16.msra.mxu0 %v2305
      %3362 = vmatprep.subr.bf16.mxu0 %v2312
      %3363 = vmatpush1.bf16.msra.mxu0 %v2311
      %3364 = vmatprep.subr.bf16.mxu0 %v2318
      %3365 = vmatpush1.bf16.msra.mxu0 %v2317
      %3366 = vmatprep.subr.bf16.mxu0 %v2324
      %3367 = vmatpush1.bf16.msra.mxu0 %v2323
      %3368 = vmatprep.subr.bf16.mxu0 %v2330
      %3369 = vmatpush1.bf16.msra.mxu0 %v2329
      %3370 = vmatprep.subr.bf16.mxu0 %v2336
      %3371 = vmatpush1.bf16.msra.mxu0 %v2335
      %3372 = vmatprep.subr.bf16.mxu0 %v2342
      %3373 = vmatpush1.bf16.msra.mxu0 %v2341
      %3374 = vmatprep.subr.bf16.mxu0 %v2348
      %3375 = vmatpush1.bf16.msra.mxu0 %v2347
      %3376 = vmatprep.subr.bf16.mxu0 %v2354
      %3377 = vmatpush1.bf16.msra.mxu0 %v2353
      %3378 = vmatprep.subr.bf16.mxu0 %v2360
      %3379 = vmatpush1.bf16.msra.mxu0 %v2359
      %3380 = vmatprep.subr.bf16.mxu0 %v2366
      %3381 = vmatpush1.bf16.msra.mxu0 %v2365
      %3382 = vmatprep.subr.bf16.mxu0 %v2372
      %3383 = vmatpush1.bf16.msra.mxu0 %v2371
      %3384 = vmatprep.subr.bf16.mxu0 %v2378
      %3385 = vmatpush1.bf16.msra.mxu0 %v2377
      %3386 = vmatprep.subr.bf16.mxu0 %v2384
      %3387 = vmatpush1.bf16.msra.mxu0 %v2383
      %3388 = vmatprep.subr.bf16.mxu0 %v2390
      %3389 = vmatpush1.bf16.msra.mxu0 %v2389
      %3390 = vmatprep.mubr.bf16.mxu0 %v454
      %3391 = vmatmul.mubr.bf16.gmra.mrb[0].mxu0 %v447
      %v3392 = vpop.f32.mrb[0].mxu0
      %v3393 = vadd.f32 %v3340, %v3392
      %v3394 = vpop.f32.mrb[0].mxu0
      %v3395 = vadd.f32 %v3342, %v3394
      %v3396 = vpop.f32.mrb[0].mxu0
      %v3397 = vadd.f32 %v3344, %v3396
      %v3398 = vpop.f32.mrb[0].mxu0
      %v3399 = vadd.f32 %v3346, %v3398
      %3400 = vmatprep.mubr.bf16.mxu0 %v466
      %3401 = vmatmul.mubr.bf16.gmra.mrb[0].mxu0 %v460
      %v3402 = vpop.f32.mrb[0].mxu0
      %v3403 = vadd.f32 %v3350, %v3402
      %v3404 = vpop.f32.mrb[0].mxu0
      %v3405 = vadd.f32 %v3352, %v3404
      %v3406 = vpop.f32.mrb[0].mxu0
      %v3407 = vadd.f32 %v3354, %v3406
      %v3408 = vpop.f32.mrb[0].mxu0
      %v3409 = vadd.f32 %v3356, %v3408
      %3410 = vdwg.mxu0
      %v3411 = vmul.f32 %v2969, %v2969
      %v3412 = vmul.f32 %v2971, %v2971
      %v3413 = vmul.f32 %v3181, %v3181
      %v3414 = vmul.f32 %v2973, %v2973
      %v3415 = vmul.f32 %v2975, %v2975
      %v3416 = vmul.f32 %v3185, %v3185
      %v3417 = vmul.f32 %v2979, %v2979
      %v3418 = vmul.f32 %v2981, %v2981
      %v3419 = vmul.f32 %v3191, %v3191
      %v3420 = vmul.f32 %v2983, %v2983
      %v3421 = vmul.f32 %v2985, %v2985
      %v3422 = vmul.f32 %v3195, %v3195
      %v3423 = vmul.f32 %v3183, %v3183
      %v3424 = vmul.f32 %v3393, %v3393
      %v3425 = vmul.f32 %v3395, %v3395
      %v3426 = vmul.f32 %v3187, %v3187
      %v3427 = vmul.f32 %v3397, %v3397
      %v3428 = vmul.f32 %v3399, %v3399
      %v3429 = vmul.f32 %v3193, %v3193
      %v3430 = vmul.f32 %v3403, %v3403
      %v3431 = vmul.f32 %v3405, %v3405
      %v3432 = vmul.f32 %v3197, %v3197
      %v3433 = vmul.f32 %v3407, %v3407
      %v3434 = vmul.f32 %v3409, %v3409
      %v3435 = vadd.f32 %v3411, %v3423
      %v3436 = vadd.f32 %v3412, %v3424
      %v3437 = vadd.f32 %v3413, %v3425
      %v3438 = vadd.f32 %v3414, %v3426
      %v3439 = vadd.f32 %v3415, %v3427
      %v3440 = vadd.f32 %v3416, %v3428
      %v3441 = vadd.f32 %v3417, %v3429
      %v3442 = vadd.f32 %v3418, %v3430
      %v3443 = vadd.f32 %v3419, %v3431
      %v3444 = vadd.f32 %v3420, %v3432
      %v3445 = vadd.f32 %v3421, %v3433
      %v3446 = vadd.f32 %v3422, %v3434
      %v3447 = vpack.c.bf16 %v3438, %v3435
      %v3448 = vpack.c.bf16 %v3439, %v3436
      %v3449 = vpack.c.bf16 %v3440, %v3437
      %v3450 = vpack.c.bf16 %v3444, %v3441
      %v3451 = vpack.c.bf16 %v3445, %v3442
      %v3452 = vpack.c.bf16 %v3446, %v3443
      %v3453 = vld [vmem:[%s3] sm:$0xf]
      %v3454 = vld [vmem:[%s3 + $0x4] sm:$0xf]
      %v3455 = vld [vmem:[%s3 + $0x8] sm:$0xf]
      %v3456 = vld [vmem:[%s3 + $0xc] sm:$0xf]
      %v3457 = vld [vmem:[%s3 + $0x10] sm:$0xf]
      %v3458 = vld [vmem:[%s3 + $0x14] sm:$0xf]
      %v3459 = vld [vmem:[%s3 + $0x18] sm:$0xf]
      %v3460 = vld [vmem:[%s3 + $0x1c] sm:$0xf]
      %v3461 = vld [vmem:[%s3 + $0x20] sm:$0xf]
      %v3462 = vld [vmem:[%s3 + $0x24] sm:$0xf]
      %v3463 = vld [vmem:[%s3 + $0x28] sm:$0xf]
      %v3464 = vld [vmem:[%s3 + $0x2c] sm:$0xf]
      %v3465 = vld [vmem:[%s3 + $0x30] sm:$0xf]
      %v3466 = vld [vmem:[%s3 + $0x34] sm:$0xf]
      %v3467 = vld [vmem:[%s3 + $0x38] sm:$0xf]
      %v3468 = vld [vmem:[%s3 + $0x3c] sm:$0xf]
      %v3469 = vld [vmem:[%s3 + $0x40] sm:$0xf]
      %v3470 = vld [vmem:[%s3 + $0x44] sm:$0xf]
      %v3471 = vld [vmem:[%s3 + $0x48] sm:$0xf]
      %v3472 = vld [vmem:[%s3 + $0x4c] sm:$0xf]
      %v3473 = vld [vmem:[%s3 + $0x50] sm:$0xf]
      %v3474 = vld [vmem:[%s3 + $0x54] sm:$0xf]
      %v3475 = vld [vmem:[%s3 + $0x58] sm:$0xf]
      %v3476 = vld [vmem:[%s3 + $0x5c] sm:$0xf]
      %v3477 = vld [vmem:[%s3 + $0x60] sm:$0xf]
      %v3478 = vld [vmem:[%s3 + $0x64] sm:$0xf]
      %v3479 = vld [vmem:[%s3 + $0x68] sm:$0xf]
      %v3480 = vld [vmem:[%s3 + $0x6c] sm:$0xf]
      %v3481 = vld [vmem:[%s3 + $0x70] sm:$0xf]
      %v3482 = vld [vmem:[%s3 + $0x74] sm:$0xf]
      %v3483 = vld [vmem:[%s3 + $0x78] sm:$0xf]
      %v3484 = vld [vmem:[%s3 + $0x7c] sm:$0xf]
      %v3485 = vld [vmem:[%s3 + $0x80] sm:$0xf]
      %v3486 = vld [vmem:[%s3 + $0x84] sm:$0xf]
      %v3487 = vld [vmem:[%s3 + $0x88] sm:$0xf]
      %v3488 = vld [vmem:[%s3 + $0x8c] sm:$0xf]
      %v3489 = vld [vmem:[%s3 + $0x90] sm:$0xf]
      %v3490 = vld [vmem:[%s3 + $0x94] sm:$0xf]
      %v3491 = vld [vmem:[%s3 + $0x98] sm:$0xf]
      %v3492 = vld [vmem:[%s3 + $0x9c] sm:$0xf]
      %v3493 = vld [vmem:[%s3 + $0xa0] sm:$0xf]
      %v3494 = vld [vmem:[%s3 + $0xa4] sm:$0xf]
      %v3495 = vld [vmem:[%s3 + $0xa8] sm:$0xf]
      %v3496 = vld [vmem:[%s3 + $0xac] sm:$0xf]
      %v3497 = vld [vmem:[%s3 + $0xb0] sm:$0xf]
      %v3498 = vld [vmem:[%s3 + $0xb4] sm:$0xf]
      %v3499 = vld [vmem:[%s3 + $0xb8] sm:$0xf]
      %v3500 = vld [vmem:[%s3 + $0xbc] sm:$0xf]
      %v3549 = vunpack.c.l.b16 %v3453
      %v3550 = vunpack.c.l.b16 %v3454
      %v3551 = vunpack.c.l.b16 %v3455
      %v3552 = vunpack.c.l.b16 %v3456
      %v3553 = vunpack.c.l.b16 %v3457
      %v3554 = vunpack.c.l.b16 %v3458
      %v3555 = vunpack.c.l.b16 %v3459
      %v3556 = vunpack.c.l.b16 %v3460
      %v3557 = vunpack.c.l.b16 %v3461
      %v3558 = vunpack.c.l.b16 %v3462
      %v3559 = vunpack.c.l.b16 %v3463
      %v3560 = vunpack.c.l.b16 %v3464
      %v3561 = vunpack.c.l.b16 %v3465
      %v3562 = vunpack.c.l.b16 %v3466
      %v3563 = vunpack.c.l.b16 %v3467
      %v3564 = vunpack.c.l.b16 %v3468
      %v3565 = vunpack.c.l.b16 %v3469
      %v3566 = vunpack.c.l.b16 %v3470
      %v3567 = vunpack.c.l.b16 %v3471
      %v3568 = vunpack.c.l.b16 %v3472
      %v3569 = vunpack.c.l.b16 %v3473
      %v3570 = vunpack.c.l.b16 %v3474
      %v3571 = vunpack.c.l.b16 %v3475
      %v3572 = vunpack.c.l.b16 %v3476
      %v3573 = vunpack.c.l.b16 %v3477
      %v3574 = vunpack.c.l.b16 %v3478
      %v3575 = vunpack.c.l.b16 %v3479
      %v3576 = vunpack.c.l.b16 %v3480
      %v3577 = vunpack.c.l.b16 %v3481
      %v3578 = vunpack.c.l.b16 %v3482
      %v3579 = vunpack.c.l.b16 %v3483
      %v3580 = vunpack.c.l.b16 %v3484
      %v3581 = vunpack.c.l.b16 %v3485
      %v3582 = vunpack.c.l.b16 %v3486
      %v3583 = vunpack.c.l.b16 %v3487
      %v3584 = vunpack.c.l.b16 %v3488
      %v3585 = vunpack.c.l.b16 %v3489
      %v3586 = vunpack.c.l.b16 %v3490
      %v3587 = vunpack.c.l.b16 %v3491
      %v3588 = vunpack.c.l.b16 %v3492
      %v3589 = vunpack.c.l.b16 %v3493
      %v3590 = vunpack.c.l.b16 %v3494
      %v3591 = vunpack.c.l.b16 %v3495
      %v3592 = vunpack.c.l.b16 %v3496
      %v3593 = vunpack.c.l.b16 %v3497
      %v3594 = vunpack.c.l.b16 %v3498
      %v3595 = vunpack.c.l.b16 %v3499
      %v3596 = vunpack.c.l.b16 %v3500
      %v3597 = vpack.c.b16 %v3550, %v3549
      %v3598 = vpack.c.b16 %v3552, %v3551
      %v3599 = vpack.c.b16 %v3554, %v3553
      %v3600 = vpack.c.b16 %v3556, %v3555
      %v3601 = vpack.c.b16 %v3558, %v3557
      %v3602 = vpack.c.b16 %v3560, %v3559
      %v3603 = vpack.c.b16 %v3562, %v3561
      %v3604 = vpack.c.b16 %v3564, %v3563
      %v3605 = vpack.c.b16 %v3566, %v3565
      %v3606 = vpack.c.b16 %v3568, %v3567
      %v3607 = vpack.c.b16 %v3570, %v3569
      %v3608 = vpack.c.b16 %v3572, %v3571
      %v3609 = vpack.c.b16 %v3574, %v3573
      %v3610 = vpack.c.b16 %v3576, %v3575
      %v3611 = vpack.c.b16 %v3578, %v3577
      %v3612 = vpack.c.b16 %v3580, %v3579
      %v3613 = vpack.c.b16 %v3582, %v3581
      %v3614 = vpack.c.b16 %v3584, %v3583
      %v3615 = vpack.c.b16 %v3586, %v3585
      %v3616 = vpack.c.b16 %v3588, %v3587
      %v3617 = vpack.c.b16 %v3590, %v3589
      %v3618 = vpack.c.b16 %v3592, %v3591
      %v3619 = vpack.c.b16 %v3594, %v3593
      %v3620 = vpack.c.b16 %v3596, %v3595
      %3645 = vmatprep.subr.bf16.mxu0 0
      %3646 = vmatpush1.bf16.msra.mxu0 %v3597
      %3647 = vmatprep.subr.bf16.mxu0 0
      %3648 = vmatpush1.bf16.msra.mxu0 %v3598
      %3649 = vmatprep.subr.bf16.mxu0 0
      %3650 = vmatpush1.bf16.msra.mxu0 %v3599
      %3651 = vmatprep.subr.bf16.mxu0 0
      %3652 = vmatpush1.bf16.msra.mxu0 %v3600
      %3653 = vmatprep.subr.bf16.mxu0 0
      %3654 = vmatpush1.bf16.msra.mxu0 %v3601
      %3655 = vmatprep.subr.bf16.mxu0 0
      %3656 = vmatpush1.bf16.msra.mxu0 %v3602
      %3657 = vmatprep.subr.bf16.mxu0 0
      %3658 = vmatpush1.bf16.msra.mxu0 %v3603
      %3659 = vmatprep.subr.bf16.mxu0 0
      %3660 = vmatpush1.bf16.msra.mxu0 %v3604
      %3661 = vmatprep.subr.bf16.mxu0 0
      %3662 = vmatpush1.bf16.msra.mxu0 %v3605
      %3663 = vmatprep.subr.bf16.mxu0 0
      %3664 = vmatpush1.bf16.msra.mxu0 %v3606
      %3665 = vmatprep.subr.bf16.mxu0 0
      %3666 = vmatpush1.bf16.msra.mxu0 %v3607
      %3667 = vmatprep.subr.bf16.mxu0 0
      %3668 = vmatpush1.bf16.msra.mxu0 %v3608
      %3669 = vmatprep.subr.bf16.mxu0 0
      %3670 = vmatpush1.bf16.msra.mxu0 %v3609
      %3671 = vmatprep.subr.bf16.mxu0 0
      %3672 = vmatpush1.bf16.msra.mxu0 %v3610
      %3673 = vmatprep.subr.bf16.mxu0 0
      %3674 = vmatpush1.bf16.msra.mxu0 %v3611
      %3675 = vmatprep.subr.bf16.mxu0 0
      %3676 = vmatpush1.bf16.msra.mxu0 %v3612
      %3677 = vmatprep.mubr.bf16.mxu0 %v3448
      %3678 = vmatmul.mubr.bf16.gmra.mrb[0].mxu0 %v3447
      %v3679 = vpop.f32.mrb[0].mxu0
      %v3680 = vadd.f32 0.0, %v3679
      %v3681 = vpop.f32.mrb[0].mxu0
      %v3682 = vpop.f32.mrb[0].mxu0
      %v3683 = vadd.f32 0.0, %v3682
      %v3684 = vpop.f32.mrb[0].mxu0
      %3685 = vmatprep.mubr.bf16.mxu0 %v3451
      %3686 = vmatmul.mubr.bf16.gmra.mrb[0].mxu0 %v3450
      %v3687 = vpop.f32.mrb[0].mxu0
      %v3688 = vadd.f32 0.0, %v3687
      %v3689 = vpop.f32.mrb[0].mxu0
      %v3690 = vpop.f32.mrb[0].mxu0
      %v3691 = vadd.f32 0.0, %v3690
      %v3692 = vpop.f32.mrb[0].mxu0
      %3693 = vdwg.mxu0
      %3694 = vmatprep.subr.bf16.mxu0 0
      %3695 = vmatpush1.bf16.msra.mxu0 %v3613
      %3696 = vmatprep.subr.bf16.mxu0 0
      %3697 = vmatpush1.bf16.msra.mxu0 %v3614
      %3698 = vmatprep.subr.bf16.mxu0 0
      %3699 = vmatpush1.bf16.msra.mxu0 %v3615
      %3700 = vmatprep.subr.bf16.mxu0 0
      %3701 = vmatpush1.bf16.msra.mxu0 %v3616
      %3702 = vmatprep.subr.bf16.mxu0 0
      %3703 = vmatpush1.bf16.msra.mxu0 %v3617
      %3704 = vmatprep.subr.bf16.mxu0 0
      %3705 = vmatpush1.bf16.msra.mxu0 %v3618
      %3706 = vmatprep.subr.bf16.mxu0 0
      %3707 = vmatpush1.bf16.msra.mxu0 %v3619
      %3708 = vmatprep.subr.bf16.mxu0 0
      %3709 = vmatpush1.bf16.msra.mxu0 %v3620
      %3710 = vmatprep.subr.bf16.mxu0 0
      %3711 = vmatpush1.bf16.msra.mxu0 0
      %3712 = vmatprep.subr.bf16.mxu0 0
      %3713 = vmatpush1.bf16.msra.mxu0 0
      %3714 = vmatprep.subr.bf16.mxu0 0
      %3715 = vmatpush1.bf16.msra.mxu0 0
      %3716 = vmatprep.subr.bf16.mxu0 0
      %3717 = vmatpush1.bf16.msra.mxu0 0
      %3718 = vmatprep.subr.bf16.mxu0 0
      %3719 = vmatpush1.bf16.msra.mxu0 0
      %3720 = vmatprep.subr.bf16.mxu0 0
      %3721 = vmatpush1.bf16.msra.mxu0 0
      %3722 = vmatprep.subr.bf16.mxu0 0
      %3723 = vmatpush1.bf16.msra.mxu0 0
      %3724 = vmatprep.subr.bf16.mxu0 0
      %3725 = vmatpush1.bf16.msra.mxu0 0
      %3726 = vmatprep.mubr.bf16.mxu0 0
      %3727 = vmatmul.mubr.bf16.gmra.mrb[0].mxu0 %v3449
      %v3728 = vpop.f32.mrb[0].mxu0
      %v3729 = vadd.f32 %v3680, %v3728
      %v3730 = vpop.f32.mrb[0].mxu0
      %v3731 = vpop.f32.mrb[0].mxu0
      %v3732 = vadd.f32 %v3683, %v3731
      %v3733 = vpop.f32.mrb[0].mxu0
      %3734 = vmatprep.mubr.bf16.mxu0 0
      %3735 = vmatmul.mubr.bf16.gmra.mrb[0].mxu0 %v3452
      %v3736 = vpop.f32.mrb[0].mxu0
      %v3737 = vadd.f32 %v3688, %v3736
      %v3738 = vpop.f32.mrb[0].mxu0
      %v3739 = vpop.f32.mrb[0].mxu0
      %v3740 = vadd.f32 %v3691, %v3739
      %v3741 = vpop.f32.mrb[0].mxu0
      %3742 = vdwg.mxu0
      %v3743 = vmax.f32 %v3729, 1e-05
      %v3744 = vmax.f32 %v3732, 1e-05
      %v3745 = vmax.f32 %v3737, 1e-05
      %v3746 = vmax.f32 %v3740, 1e-05
      %v3747 = vlog2.pop %v3743
      %v3748 = vmul.f32 %v3747, 0.6931472
      %v3749 = vlog2.pop %v3744
      %v3750 = vmul.f32 %v3749, 0.6931472
      %v3751 = vlog2.pop %v3745
      %v3752 = vmul.f32 %v3751, 0.6931472
      %v3753 = vlog2.pop %v3746
      %v3754 = vmul.f32 %v3753, 0.6931472
      %v3755 = vld [vmem:[%s4] sm:$0x1]
      %v3757 = vlaneseq
      %v3758 = vshrl.u32 %v3757, 7
      %v3759 = vsub.s32 0, %v3758
      %v3760 = vrot.slane %v3755, %v3759
      %v3762 = vmul.f32 %v3748, %v3760
      %v3763 = vmul.f32 %v3750, %v3760
      %v3764 = vmul.f32 %v3752, %v3760
      %v3765 = vmul.f32 %v3754, %v3760
      %3766 = vst [vmem:[%s343] sm:$0xff] %v3762
      %3767 = vst [vmem:[%s343 + $0x8] sm:$0xff] %v3763
      %3768 = vst [vmem:[%s343 + $0x10] sm:$0xff] %v3764
      %3769 = vst [vmem:[%s343 + $0x18] sm:$0xff] %v3765
      %s3770 = smul.u32 4, %s21
      %p3771 = scmp.lt.s32.totalorder %s20, 1
      %s3772 = scalar_select %p3771, %s20, 1
      %p3773 = scmp.lt.s32.totalorder %s3770, 3
      %s3774 = scalar_select %p3773, %s3770, 3
      %s3775 = smul.addr %s3772, 4
      %s3776 = sadd.s32 %s3774, %s3775
      %s3777 = smul.addr %s3776, 8
      %s3778 = scalar_lea.vmem %s5, %s3777
      // Predicated region
      $region41: #{_forward_impl.1} parent=39 // pred_check
        %p3779 = pneg %p171
      $region42: #{_forward_impl.1} parent=39 // pred_check_branch
        %3781 = sbr.rel (%p3779) target = $region44
      $region43: #{_forward_impl.1} parent=39 // pred_region
        %s3782 = smul.u32 4, %s21
      $region44: #{_forward_impl.1} parent=39 // pred_fallthru
        _
    $region40: #{_forward_impl.1} parent=5 // pred_fallthru
      _
    %p3783 = scmp.le.s32.totalorder 2, %s11
    // Predicated region
    $region45: #{_forward_impl.1} parent=5 // pred_check
      %p3784 = pneg %p3783
    $region46: #{_forward_impl.1} parent=5 // pred_check_branch
      %3786 = sbr.rel (%p3784) target = $region48
    $region47: #{_forward_impl.1} parent=5 // pred_region
      %s3787 = ssub.s32 %s11, 2
      // Predicated region
      $region49: #{_forward_impl.1} parent=47 // pred_check
        %p3788 = pneg %p177
      $region50: #{_forward_impl.1} parent=47 // pred_check_branch
        %3790 = sbr.rel (%p3788) target = $region52
      $region51: #{_forward_impl.1} parent=47 // pred_region
        %s3791 = smul.u32 4, %s23
        %p3792 = scmp.lt.s32.totalorder %s22, 1
        %s3793 = scalar_select %p3792, %s22, 1
        %p3794 = scmp.lt.s32.totalorder %s3791, 3
        %s3795 = scalar_select %p3794, %s3791, 3
        %s3796 = smul.addr %s3793, 4
        %s3797 = sadd.s32 %s3795, %s3796
        %s3798 = smul.addr %s3797, 8
        %s3799 = scalar_lea.vmem %s5, %s3798
      $region52: #{_forward_impl.1} parent=47 // pred_fallthru
        _
    $region48: #{_forward_impl.1} parent=5 // pred_fallthru
      _
  $region6: #{_forward_impl.1} parent=0 // loop_footer
    %s15 = sadd.s32 1, %s11
  $region7: #{_forward_impl.1} parent=0 // loop_footer_branch
    %10 = sbr.rel target = $region3
  $region8: #{_forward_impl.1} parent=0 // loop_exit
    _

</llo_original>
